<compile_context>
chip_gen: v7x
topology: tpu7x:2x2x1
jax: 0.10.0
libtpu: 0.0.40
codegen_flags: <defaults>
</compile_context>

<pallas_src>
import functools
import math

import jax
import jax.numpy as jnp
from jax.experimental import pallas as pl
from jax.experimental.pallas import tpu as pltpu

EPS = 1e-5        # nn.LayerNorm default
NEG_INF = -1e9    # large finite negative: robust masking (no NaN rows)


def _layer_norm(x, gamma, beta):
    mu = jnp.mean(x, axis=-1, keepdims=True)
    var = jnp.mean(jnp.square(x - mu), axis=-1, keepdims=True)
    return (x - mu) * jax.lax.rsqrt(var + EPS) * gamma + beta


def _encoder_kernel(x_ref, padb_ref,
                    wqkv_ref, bqkv_ref, wout_ref, bout_ref,
                    ln1g_ref, ln1b_ref,
                    wff1_ref, bff1_ref, wff2_ref, bff2_ref,
                    ln2g_ref, ln2b_ref,
                    out_ref,
                    act_ref, attn_ref,
                    *, nhead, seq_len, batch):
    """One grid step == one post-norm nn.TransformerEncoderLayer (eval mode).

    Activation rows are batch-major: row n*seq_len + s  <->  token (s, n).
    The last grid step also computes the mean over the sequence dimension.
    """
    layer = pl.program_id(0)
    nlayer = pl.num_programs(0)

    E = act_ref.shape[1]
    Dh = E // nhead
    scale = 1.0 / math.sqrt(Dh)          # Python float -> folded as an immediate

    # Load the source activations once, at the first layer.
    @pl.when(layer == 0)
    def _():
        act_ref[...] = x_ref[...].astype(jnp.float32)

    x = act_ref[...]                                          # (N*S, E) f32

    # ---------------- self attention ----------------
    qkv = jnp.dot(x, wqkv_ref[0], preferred_element_type=jnp.float32) + bqkv_ref[0]
    q = qkv[:, :E]
    k = qkv[:, E:2 * E]
    v = qkv[:, 2 * E:]

    # Causal (src_mask) additive bias, built in-kernel.
    row = jax.lax.broadcasted_iota(jnp.int32, (seq_len, seq_len), 0)
    col = jax.lax.broadcasted_iota(jnp.int32, (seq_len, seq_len), 1)
    causal = jnp.where(col <= row, 0.0, NEG_INF).astype(jnp.float32)

    for n in range(batch):
        r0 = n * seq_len
        bias_n = causal + padb_ref[n:n + 1, :]                # (S, S)
        for hd in range(nhead):
            c0 = hd * Dh
            qh = q[r0:r0 + seq_len, c0:c0 + Dh]               # (S, Dh)
            kh = k[r0:r0 + seq_len, c0:c0 + Dh]
            vh = v[r0:r0 + seq_len, c0:c0 + Dh]
            s = jnp.einsum("qd,kd->qk", qh, kh,
                           preferred_element_type=jnp.float32) * scale + bias_n
            m = jnp.max(s, axis=-1, keepdims=True)
            p = jnp.exp(s - m)
            denom = jnp.sum(p, axis=-1, keepdims=True)
            o = jnp.dot(p, vh, preferred_element_type=jnp.float32)
            o = o * pl.reciprocal(denom, approx=True)
            attn_ref[r0:r0 + seq_len, c0:c0 + Dh] = o

    attn = jnp.dot(attn_ref[...], wout_ref[0],
                   preferred_element_type=jnp.float32) + bout_ref[0]

    # ---------------- residual + LayerNorm 1 (post-norm) ----------------
    x = _layer_norm(x + attn, ln1g_ref[0], ln1b_ref[0])

    # ---------------- feed-forward (ReLU) + residual + LayerNorm 2 -------
    ff = jnp.dot(x, wff1_ref[0], preferred_element_type=jnp.float32) + bff1_ref[0]
    ff = jnp.maximum(ff, 0.0)
    ff = jnp.dot(ff, wff2_ref[0], preferred_element_type=jnp.float32) + bff2_ref[0]
    x = _layer_norm(x + ff, ln2g_ref[0], ln2b_ref[0])

    act_ref[...] = x

    # ---------------- final: mean over the sequence dimension ------------
    @pl.when(layer == nlayer - 1)
    def _():
        for n in range(batch):
            r0 = n * seq_len
            seg = x[r0:r0 + seq_len, :]
            out_ref[n:n + 1, :] = jnp.mean(seg, axis=0, keepdims=True).astype(out_ref.dtype)


def my_transformer_encoder(src, pad_mask, params, nhead):
    """src: (S, N, E) float32, pad_mask: (N, S) bool (True = padded) -> (N, E)."""
    S, N, E = src.shape
    L = len(params)
    F = params[0]["w_ff1_t"].shape[1]

    # Batch-major token rows: row n*S + s == src[s, n, :]
    x0 = src.transpose(1, 0, 2).reshape(N * S, E).astype(jnp.float32)
    pad_bias = jnp.where(pad_mask, NEG_INF, 0.0).astype(jnp.float32)      # (N, S)

    stk = lambda name: jnp.stack([p[name] for p in params], axis=0)
    stk_b = lambda name: jnp.stack([p[name] for p in params], axis=0)[:, None, :]

    wqkv, wout = stk("w_qkv_t"), stk("w_out_t")          # (L,E,3E), (L,E,E)
    wff1, wff2 = stk("w_ff1_t"), stk("w_ff2_t")          # (L,E,F),  (L,F,E)
    bqkv, bout = stk_b("b_qkv"), stk_b("b_out")          # (L,1,3E), (L,1,E)
    bff1, bff2 = stk_b("b_ff1"), stk_b("b_ff2")          # (L,1,F),  (L,1,E)
    ln1g, ln1b = stk_b("ln1_g"), stk_b("ln1_b")          # (L,1,E)
    ln2g, ln2b = stk_b("ln2_g"), stk_b("ln2_b")          # (L,1,E)

    full2d = lambda shape: pl.BlockSpec(shape, lambda l: (0, 0))
    per_layer = lambda d1, d2: pl.BlockSpec((1, d1, d2), lambda l: (l, 0, 0))

    kernel = functools.partial(_encoder_kernel, nhead=nhead, seq_len=S, batch=N)

    return pl.pallas_call(
        kernel,
        out_shape=jax.ShapeDtypeStruct((N, E), jnp.float32),
        grid_spec=pltpu.PrefetchScalarGridSpec(
            num_scalar_prefetch=0,
            grid=(L,),
            in_specs=[
                full2d((N * S, E)),                              # activations (used at layer 0)
                full2d((N, S)),                                  # key-padding additive bias
                per_layer(E, 3 * E), per_layer(1, 3 * E),        # qkv proj
                per_layer(E, E),     per_layer(1, E),            # out proj
                per_layer(1, E),     per_layer(1, E),            # ln1 gamma/beta
                per_layer(E, F),     per_layer(1, F),            # ff1
                per_layer(F, E),     per_layer(1, E),            # ff2
                per_layer(1, E),     per_layer(1, E),            # ln2 gamma/beta
            ],
            out_specs=pl.BlockSpec((N, E), lambda l: (0, 0)),
            scratch_shapes=[
                pltpu.VMEM((N * S, E), jnp.float32),   # running activation (carried over layers)
                pltpu.VMEM((N * S, E), jnp.float32),   # attention-head output assembly
            ],
        ),
        compiler_params=pltpu.CompilerParams(
            # layers are sequentially dependent through the VMEM carry
            dimension_semantics=("arbitrary",),
        ),
    )(x0, pad_bias, wqkv, bqkv, wout, bout, ln1g, ln1b,
      wff1, bff1, wff2, bff2, ln2g, ln2b)


def init_params(key, embed_dim, dim_ff, nlayer):
    """Deterministic synthetic weights (torch-layout weights transposed for x @ W)."""
    params = []
    std = 0.05
    for l in range(nlayer):
        keys = jax.random.split(jax.random.fold_in(key, l), 4)
        w_qkv = std * jax.random.normal(keys[0], (3 * embed_dim, embed_dim), jnp.float32)
        w_out = std * jax.random.normal(keys[1], (embed_dim, embed_dim), jnp.float32)
        w_ff1 = std * jax.random.normal(keys[2], (dim_ff, embed_dim), jnp.float32)
        w_ff2 = std * jax.random.normal(keys[3], (embed_dim, dim_ff), jnp.float32)
        params.append(dict(
            w_qkv_t=w_qkv.T, b_qkv=jnp.zeros((3 * embed_dim,), jnp.float32),
            w_out_t=w_out.T, b_out=jnp.zeros((embed_dim,), jnp.float32),
            ln1_g=jnp.ones((embed_dim,), jnp.float32),
            ln1_b=jnp.zeros((embed_dim,), jnp.float32),
            w_ff1_t=w_ff1.T, b_ff1=jnp.zeros((dim_ff,), jnp.float32),
            w_ff2_t=w_ff2.T, b_ff2=jnp.zeros((embed_dim,), jnp.float32),
            ln2_g=jnp.ones((embed_dim,), jnp.float32),
            ln2_b=jnp.zeros((embed_dim,), jnp.float32),
        ))
    return params


if __name__ == "__main__":
    # Small config consistent with the module: embed_dim=32, nhead=4, nlayer=2,
    # dim_feedforward=64, seq=8, batch=2.
    S, N, E, H, F, L = 8, 2, 32, 4, 64, 2

    key = jax.random.PRNGKey(0)
    k_src, k_par = jax.random.split(key)
    src = jax.random.normal(k_src, (S, N, E), jnp.float32)
    # key padding mask (N, S): batch 1 has its last 3 positions padded.
    pad_mask = jnp.zeros((N, S), jnp.bool_).at[1, 5:].set(True)

    params = init_params(k_par, E, F, L)

    out = my_transformer_encoder(src, pad_mask, params, nhead=H)
    out = jax.block_until_ready(out)

    assert out.shape == (N, E), out.shape
    assert bool(jnp.all(jnp.isfinite(out)))
    print("KERNEL_OK")
</pallas_src>

<mosaic_0001>
module attributes {stable_mosaic.version = 11 : i64} {
  func.func @_encoder_kernel(%arg0: i32, %arg1: memref<16x32xf32, #tpu.memory_space<vmem>>, %arg2: memref<2x8xf32, #tpu.memory_space<vmem>>, %arg3: memref<1x32x96xf32, #tpu.memory_space<vmem>>, %arg4: memref<1x1x96xf32, #tpu.memory_space<vmem>>, %arg5: memref<1x32x32xf32, #tpu.memory_space<vmem>>, %arg6: memref<1x1x32xf32, #tpu.memory_space<vmem>>, %arg7: memref<1x1x32xf32, #tpu.memory_space<vmem>>, %arg8: memref<1x1x32xf32, #tpu.memory_space<vmem>>, %arg9: memref<1x32x64xf32, #tpu.memory_space<vmem>>, %arg10: memref<1x1x64xf32, #tpu.memory_space<vmem>>, %arg11: memref<1x64x32xf32, #tpu.memory_space<vmem>>, %arg12: memref<1x1x32xf32, #tpu.memory_space<vmem>>, %arg13: memref<1x1x32xf32, #tpu.memory_space<vmem>>, %arg14: memref<1x1x32xf32, #tpu.memory_space<vmem>>, %arg15: memref<2x32xf32, #tpu.memory_space<vmem>>, %arg16: memref<16x32xf32, #tpu.memory_space<vmem>>, %arg17: memref<16x32xf32, #tpu.memory_space<vmem>>) attributes {dimension_semantics = [#tpu.dimension_semantics<arbitrary>], iteration_bounds = array<i64: 2>, scalar_prefetch = 0 : i64, scratch_operands = 2 : i64, tpu.core_type = #tpu.core_type<tc>, window_params = [{pipeline_mode = #tpu.pipeline_mode<synchronous>, transform_indices = @transform_0, window_bounds = array<i64: 16, 32>}, {pipeline_mode = #tpu.pipeline_mode<synchronous>, transform_indices = @transform_1, window_bounds = array<i64: 2, 8>}, {transform_indices = @transform_2, window_bounds = array<i64: 1, 32, 96>}, {transform_indices = @transform_3, window_bounds = array<i64: 1, 1, 96>}, {transform_indices = @transform_4, window_bounds = array<i64: 1, 32, 32>}, {transform_indices = @transform_5, window_bounds = array<i64: 1, 1, 32>}, {transform_indices = @transform_6, window_bounds = array<i64: 1, 1, 32>}, {transform_indices = @transform_7, window_bounds = array<i64: 1, 1, 32>}, {transform_indices = @transform_8, window_bounds = array<i64: 1, 32, 64>}, {transform_indices = @transform_9, window_bounds = array<i64: 1, 1, 64>}, {transform_indices = @transform_10, window_bounds = array<i64: 1, 64, 32>}, {transform_indices = @transform_11, window_bounds = array<i64: 1, 1, 32>}, {transform_indices = @transform_12, window_bounds = array<i64: 1, 1, 32>}, {transform_indices = @transform_13, window_bounds = array<i64: 1, 1, 32>}, {pipeline_mode = #tpu.pipeline_mode<synchronous>, transform_indices = @transform_14, window_bounds = array<i64: 2, 32>}]} {
    %c0_i32 = arith.constant 0 : i32
    %0 = arith.cmpi eq, %arg0, %c0_i32 : i32
    %1 = arith.extui %0 : i1 to i32
    %c0_i32_0 = arith.constant 0 : i32
    %2 = arith.cmpi ne, %1, %c0_i32_0 : i32
    scf.if %2 {
      %c0_115 = arith.constant 0 : index
      %c0_116 = arith.constant 0 : index
      %260 = vector.load %arg1[%c0_115, %c0_116] : memref<16x32xf32, #tpu.memory_space<vmem>>, vector<16x32xf32>
      %c0_117 = arith.constant 0 : index
      %c0_118 = arith.constant 0 : index
      %261 = vector.load %arg16[%c0_117, %c0_118] : memref<16x32xf32, #tpu.memory_space<vmem>>, vector<16x32xf32>
      tpu.vector_store %arg16[%c0_117, %c0_118], %260 {strides = array<i32>} : memref<16x32xf32, #tpu.memory_space<vmem>>, vector<16x32xf32>,
    } else {
    }
    %c0 = arith.constant 0 : index
    %c0_1 = arith.constant 0 : index
    %3 = vector.load %arg16[%c0, %c0_1] : memref<16x32xf32, #tpu.memory_space<vmem>>, vector<16x32xf32>
    %c0_2 = arith.constant 0 : index
    %c0_3 = arith.constant 0 : index
    %c0_4 = arith.constant 0 : index
    %4 = vector.load %arg3[%c0_2, %c0_3, %c0_4] : memref<1x32x96xf32, #tpu.memory_space<vmem>>, vector<1x32x96xf32>
    %5 = vector.shape_cast %4 : vector<1x32x96xf32> to vector<32x96xf32>
    %cst = arith.constant dense<0.000000e+00> : vector<16x96xf32>
    %6 = tpu.matmul %3, %5, %cst {dimension_numbers = #tpu.dot_dimension_numbers<[1], [0], [0], [1], [0, 0, 1, 1], [], []>} : vector<16x32xf32>, vector<32x96xf32>, vector<16x96xf32> -> vector<16x96xf32>
    %c0_5 = arith.constant 0 : index
    %c0_6 = arith.constant 0 : index
    %c0_7 = arith.constant 0 : index
    %7 = vector.load %arg4[%c0_5, %c0_6, %c0_7] : memref<1x1x96xf32, #tpu.memory_space<vmem>>, vector<1x1x96xf32>
    %8 = vector.shape_cast %7 : vector<1x1x96xf32> to vector<1x96xf32>
    %9 = vector.broadcast %8 : vector<1x96xf32> to vector<16x96xf32>
    %10 = arith.addf %6, %9 : vector<16x96xf32>
    %11 = vector.extract_strided_slice %10 {offsets = [0, 0], sizes = [16, 32], strides = [1, 1]} : vector<16x96xf32> to vector<16x32xf32>
    %12 = vector.extract_strided_slice %10 {offsets = [0, 32], sizes = [16, 32], strides = [1, 1]} : vector<16x96xf32> to vector<16x32xf32>
    %13 = vector.extract_strided_slice %10 {offsets = [0, 64], sizes = [16, 32], strides = [1, 1]} : vector<16x96xf32> to vector<16x32xf32>
    %14 = tpu.iota {dimensions = array<i32: 0>} : vector<8x8xi32>
    %15 = tpu.iota {dimensions = array<i32: 1>} : vector<8x8xi32>
    %16 = arith.cmpi sle, %15, %14 : vector<8x8xi32>
    %cst_8 = arith.constant 0.000000e+00 : f32
    %cst_9 = arith.constant -1.000000e+09 : f32
    %17 = vector.broadcast %cst_8 : f32 to vector<8x8xf32>
    %18 = vector.broadcast %cst_9 : f32 to vector<8x8xf32>
    %19 = arith.select %16, %17, %18 : vector<8x8xi1>, vector<8x8xf32>
    %c0_10 = arith.constant 0 : index
    %c0_11 = arith.constant 0 : index
    %20 = vector.load %arg2[%c0_10, %c0_11] : memref<2x8xf32, #tpu.memory_space<vmem>>, vector<1x8xf32>
    %21 = vector.broadcast %20 : vector<1x8xf32> to vector<8x8xf32>
    %22 = arith.addf %19, %21 : vector<8x8xf32>
    %23 = vector.extract_strided_slice %11 {offsets = [0, 0], sizes = [8, 8], strides = [1, 1]} : vector<16x32xf32> to vector<8x8xf32>
    %24 = vector.extract_strided_slice %12 {offsets = [0, 0], sizes = [8, 8], strides = [1, 1]} : vector<16x32xf32> to vector<8x8xf32>
    %25 = vector.extract_strided_slice %13 {offsets = [0, 0], sizes = [8, 8], strides = [1, 1]} : vector<16x32xf32> to vector<8x8xf32>
    "tpu.trace_start"() <{level = 10 : i32, message = "qd,kd->qk"}> : () -> ()
    %cst_12 = arith.constant dense<0.000000e+00> : vector<8x8xf32>
    %26 = tpu.matmul %23, %24, %cst_12 {dimension_numbers = #tpu.dot_dimension_numbers<[1], [1], [0], [0], [0, 0, 1, 0], [], []>} : vector<8x8xf32>, vector<8x8xf32>, vector<8x8xf32> -> vector<8x8xf32>
    "tpu.trace_stop"() : () -> ()
    %cst_13 = arith.constant 0.353553385 : f32
    %27 = vector.broadcast %cst_13 : f32 to vector<8x8xf32>
    %28 = arith.mulf %26, %27 : vector<8x8xf32>
    %29 = arith.addf %28, %22 : vector<8x8xf32>
    %cst_14 = arith.constant dense<0xFF800000> : vector<8xf32>
    %30 = vector.multi_reduction <maximumf>, %29, %cst_14 [1] : vector<8x8xf32> to vector<8xf32>
    %31 = vector.shape_cast %30 : vector<8xf32> to vector<8x1xf32>
    %32 = vector.broadcast %31 : vector<8x1xf32> to vector<8x8xf32>
    %33 = arith.subf %29, %32 : vector<8x8xf32>
    %34 = math.exp %33 : vector<8x8xf32>
    %cst_15 = arith.constant dense<0.000000e+00> : vector<8xf32>
    %35 = vector.multi_reduction <add>, %34, %cst_15 [1] : vector<8x8xf32> to vector<8xf32>
    %36 = vector.shape_cast %35 : vector<8xf32> to vector<8x1xf32>
    %cst_16 = arith.constant dense<0.000000e+00> : vector<8x8xf32>
    %37 = tpu.matmul %34, %25, %cst_16 {dimension_numbers = #tpu.dot_dimension_numbers<[1], [0], [0], [1], [0, 0, 1, 1], [], []>} : vector<8x8xf32>, vector<8x8xf32>, vector<8x8xf32> -> vector<8x8xf32>
    %38 = tpu.reciprocal %36 {approx = true} : vector<8x1xf32> -> vector<8x1xf32>
    %39 = vector.broadcast %38 : vector<8x1xf32> to vector<8x8xf32>
    %40 = arith.mulf %37, %39 : vector<8x8xf32>
    %c0_17 = arith.constant 0 : index
    %c0_18 = arith.constant 0 : index
    %41 = vector.load %arg17[%c0_17, %c0_18] : memref<16x32xf32, #tpu.memory_space<vmem>>, vector<8x8xf32>
    tpu.vector_store %arg17[%c0_17, %c0_18], %40 {strides = array<i32>} : memref<16x32xf32, #tpu.memory_space<vmem>>, vector<8x8xf32>,
    %42 = vector.extract_strided_slice %11 {offsets = [0, 8], sizes = [8, 8], strides = [1, 1]} : vector<16x32xf32> to vector<8x8xf32>
    %43 = vector.extract_strided_slice %12 {offsets = [0, 8], sizes = [8, 8], strides = [1, 1]} : vector<16x32xf32> to vector<8x8xf32>
    %44 = vector.extract_strided_slice %13 {offsets = [0, 8], sizes = [8, 8], strides = [1, 1]} : vector<16x32xf32> to vector<8x8xf32>
    "tpu.trace_start"() <{level = 10 : i32, message = "qd,kd->qk"}> : () -> ()
    %cst_19 = arith.constant dense<0.000000e+00> : vector<8x8xf32>
    %45 = tpu.matmul %42, %43, %cst_19 {dimension_numbers = #tpu.dot_dimension_numbers<[1], [1], [0], [0], [0, 0, 1, 0], [], []>} : vector<8x8xf32>, vector<8x8xf32>, vector<8x8xf32> -> vector<8x8xf32>
    "tpu.trace_stop"() : () -> ()
    %cst_20 = arith.constant 0.353553385 : f32
    %46 = vector.broadcast %cst_20 : f32 to vector<8x8xf32>
    %47 = arith.mulf %45, %46 : vector<8x8xf32>
    %48 = arith.addf %47, %22 : vector<8x8xf32>
    %cst_21 = arith.constant dense<0xFF800000> : vector<8xf32>
    %49 = vector.multi_reduction <maximumf>, %48, %cst_21 [1] : vector<8x8xf32> to vector<8xf32>
    %50 = vector.shape_cast %49 : vector<8xf32> to vector<8x1xf32>
    %51 = vector.broadcast %50 : vector<8x1xf32> to vector<8x8xf32>
    %52 = arith.subf %48, %51 : vector<8x8xf32>
    %53 = math.exp %52 : vector<8x8xf32>
    %cst_22 = arith.constant dense<0.000000e+00> : vector<8xf32>
    %54 = vector.multi_reduction <add>, %53, %cst_22 [1] : vector<8x8xf32> to vector<8xf32>
    %55 = vector.shape_cast %54 : vector<8xf32> to vector<8x1xf32>
    %cst_23 = arith.constant dense<0.000000e+00> : vector<8x8xf32>
    %56 = tpu.matmul %53, %44, %cst_23 {dimension_numbers = #tpu.dot_dimension_numbers<[1], [0], [0], [1], [0, 0, 1, 1], [], []>} : vector<8x8xf32>, vector<8x8xf32>, vector<8x8xf32> -> vector<8x8xf32>
    %57 = tpu.reciprocal %55 {approx = true} : vector<8x1xf32> -> vector<8x1xf32>
    %58 = vector.broadcast %57 : vector<8x1xf32> to vector<8x8xf32>
    %59 = arith.mulf %56, %58 : vector<8x8xf32>
    %c0_24 = arith.constant 0 : index
    %c8 = arith.constant 8 : index
    %60 = vector.load %arg17[%c0_24, %c8] : memref<16x32xf32, #tpu.memory_space<vmem>>, vector<8x8xf32>
    tpu.vector_store %arg17[%c0_24, %c8], %59 {strides = array<i32>} : memref<16x32xf32, #tpu.memory_space<vmem>>, vector<8x8xf32>,
    %61 = vector.extract_strided_slice %11 {offsets = [0, 16], sizes = [8, 8], strides = [1, 1]} : vector<16x32xf32> to vector<8x8xf32>
    %62 = vector.extract_strided_slice %12 {offsets = [0, 16], sizes = [8, 8], strides = [1, 1]} : vector<16x32xf32> to vector<8x8xf32>
    %63 = vector.extract_strided_slice %13 {offsets = [0, 16], sizes = [8, 8], strides = [1, 1]} : vector<16x32xf32> to vector<8x8xf32>
    "tpu.trace_start"() <{level = 10 : i32, message = "qd,kd->qk"}> : () -> ()
    %cst_25 = arith.constant dense<0.000000e+00> : vector<8x8xf32>
    %64 = tpu.matmul %61, %62, %cst_25 {dimension_numbers = #tpu.dot_dimension_numbers<[1], [1], [0], [0], [0, 0, 1, 0], [], []>} : vector<8x8xf32>, vector<8x8xf32>, vector<8x8xf32> -> vector<8x8xf32>
    "tpu.trace_stop"() : () -> ()
    %cst_26 = arith.constant 0.353553385 : f32
    %65 = vector.broadcast %cst_26 : f32 to vector<8x8xf32>
    %66 = arith.mulf %64, %65 : vector<8x8xf32>
    %67 = arith.addf %66, %22 : vector<8x8xf32>
    %cst_27 = arith.constant dense<0xFF800000> : vector<8xf32>
    %68 = vector.multi_reduction <maximumf>, %67, %cst_27 [1] : vector<8x8xf32> to vector<8xf32>
    %69 = vector.shape_cast %68 : vector<8xf32> to vector<8x1xf32>
    %70 = vector.broadcast %69 : vector<8x1xf32> to vector<8x8xf32>
    %71 = arith.subf %67, %70 : vector<8x8xf32>
    %72 = math.exp %71 : vector<8x8xf32>
    %cst_28 = arith.constant dense<0.000000e+00> : vector<8xf32>
    %73 = vector.multi_reduction <add>, %72, %cst_28 [1] : vector<8x8xf32> to vector<8xf32>
    %74 = vector.shape_cast %73 : vector<8xf32> to vector<8x1xf32>
    %cst_29 = arith.constant dense<0.000000e+00> : vector<8x8xf32>
    %75 = tpu.matmul %72, %63, %cst_29 {dimension_numbers = #tpu.dot_dimension_numbers<[1], [0], [0], [1], [0, 0, 1, 1], [], []>} : vector<8x8xf32>, vector<8x8xf32>, vector<8x8xf32> -> vector<8x8xf32>
    %76 = tpu.reciprocal %74 {approx = true} : vector<8x1xf32> -> vector<8x1xf32>
    %77 = vector.broadcast %76 : vector<8x1xf32> to vector<8x8xf32>
    %78 = arith.mulf %75, %77 : vector<8x8xf32>
    %c0_30 = arith.constant 0 : index
    %c16 = arith.constant 16 : index
    %79 = vector.load %arg17[%c0_30, %c16] : memref<16x32xf32, #tpu.memory_space<vmem>>, vector<8x8xf32>
    tpu.vector_store %arg17[%c0_30, %c16], %78 {strides = array<i32>} : memref<16x32xf32, #tpu.memory_space<vmem>>, vector<8x8xf32>,
    %80 = vector.extract_strided_slice %11 {offsets = [0, 24], sizes = [8, 8], strides = [1, 1]} : vector<16x32xf32> to vector<8x8xf32>
    %81 = vector.extract_strided_slice %12 {offsets = [0, 24], sizes = [8, 8], strides = [1, 1]} : vector<16x32xf32> to vector<8x8xf32>
    %82 = vector.extract_strided_slice %13 {offsets = [0, 24], sizes = [8, 8], strides = [1, 1]} : vector<16x32xf32> to vector<8x8xf32>
    "tpu.trace_start"() <{level = 10 : i32, message = "qd,kd->qk"}> : () -> ()
    %cst_31 = arith.constant dense<0.000000e+00> : vector<8x8xf32>
    %83 = tpu.matmul %80, %81, %cst_31 {dimension_numbers = #tpu.dot_dimension_numbers<[1], [1], [0], [0], [0, 0, 1, 0], [], []>} : vector<8x8xf32>, vector<8x8xf32>, vector<8x8xf32> -> vector<8x8xf32>
    "tpu.trace_stop"() : () -> ()
    %cst_32 = arith.constant 0.353553385 : f32
    %84 = vector.broadcast %cst_32 : f32 to vector<8x8xf32>
    %85 = arith.mulf %83, %84 : vector<8x8xf32>
    %86 = arith.addf %85, %22 : vector<8x8xf32>
    %cst_33 = arith.constant dense<0xFF800000> : vector<8xf32>
    %87 = vector.multi_reduction <maximumf>, %86, %cst_33 [1] : vector<8x8xf32> to vector<8xf32>
    %88 = vector.shape_cast %87 : vector<8xf32> to vector<8x1xf32>
    %89 = vector.broadcast %88 : vector<8x1xf32> to vector<8x8xf32>
    %90 = arith.subf %86, %89 : vector<8x8xf32>
    %91 = math.exp %90 : vector<8x8xf32>
    %cst_34 = arith.constant dense<0.000000e+00> : vector<8xf32>
    %92 = vector.multi_reduction <add>, %91, %cst_34 [1] : vector<8x8xf32> to vector<8xf32>
    %93 = vector.shape_cast %92 : vector<8xf32> to vector<8x1xf32>
    %cst_35 = arith.constant dense<0.000000e+00> : vector<8x8xf32>
    %94 = tpu.matmul %91, %82, %cst_35 {dimension_numbers = #tpu.dot_dimension_numbers<[1], [0], [0], [1], [0, 0, 1, 1], [], []>} : vector<8x8xf32>, vector<8x8xf32>, vector<8x8xf32> -> vector<8x8xf32>
    %95 = tpu.reciprocal %93 {approx = true} : vector<8x1xf32> -> vector<8x1xf32>
    %96 = vector.broadcast %95 : vector<8x1xf32> to vector<8x8xf32>
    %97 = arith.mulf %94, %96 : vector<8x8xf32>
    %c0_36 = arith.constant 0 : index
    %c24 = arith.constant 24 : index
    %98 = vector.load %arg17[%c0_36, %c24] : memref<16x32xf32, #tpu.memory_space<vmem>>, vector<8x8xf32>
    tpu.vector_store %arg17[%c0_36, %c24], %97 {strides = array<i32>} : memref<16x32xf32, #tpu.memory_space<vmem>>, vector<8x8xf32>,
    %c1 = arith.constant 1 : index
    %c0_37 = arith.constant 0 : index
    %99 = vector.load %arg2[%c1, %c0_37] : memref<2x8xf32, #tpu.memory_space<vmem>>, vector<1x8xf32>
    %100 = vector.broadcast %99 : vector<1x8xf32> to vector<8x8xf32>
    %101 = arith.addf %19, %100 : vector<8x8xf32>
    %102 = vector.extract_strided_slice %11 {offsets = [8, 0], sizes = [8, 8], strides = [1, 1]} : vector<16x32xf32> to vector<8x8xf32>
    %103 = vector.extract_strided_slice %12 {offsets = [8, 0], sizes = [8, 8], strides = [1, 1]} : vector<16x32xf32> to vector<8x8xf32>
    %104 = vector.extract_strided_slice %13 {offsets = [8, 0], sizes = [8, 8], strides = [1, 1]} : vector<16x32xf32> to vector<8x8xf32>
    "tpu.trace_start"() <{level = 10 : i32, message = "qd,kd->qk"}> : () -> ()
    %cst_38 = arith.constant dense<0.000000e+00> : vector<8x8xf32>
    %105 = tpu.matmul %102, %103, %cst_38 {dimension_numbers = #tpu.dot_dimension_numbers<[1], [1], [0], [0], [0, 0, 1, 0], [], []>} : vector<8x8xf32>, vector<8x8xf32>, vector<8x8xf32> -> vector<8x8xf32>
    "tpu.trace_stop"() : () -> ()
    %cst_39 = arith.constant 0.353553385 : f32
    %106 = vector.broadcast %cst_39 : f32 to vector<8x8xf32>
    %107 = arith.mulf %105, %106 : vector<8x8xf32>
    %108 = arith.addf %107, %101 : vector<8x8xf32>
    %cst_40 = arith.constant dense<0xFF800000> : vector<8xf32>
    %109 = vector.multi_reduction <maximumf>, %108, %cst_40 [1] : vector<8x8xf32> to vector<8xf32>
    %110 = vector.shape_cast %109 : vector<8xf32> to vector<8x1xf32>
    %111 = vector.broadcast %110 : vector<8x1xf32> to vector<8x8xf32>
    %112 = arith.subf %108, %111 : vector<8x8xf32>
    %113 = math.exp %112 : vector<8x8xf32>
    %cst_41 = arith.constant dense<0.000000e+00> : vector<8xf32>
    %114 = vector.multi_reduction <add>, %113, %cst_41 [1] : vector<8x8xf32> to vector<8xf32>
    %115 = vector.shape_cast %114 : vector<8xf32> to vector<8x1xf32>
    %cst_42 = arith.constant dense<0.000000e+00> : vector<8x8xf32>
    %116 = tpu.matmul %113, %104, %cst_42 {dimension_numbers = #tpu.dot_dimension_numbers<[1], [0], [0], [1], [0, 0, 1, 1], [], []>} : vector<8x8xf32>, vector<8x8xf32>, vector<8x8xf32> -> vector<8x8xf32>
    %117 = tpu.reciprocal %115 {approx = true} : vector<8x1xf32> -> vector<8x1xf32>
    %118 = vector.broadcast %117 : vector<8x1xf32> to vector<8x8xf32>
    %119 = arith.mulf %116, %118 : vector<8x8xf32>
    %c8_43 = arith.constant 8 : index
    %c0_44 = arith.constant 0 : index
    %120 = vector.load %arg17[%c8_43, %c0_44] : memref<16x32xf32, #tpu.memory_space<vmem>>, vector<8x8xf32>
    tpu.vector_store %arg17[%c8_43, %c0_44], %119 {strides = array<i32>} : memref<16x32xf32, #tpu.memory_space<vmem>>, vector<8x8xf32>,
    %121 = vector.extract_strided_slice %11 {offsets = [8, 8], sizes = [8, 8], strides = [1, 1]} : vector<16x32xf32> to vector<8x8xf32>
    %122 = vector.extract_strided_slice %12 {offsets = [8, 8], sizes = [8, 8], strides = [1, 1]} : vector<16x32xf32> to vector<8x8xf32>
    %123 = vector.extract_strided_slice %13 {offsets = [8, 8], sizes = [8, 8], strides = [1, 1]} : vector<16x32xf32> to vector<8x8xf32>
    "tpu.trace_start"() <{level = 10 : i32, message = "qd,kd->qk"}> : () -> ()
    %cst_45 = arith.constant dense<0.000000e+00> : vector<8x8xf32>
    %124 = tpu.matmul %121, %122, %cst_45 {dimension_numbers = #tpu.dot_dimension_numbers<[1], [1], [0], [0], [0, 0, 1, 0], [], []>} : vector<8x8xf32>, vector<8x8xf32>, vector<8x8xf32> -> vector<8x8xf32>
    "tpu.trace_stop"() : () -> ()
    %cst_46 = arith.constant 0.353553385 : f32
    %125 = vector.broadcast %cst_46 : f32 to vector<8x8xf32>
    %126 = arith.mulf %124, %125 : vector<8x8xf32>
    %127 = arith.addf %126, %101 : vector<8x8xf32>
    %cst_47 = arith.constant dense<0xFF800000> : vector<8xf32>
    %128 = vector.multi_reduction <maximumf>, %127, %cst_47 [1] : vector<8x8xf32> to vector<8xf32>
    %129 = vector.shape_cast %128 : vector<8xf32> to vector<8x1xf32>
    %130 = vector.broadcast %129 : vector<8x1xf32> to vector<8x8xf32>
    %131 = arith.subf %127, %130 : vector<8x8xf32>
    %132 = math.exp %131 : vector<8x8xf32>
    %cst_48 = arith.constant dense<0.000000e+00> : vector<8xf32>
    %133 = vector.multi_reduction <add>, %132, %cst_48 [1] : vector<8x8xf32> to vector<8xf32>
    %134 = vector.shape_cast %133 : vector<8xf32> to vector<8x1xf32>
    %cst_49 = arith.constant dense<0.000000e+00> : vector<8x8xf32>
    %135 = tpu.matmul %132, %123, %cst_49 {dimension_numbers = #tpu.dot_dimension_numbers<[1], [0], [0], [1], [0, 0, 1, 1], [], []>} : vector<8x8xf32>, vector<8x8xf32>, vector<8x8xf32> -> vector<8x8xf32>
    %136 = tpu.reciprocal %134 {approx = true} : vector<8x1xf32> -> vector<8x1xf32>
    %137 = vector.broadcast %136 : vector<8x1xf32> to vector<8x8xf32>
    %138 = arith.mulf %135, %137 : vector<8x8xf32>
    %c8_50 = arith.constant 8 : index
    %c8_51 = arith.constant 8 : index
    %139 = vector.load %arg17[%c8_50, %c8_51] : memref<16x32xf32, #tpu.memory_space<vmem>>, vector<8x8xf32>
    tpu.vector_store %arg17[%c8_50, %c8_51], %138 {strides = array<i32>} : memref<16x32xf32, #tpu.memory_space<vmem>>, vector<8x8xf32>,
    %140 = vector.extract_strided_slice %11 {offsets = [8, 16], sizes = [8, 8], strides = [1, 1]} : vector<16x32xf32> to vector<8x8xf32>
    %141 = vector.extract_strided_slice %12 {offsets = [8, 16], sizes = [8, 8], strides = [1, 1]} : vector<16x32xf32> to vector<8x8xf32>
    %142 = vector.extract_strided_slice %13 {offsets = [8, 16], sizes = [8, 8], strides = [1, 1]} : vector<16x32xf32> to vector<8x8xf32>
    "tpu.trace_start"() <{level = 10 : i32, message = "qd,kd->qk"}> : () -> ()
    %cst_52 = arith.constant dense<0.000000e+00> : vector<8x8xf32>
    %143 = tpu.matmul %140, %141, %cst_52 {dimension_numbers = #tpu.dot_dimension_numbers<[1], [1], [0], [0], [0, 0, 1, 0], [], []>} : vector<8x8xf32>, vector<8x8xf32>, vector<8x8xf32> -> vector<8x8xf32>
    "tpu.trace_stop"() : () -> ()
    %cst_53 = arith.constant 0.353553385 : f32
    %144 = vector.broadcast %cst_53 : f32 to vector<8x8xf32>
    %145 = arith.mulf %143, %144 : vector<8x8xf32>
    %146 = arith.addf %145, %101 : vector<8x8xf32>
    %cst_54 = arith.constant dense<0xFF800000> : vector<8xf32>
    %147 = vector.multi_reduction <maximumf>, %146, %cst_54 [1] : vector<8x8xf32> to vector<8xf32>
    %148 = vector.shape_cast %147 : vector<8xf32> to vector<8x1xf32>
    %149 = vector.broadcast %148 : vector<8x1xf32> to vector<8x8xf32>
    %150 = arith.subf %146, %149 : vector<8x8xf32>
    %151 = math.exp %150 : vector<8x8xf32>
    %cst_55 = arith.constant dense<0.000000e+00> : vector<8xf32>
    %152 = vector.multi_reduction <add>, %151, %cst_55 [1] : vector<8x8xf32> to vector<8xf32>
    %153 = vector.shape_cast %152 : vector<8xf32> to vector<8x1xf32>
    %cst_56 = arith.constant dense<0.000000e+00> : vector<8x8xf32>
    %154 = tpu.matmul %151, %142, %cst_56 {dimension_numbers = #tpu.dot_dimension_numbers<[1], [0], [0], [1], [0, 0, 1, 1], [], []>} : vector<8x8xf32>, vector<8x8xf32>, vector<8x8xf32> -> vector<8x8xf32>
    %155 = tpu.reciprocal %153 {approx = true} : vector<8x1xf32> -> vector<8x1xf32>
    %156 = vector.broadcast %155 : vector<8x1xf32> to vector<8x8xf32>
    %157 = arith.mulf %154, %156 : vector<8x8xf32>
    %c8_57 = arith.constant 8 : index
    %c16_58 = arith.constant 16 : index
    %158 = vector.load %arg17[%c8_57, %c16_58] : memref<16x32xf32, #tpu.memory_space<vmem>>, vector<8x8xf32>
    tpu.vector_store %arg17[%c8_57, %c16_58], %157 {strides = array<i32>} : memref<16x32xf32, #tpu.memory_space<vmem>>, vector<8x8xf32>,
    %159 = vector.extract_strided_slice %11 {offsets = [8, 24], sizes = [8, 8], strides = [1, 1]} : vector<16x32xf32> to vector<8x8xf32>
    %160 = vector.extract_strided_slice %12 {offsets = [8, 24], sizes = [8, 8], strides = [1, 1]} : vector<16x32xf32> to vector<8x8xf32>
    %161 = vector.extract_strided_slice %13 {offsets = [8, 24], sizes = [8, 8], strides = [1, 1]} : vector<16x32xf32> to vector<8x8xf32>
    "tpu.trace_start"() <{level = 10 : i32, message = "qd,kd->qk"}> : () -> ()
    %cst_59 = arith.constant dense<0.000000e+00> : vector<8x8xf32>
    %162 = tpu.matmul %159, %160, %cst_59 {dimension_numbers = #tpu.dot_dimension_numbers<[1], [1], [0], [0], [0, 0, 1, 0], [], []>} : vector<8x8xf32>, vector<8x8xf32>, vector<8x8xf32> -> vector<8x8xf32>
    "tpu.trace_stop"() : () -> ()
    %cst_60 = arith.constant 0.353553385 : f32
    %163 = vector.broadcast %cst_60 : f32 to vector<8x8xf32>
    %164 = arith.mulf %162, %163 : vector<8x8xf32>
    %165 = arith.addf %164, %101 : vector<8x8xf32>
    %cst_61 = arith.constant dense<0xFF800000> : vector<8xf32>
    %166 = vector.multi_reduction <maximumf>, %165, %cst_61 [1] : vector<8x8xf32> to vector<8xf32>
    %167 = vector.shape_cast %166 : vector<8xf32> to vector<8x1xf32>
    %168 = vector.broadcast %167 : vector<8x1xf32> to vector<8x8xf32>
    %169 = arith.subf %165, %168 : vector<8x8xf32>
    %170 = math.exp %169 : vector<8x8xf32>
    %cst_62 = arith.constant dense<0.000000e+00> : vector<8xf32>
    %171 = vector.multi_reduction <add>, %170, %cst_62 [1] : vector<8x8xf32> to vector<8xf32>
    %172 = vector.shape_cast %171 : vector<8xf32> to vector<8x1xf32>
    %cst_63 = arith.constant dense<0.000000e+00> : vector<8x8xf32>
    %173 = tpu.matmul %170, %161, %cst_63 {dimension_numbers = #tpu.dot_dimension_numbers<[1], [0], [0], [1], [0, 0, 1, 1], [], []>} : vector<8x8xf32>, vector<8x8xf32>, vector<8x8xf32> -> vector<8x8xf32>
    %174 = tpu.reciprocal %172 {approx = true} : vector<8x1xf32> -> vector<8x1xf32>
    %175 = vector.broadcast %174 : vector<8x1xf32> to vector<8x8xf32>
    %176 = arith.mulf %173, %175 : vector<8x8xf32>
    %c8_64 = arith.constant 8 : index
    %c24_65 = arith.constant 24 : index
    %177 = vector.load %arg17[%c8_64, %c24_65] : memref<16x32xf32, #tpu.memory_space<vmem>>, vector<8x8xf32>
    tpu.vector_store %arg17[%c8_64, %c24_65], %176 {strides = array<i32>} : memref<16x32xf32, #tpu.memory_space<vmem>>, vector<8x8xf32>,
    %c0_66 = arith.constant 0 : index
    %c0_67 = arith.constant 0 : index
    %178 = vector.load %arg17[%c0_66, %c0_67] : memref<16x32xf32, #tpu.memory_space<vmem>>, vector<16x32xf32>
    %c0_68 = arith.constant 0 : index
    %c0_69 = arith.constant 0 : index
    %c0_70 = arith.constant 0 : index
    %179 = vector.load %arg5[%c0_68, %c0_69, %c0_70] : memref<1x32x32xf32, #tpu.memory_space<vmem>>, vector<1x32x32xf32>
    %180 = vector.shape_cast %179 : vector<1x32x32xf32> to vector<32x32xf32>
    %cst_71 = arith.constant dense<0.000000e+00> : vector<16x32xf32>
    %181 = tpu.matmul %178, %180, %cst_71 {dimension_numbers = #tpu.dot_dimension_numbers<[1], [0], [0], [1], [0, 0, 1, 1], [], []>} : vector<16x32xf32>, vector<32x32xf32>, vector<16x32xf32> -> vector<16x32xf32>
    %c0_72 = arith.constant 0 : index
    %c0_73 = arith.constant 0 : index
    %c0_74 = arith.constant 0 : index
    %182 = vector.load %arg6[%c0_72, %c0_73, %c0_74] : memref<1x1x32xf32, #tpu.memory_space<vmem>>, vector<1x1x32xf32>
    %183 = vector.shape_cast %182 : vector<1x1x32xf32> to vector<1x32xf32>
    %184 = vector.broadcast %183 : vector<1x32xf32> to vector<16x32xf32>
    %185 = arith.addf %181, %184 : vector<16x32xf32>
    %186 = arith.addf %3, %185 : vector<16x32xf32>
    %c0_75 = arith.constant 0 : index
    %c0_76 = arith.constant 0 : index
    %c0_77 = arith.constant 0 : index
    %187 = vector.load %arg7[%c0_75, %c0_76, %c0_77] : memref<1x1x32xf32, #tpu.memory_space<vmem>>, vector<1x1x32xf32>
    %188 = vector.shape_cast %187 : vector<1x1x32xf32> to vector<1x32xf32>
    %c0_78 = arith.constant 0 : index
    %c0_79 = arith.constant 0 : index
    %c0_80 = arith.constant 0 : index
    %189 = vector.load %arg8[%c0_78, %c0_79, %c0_80] : memref<1x1x32xf32, #tpu.memory_space<vmem>>, vector<1x1x32xf32>
    %190 = vector.shape_cast %189 : vector<1x1x32xf32> to vector<1x32xf32>
    %cst_81 = arith.constant dense<0.000000e+00> : vector<16xf32>
    %191 = vector.multi_reduction <add>, %186, %cst_81 [1] : vector<16x32xf32> to vector<16xf32>
    %192 = vector.shape_cast %191 : vector<16xf32> to vector<16x1xf32>
    %cst_82 = arith.constant 3.200000e+01 : f32
    %193 = vector.broadcast %cst_82 : f32 to vector<16x1xf32>
    %194 = arith.divf %192, %193 : vector<16x1xf32>
    %195 = vector.broadcast %194 : vector<16x1xf32> to vector<16x32xf32>
    %196 = arith.subf %186, %195 : vector<16x32xf32>
    %197 = arith.mulf %196, %196 : vector<16x32xf32>
    %cst_83 = arith.constant dense<0.000000e+00> : vector<16xf32>
    %198 = vector.multi_reduction <add>, %197, %cst_83 [1] : vector<16x32xf32> to vector<16xf32>
    %199 = vector.shape_cast %198 : vector<16xf32> to vector<16x1xf32>
    %cst_84 = arith.constant 3.200000e+01 : f32
    %200 = vector.broadcast %cst_84 : f32 to vector<16x1xf32>
    %201 = arith.divf %199, %200 : vector<16x1xf32>
    %202 = vector.broadcast %194 : vector<16x1xf32> to vector<16x32xf32>
    %203 = arith.subf %186, %202 : vector<16x32xf32>
    %cst_85 = arith.constant 9.99999974E-6 : f32
    %204 = vector.broadcast %cst_85 : f32 to vector<16x1xf32>
    %205 = arith.addf %201, %204 : vector<16x1xf32>
    %206 = math.rsqrt %205 : vector<16x1xf32>
    %207 = vector.broadcast %206 : vector<16x1xf32> to vector<16x32xf32>
    %208 = arith.mulf %203, %207 : vector<16x32xf32>
    %209 = vector.broadcast %188 : vector<1x32xf32> to vector<16x32xf32>
    %210 = arith.mulf %208, %209 : vector<16x32xf32>
    %211 = vector.broadcast %190 : vector<1x32xf32> to vector<16x32xf32>
    %212 = arith.addf %210, %211 : vector<16x32xf32>
    %c0_86 = arith.constant 0 : index
    %c0_87 = arith.constant 0 : index
    %c0_88 = arith.constant 0 : index
    %213 = vector.load %arg9[%c0_86, %c0_87, %c0_88] : memref<1x32x64xf32, #tpu.memory_space<vmem>>, vector<1x32x64xf32>
    %214 = vector.shape_cast %213 : vector<1x32x64xf32> to vector<32x64xf32>
    %cst_89 = arith.constant dense<0.000000e+00> : vector<16x64xf32>
    %215 = tpu.matmul %212, %214, %cst_89 {dimension_numbers = #tpu.dot_dimension_numbers<[1], [0], [0], [1], [0, 0, 1, 1], [], []>} : vector<16x32xf32>, vector<32x64xf32>, vector<16x64xf32> -> vector<16x64xf32>
    %c0_90 = arith.constant 0 : index
    %c0_91 = arith.constant 0 : index
    %c0_92 = arith.constant 0 : index
    %216 = vector.load %arg10[%c0_90, %c0_91, %c0_92] : memref<1x1x64xf32, #tpu.memory_space<vmem>>, vector<1x1x64xf32>
    %217 = vector.shape_cast %216 : vector<1x1x64xf32> to vector<1x64xf32>
    %218 = vector.broadcast %217 : vector<1x64xf32> to vector<16x64xf32>
    %219 = arith.addf %215, %218 : vector<16x64xf32>
    %cst_93 = arith.constant 0.000000e+00 : f32
    %220 = vector.broadcast %cst_93 : f32 to vector<16x64xf32>
    %221 = arith.maximumf %219, %220 : vector<16x64xf32>
    %c0_94 = arith.constant 0 : index
    %c0_95 = arith.constant 0 : index
    %c0_96 = arith.constant 0 : index
    %222 = vector.load %arg11[%c0_94, %c0_95, %c0_96] : memref<1x64x32xf32, #tpu.memory_space<vmem>>, vector<1x64x32xf32>
    %223 = vector.shape_cast %222 : vector<1x64x32xf32> to vector<64x32xf32>
    %cst_97 = arith.constant dense<0.000000e+00> : vector<16x32xf32>
    %224 = tpu.matmul %221, %223, %cst_97 {dimension_numbers = #tpu.dot_dimension_numbers<[1], [0], [0], [1], [0, 0, 1, 1], [], []>} : vector<16x64xf32>, vector<64x32xf32>, vector<16x32xf32> -> vector<16x32xf32>
    %c0_98 = arith.constant 0 : index
    %c0_99 = arith.constant 0 : index
    %c0_100 = arith.constant 0 : index
    %225 = vector.load %arg12[%c0_98, %c0_99, %c0_100] : memref<1x1x32xf32, #tpu.memory_space<vmem>>, vector<1x1x32xf32>
    %226 = vector.shape_cast %225 : vector<1x1x32xf32> to vector<1x32xf32>
    %227 = vector.broadcast %226 : vector<1x32xf32> to vector<16x32xf32>
    %228 = arith.addf %224, %227 : vector<16x32xf32>
    %229 = arith.addf %212, %228 : vector<16x32xf32>
    %c0_101 = arith.constant 0 : index
    %c0_102 = arith.constant 0 : index
    %c0_103 = arith.constant 0 : index
    %230 = vector.load %arg13[%c0_101, %c0_102, %c0_103] : memref<1x1x32xf32, #tpu.memory_space<vmem>>, vector<1x1x32xf32>
    %231 = vector.shape_cast %230 : vector<1x1x32xf32> to vector<1x32xf32>
    %c0_104 = arith.constant 0 : index
    %c0_105 = arith.constant 0 : index
    %c0_106 = arith.constant 0 : index
    %232 = vector.load %arg14[%c0_104, %c0_105, %c0_106] : memref<1x1x32xf32, #tpu.memory_space<vmem>>, vector<1x1x32xf32>
    %233 = vector.shape_cast %232 : vector<1x1x32xf32> to vector<1x32xf32>
    %cst_107 = arith.constant dense<0.000000e+00> : vector<16xf32>
    %234 = vector.multi_reduction <add>, %229, %cst_107 [1] : vector<16x32xf32> to vector<16xf32>
    %235 = vector.shape_cast %234 : vector<16xf32> to vector<16x1xf32>
    %cst_108 = arith.constant 3.200000e+01 : f32
    %236 = vector.broadcast %cst_108 : f32 to vector<16x1xf32>
    %237 = arith.divf %235, %236 : vector<16x1xf32>
    %238 = vector.broadcast %237 : vector<16x1xf32> to vector<16x32xf32>
    %239 = arith.subf %229, %238 : vector<16x32xf32>
    %240 = arith.mulf %239, %239 : vector<16x32xf32>
    %cst_109 = arith.constant dense<0.000000e+00> : vector<16xf32>
    %241 = vector.multi_reduction <add>, %240, %cst_109 [1] : vector<16x32xf32> to vector<16xf32>
    %242 = vector.shape_cast %241 : vector<16xf32> to vector<16x1xf32>
    %cst_110 = arith.constant 3.200000e+01 : f32
    %243 = vector.broadcast %cst_110 : f32 to vector<16x1xf32>
    %244 = arith.divf %242, %243 : vector<16x1xf32>
    %245 = vector.broadcast %237 : vector<16x1xf32> to vector<16x32xf32>
    %246 = arith.subf %229, %245 : vector<16x32xf32>
    %cst_111 = arith.constant 9.99999974E-6 : f32
    %247 = vector.broadcast %cst_111 : f32 to vector<16x1xf32>
    %248 = arith.addf %244, %247 : vector<16x1xf32>
    %249 = math.rsqrt %248 : vector<16x1xf32>
    %250 = vector.broadcast %249 : vector<16x1xf32> to vector<16x32xf32>
    %251 = arith.mulf %246, %250 : vector<16x32xf32>
    %252 = vector.broadcast %231 : vector<1x32xf32> to vector<16x32xf32>
    %253 = arith.mulf %251, %252 : vector<16x32xf32>
    %254 = vector.broadcast %233 : vector<1x32xf32> to vector<16x32xf32>
    %255 = arith.addf %253, %254 : vector<16x32xf32>
    %c0_112 = arith.constant 0 : index
    %c0_113 = arith.constant 0 : index
    %256 = vector.load %arg16[%c0_112, %c0_113] : memref<16x32xf32, #tpu.memory_space<vmem>>, vector<16x32xf32>
    tpu.vector_store %arg16[%c0_112, %c0_113], %255 {strides = array<i32>} : memref<16x32xf32, #tpu.memory_space<vmem>>, vector<16x32xf32>,
    %c1_i32 = arith.constant 1 : i32
    %257 = arith.cmpi eq, %arg0, %c1_i32 : i32
    %258 = arith.extui %257 : i1 to i32
    %c0_i32_114 = arith.constant 0 : i32
    %259 = arith.cmpi ne, %258, %c0_i32_114 : i32
    scf.if %259 {
      %260 = vector.extract_strided_slice %255 {offsets = [0, 0], sizes = [8, 32], strides = [1, 1]} : vector<16x32xf32> to vector<8x32xf32>
      %cst_115 = arith.constant dense<0.000000e+00> : vector<32xf32>
      %261 = vector.multi_reduction <add>, %260, %cst_115 [0] : vector<8x32xf32> to vector<32xf32>
      %262 = vector.shape_cast %261 : vector<32xf32> to vector<1x32xf32>
      %cst_116 = arith.constant 8.000000e+00 : f32
      %263 = vector.broadcast %cst_116 : f32 to vector<1x32xf32>
      %264 = arith.divf %262, %263 : vector<1x32xf32>
      %c0_117 = arith.constant 0 : index
      %c0_118 = arith.constant 0 : index
      %265 = vector.load %arg15[%c0_117, %c0_118] : memref<2x32xf32, #tpu.memory_space<vmem>>, vector<1x32xf32>
      tpu.vector_store %arg15[%c0_117, %c0_118], %264 {strides = array<i32>} : memref<2x32xf32, #tpu.memory_space<vmem>>, vector<1x32xf32>,
      %266 = vector.extract_strided_slice %255 {offsets = [8, 0], sizes = [8, 32], strides = [1, 1]} : vector<16x32xf32> to vector<8x32xf32>
      %cst_119 = arith.constant dense<0.000000e+00> : vector<32xf32>
      %267 = vector.multi_reduction <add>, %266, %cst_119 [0] : vector<8x32xf32> to vector<32xf32>
      %268 = vector.shape_cast %267 : vector<32xf32> to vector<1x32xf32>
      %cst_120 = arith.constant 8.000000e+00 : f32
      %269 = vector.broadcast %cst_120 : f32 to vector<1x32xf32>
      %270 = arith.divf %268, %269 : vector<1x32xf32>
      %c1_121 = arith.constant 1 : index
      %c0_122 = arith.constant 0 : index
      %271 = vector.load %arg15[%c1_121, %c0_122] : memref<2x32xf32, #tpu.memory_space<vmem>>, vector<1x32xf32>
      tpu.vector_store %arg15[%c1_121, %c0_122], %270 {strides = array<i32>} : memref<2x32xf32, #tpu.memory_space<vmem>>, vector<1x32xf32>,
    } else {
    }
    return
  }
  func.func @transform_0(%arg0: i32) -> (i32, i32) {
    %c0_i32 = arith.constant 0 : i32
    %c0_i32_0 = arith.constant 0 : i32
    %c0_i32_1 = arith.constant 0 : i32
    return %c0_i32, %c0_i32_0 : i32, i32
  }
  func.func @transform_1(%arg0: i32) -> (i32, i32) {
    %c0_i32 = arith.constant 0 : i32
    %c0_i32_0 = arith.constant 0 : i32
    %c0_i32_1 = arith.constant 0 : i32
    return %c0_i32, %c0_i32_0 : i32, i32
  }
  func.func @transform_2(%arg0: i32) -> (i32, i32, i32) {
    %c0_i32 = arith.constant 0 : i32
    %c0_i32_0 = arith.constant 0 : i32
    %c0_i32_1 = arith.constant 0 : i32
    return %arg0, %c0_i32, %c0_i32_0 : i32, i32, i32
  }
  func.func @transform_3(%arg0: i32) -> (i32, i32, i32) {
    %c0_i32 = arith.constant 0 : i32
    %c0_i32_0 = arith.constant 0 : i32
    %c0_i32_1 = arith.constant 0 : i32
    return %arg0, %c0_i32, %c0_i32_0 : i32, i32, i32
  }
  func.func @transform_4(%arg0: i32) -> (i32, i32, i32) {
    %c0_i32 = arith.constant 0 : i32
    %c0_i32_0 = arith.constant 0 : i32
    %c0_i32_1 = arith.constant 0 : i32
    return %arg0, %c0_i32, %c0_i32_0 : i32, i32, i32
  }
  func.func @transform_5(%arg0: i32) -> (i32, i32, i32) {
    %c0_i32 = arith.constant 0 : i32
    %c0_i32_0 = arith.constant 0 : i32
    %c0_i32_1 = arith.constant 0 : i32
    return %arg0, %c0_i32, %c0_i32_0 : i32, i32, i32
  }
  func.func @transform_6(%arg0: i32) -> (i32, i32, i32) {
    %c0_i32 = arith.constant 0 : i32
    %c0_i32_0 = arith.constant 0 : i32
    %c0_i32_1 = arith.constant 0 : i32
    return %arg0, %c0_i32, %c0_i32_0 : i32, i32, i32
  }
  func.func @transform_7(%arg0: i32) -> (i32, i32, i32) {
    %c0_i32 = arith.constant 0 : i32
    %c0_i32_0 = arith.constant 0 : i32
    %c0_i32_1 = arith.constant 0 : i32
    return %arg0, %c0_i32, %c0_i32_0 : i32, i32, i32
  }
  func.func @transform_8(%arg0: i32) -> (i32, i32, i32) {
    %c0_i32 = arith.constant 0 : i32
    %c0_i32_0 = arith.constant 0 : i32
    %c0_i32_1 = arith.constant 0 : i32
    return %arg0, %c0_i32, %c0_i32_0 : i32, i32, i32
  }
  func.func @transform_9(%arg0: i32) -> (i32, i32, i32) {
    %c0_i32 = arith.constant 0 : i32
    %c0_i32_0 = arith.constant 0 : i32
    %c0_i32_1 = arith.constant 0 : i32
    return %arg0, %c0_i32, %c0_i32_0 : i32, i32, i32
  }
  func.func @transform_10(%arg0: i32) -> (i32, i32, i32) {
    %c0_i32 = arith.constant 0 : i32
    %c0_i32_0 = arith.constant 0 : i32
    %c0_i32_1 = arith.constant 0 : i32
    return %arg0, %c0_i32, %c0_i32_0 : i32, i32, i32
  }
  func.func @transform_11(%arg0: i32) -> (i32, i32, i32) {
    %c0_i32 = arith.constant 0 : i32
    %c0_i32_0 = arith.constant 0 : i32
    %c0_i32_1 = arith.constant 0 : i32
    return %arg0, %c0_i32, %c0_i32_0 : i32, i32, i32
  }
  func.func @transform_12(%arg0: i32) -> (i32, i32, i32) {
    %c0_i32 = arith.constant 0 : i32
    %c0_i32_0 = arith.constant 0 : i32
    %c0_i32_1 = arith.constant 0 : i32
    return %arg0, %c0_i32, %c0_i32_0 : i32, i32, i32
  }
  func.func @transform_13(%arg0: i32) -> (i32, i32, i32) {
    %c0_i32 = arith.constant 0 : i32
    %c0_i32_0 = arith.constant 0 : i32
    %c0_i32_1 = arith.constant 0 : i32
    return %arg0, %c0_i32, %c0_i32_0 : i32, i32, i32
  }
  func.func @transform_14(%arg0: i32) -> (i32, i32) {
    %c0_i32 = arith.constant 0 : i32
    %c0_i32_0 = arith.constant 0 : i32
    %c0_i32_1 = arith.constant 0 : i32
    return %c0_i32, %c0_i32_0 : i32, i32
  }
}

</mosaic_0001>

<llo_original>
// kernel: tpu_custom_call.1
$region0: #{tpu_custom_call.1}
  #allocation0 [shape = 'u32[]', space=smem, size = 0x4, offset = 0x4, fixed_abs, tag = 'smem constant byte address 0x4 - core index']
  #allocation1 [shape = 'u32[144,128]{1,0:T(1,128)}', space=vmem, size = 0x12000, scoped, tag = 'internal scratch']
  #allocation2 [shape = 'f32[16,32]{1,0:T(8,128)}', space=vmem, size = 0x2000, scoped, tag = 'scratch operand']
  #allocation3 [shape = 'f32[16,32]{1,0:T(8,128)}', space=vmem, size = 0x2000, scoped, tag = 'scratch operand']
  %s0 = inlined_call_operand.hbm [shape: f32[16,32], index: 0, kind: input, shape index: {}]
  %s1 = inlined_call_operand.vmem [shape: f32[2,8], index: 1, kind: input, shape index: {}]
  %s2 = inlined_call_operand.vmem [shape: f32[2,32,96], index: 2, kind: input, shape index: {}]
  %s3 = inlined_call_operand.vmem [shape: f32[2,1,96], index: 3, kind: input, shape index: {}]
  %s4 = inlined_call_operand.vmem [shape: f32[2,32,32], index: 4, kind: input, shape index: {}]
  %s5 = inlined_call_operand.vmem [shape: f32[2,1,32], index: 5, kind: input, shape index: {}]
  %s6 = inlined_call_operand.vmem [shape: f32[2,1,32], index: 6, kind: input, shape index: {}]
  %s7 = inlined_call_operand.vmem [shape: f32[2,1,32], index: 7, kind: input, shape index: {}]
  %s8 = inlined_call_operand.vmem [shape: f32[2,32,64], index: 8, kind: input, shape index: {}]
  %s9 = inlined_call_operand.vmem [shape: f32[2,1,64], index: 9, kind: input, shape index: {}]
  %s10 = inlined_call_operand.vmem [shape: f32[2,64,32], index: 10, kind: input, shape index: {}]
  %s11 = inlined_call_operand.vmem [shape: f32[2,1,32], index: 11, kind: input, shape index: {}]
  %s12 = inlined_call_operand.vmem [shape: f32[2,1,32], index: 12, kind: input, shape index: {}]
  %s13 = inlined_call_operand.vmem [shape: f32[2,1,32], index: 13, kind: input, shape index: {}]
  %s14 = inlined_call_operand.hbm [shape: f32[2,32], index: 14, kind: output, shape index: {}]
  %s15 = sld [smem:[#allocation0]]
  $region101: #{tpu_custom_call.1} parent=0
    _
  %s17 = ssub.s32 1, %s15
  %s18 = scalar_select 0, %s17, %s15
  $region1: #{tpu_custom_call.1} parent=0
    #allocation4 [shape = 'u8[8192]{0}', space=vmem, size = 0x2000, scoped, tag = 'input window, operand 0, single buffered']
    #allocation5 [shape = 's32[2]{0}', space=sflag, size = 0x8, scoped, tag = 'scoped memory for tpu_custom_call.1']
    #allocation6 [shape = 's32[2]{0}', space=sflag, size = 0x8, scoped, tag = 'scoped memory for tpu_custom_call.1']
    #allocation7 [shape = 'u8[1024]{0}', space=vmem, size = 0x400, scoped, tag = 'output window, operand 0, single buffered']
    %19 = vsyncpa [#allocation5], 0
    %20 = vsyncpa [#allocation6], 0
    loop: start=0, step=1, limit=4
    $region2: #{tpu_custom_call.1} parent=1 // loop_pre_header
      _
    $region3: #{tpu_custom_call.1} parent=1 // loop_header
      %s22 = sphi 0, %s26
      %p23 = scmp.ge.s32.totalorder %s22, 4
      %s30 = sphi 0, %s30
      %s32 = sphi 0, %s30
      %s33 = sphi 0, %s32
      %s47 = sphi 0, %s33
      %s51 = sphi 0, %s51
      %s53 = sphi 0, %s51
      %s54 = sphi 0, %s53
      %s68 = sphi 0, %s54
      %s74 = sphi 0, %s76
      %s77 = sphi 0, %s74
      %s78 = sphi 0, %s77
      %s94 = sphi 0, %s78
      %s100 = sphi 0, %s102
      %s103 = sphi 0, %s100
      %s104 = sphi 0, %s103
      %s120 = sphi 0, %s104
      %s126 = sphi 0, %s128
      %s129 = sphi 0, %s126
      %s130 = sphi 0, %s129
      %s146 = sphi 0, %s130
      %s152 = sphi 0, %s154
      %s155 = sphi 0, %s152
      %s156 = sphi 0, %s155
      %s172 = sphi 0, %s156
      %s178 = sphi 0, %s180
      %s181 = sphi 0, %s178
      %s182 = sphi 0, %s181
      %s198 = sphi 0, %s182
      %s204 = sphi 0, %s206
      %s207 = sphi 0, %s204
      %s208 = sphi 0, %s207
      %s224 = sphi 0, %s208
      %s230 = sphi 0, %s232
      %s233 = sphi 0, %s230
      %s234 = sphi 0, %s233
      %s250 = sphi 0, %s234
      %s256 = sphi 0, %s258
      %s259 = sphi 0, %s256
      %s260 = sphi 0, %s259
      %s276 = sphi 0, %s260
      %s282 = sphi 0, %s284
      %s285 = sphi 0, %s282
      %s286 = sphi 0, %s285
      %s302 = sphi 0, %s286
      %s308 = sphi 0, %s310
      %s311 = sphi 0, %s308
      %s312 = sphi 0, %s311
      %s328 = sphi 0, %s312
      %s334 = sphi 0, %s336
      %s337 = sphi 0, %s334
      %s338 = sphi 0, %s337
      %s354 = sphi 0, %s338
      %s360 = sphi 0, %s362
      %s363 = sphi 0, %s360
      %s364 = sphi 0, %s363
      %s380 = sphi 0, %s364
      %s384 = sphi 0, %s384
      %s386 = sphi 0, %s384
      %s387 = sphi 0, %s386
      %s401 = sphi 0, %s387
    $region4: #{tpu_custom_call.1} parent=1 // loop_header_branch
      %25 = sbr.rel (%p23) target = $region8
    $region5: #{tpu_custom_call.1} parent=1 // loop_body
      %s27 = ssub.s32 %s22, 1
      %s28 = ssub.s32 %s22, 2
      %s29 = sadd.s32 %s22, 1
      %s31 = sadd.s32 %s30, 1
      %p34 = scmp.eq.s32.totalorder %s22, 1
      %p35 = scmp.ne.s32.totalorder %s30, %s32
      %p36 = scmp.eq.s32.totalorder %s22, 0
      %p37 = por %p35, %p36
      %p38 = scmp.ne.s32.totalorder %s30, %s32
      %p39 = scmp.eq.s32.totalorder %s27, 1
      %p40 = por %p38, %p39
      %p41 = scmp.ne.s32.totalorder %s32, %s33
      %p42 = scmp.eq.s32.totalorder %s27, 0
      %p43 = por %p41, %p42
      %p44 = scmp.ne.s32.totalorder %s32, %s33
      %p45 = scmp.eq.s32.totalorder %s28, 1
      %p46 = por %p44, %p45
      %p48 = scmp.ne.s32.totalorder %s33, %s47
      %p49 = scmp.eq.s32.totalorder %s28, 0
      %p50 = por %p48, %p49
      %s52 = sadd.s32 %s51, 1
      %p55 = scmp.eq.s32.totalorder %s22, 1
      %p56 = scmp.ne.s32.totalorder %s51, %s53
      %p57 = scmp.eq.s32.totalorder %s22, 0
      %p58 = por %p56, %p57
      %p59 = scmp.ne.s32.totalorder %s51, %s53
      %p60 = scmp.eq.s32.totalorder %s27, 1
      %p61 = por %p59, %p60
      %p62 = scmp.ne.s32.totalorder %s53, %s54
      %p63 = scmp.eq.s32.totalorder %s27, 0
      %p64 = por %p62, %p63
      %p65 = scmp.ne.s32.totalorder %s53, %s54
      %p66 = scmp.eq.s32.totalorder %s28, 1
      %p67 = por %p65, %p66
      %p69 = scmp.ne.s32.totalorder %s54, %s68
      %p70 = scmp.eq.s32.totalorder %s28, 0
      %p71 = por %p69, %p70
      %s72 = ssub.s32 %s22, %s29
      %p73 = scmp.eq.s32.totalorder %s72, 0
      %s75 = sadd.s32 %s74, 1
      %s76 = scalar_select %p73, %s74, %s75
      %p79 = pneg %p73
      %p80 = scmp.eq.s32.totalorder %s22, 1
      %p81 = por %p79, %p80
      %p82 = scmp.ne.s32.totalorder %s74, %s77
      %p83 = scmp.eq.s32.totalorder %s22, 0
      %p84 = por %p82, %p83
      %p85 = scmp.ne.s32.totalorder %s74, %s77
      %p86 = scmp.eq.s32.totalorder %s27, 1
      %p87 = por %p85, %p86
      %p88 = scmp.ne.s32.totalorder %s77, %s78
      %p89 = scmp.eq.s32.totalorder %s27, 0
      %p90 = por %p88, %p89
      %p91 = scmp.ne.s32.totalorder %s77, %s78
      %p92 = scmp.eq.s32.totalorder %s28, 1
      %p93 = por %p91, %p92
      %p95 = scmp.ne.s32.totalorder %s78, %s94
      %p96 = scmp.eq.s32.totalorder %s28, 0
      %p97 = por %p95, %p96
      %s98 = ssub.s32 %s22, %s29
      %p99 = scmp.eq.s32.totalorder %s98, 0
      %s101 = sadd.s32 %s100, 1
      %s102 = scalar_select %p99, %s100, %s101
      %p105 = pneg %p99
      %p106 = scmp.eq.s32.totalorder %s22, 1
      %p107 = por %p105, %p106
      %p108 = scmp.ne.s32.totalorder %s100, %s103
      %p109 = scmp.eq.s32.totalorder %s22, 0
      %p110 = por %p108, %p109
      %p111 = scmp.ne.s32.totalorder %s100, %s103
      %p112 = scmp.eq.s32.totalorder %s27, 1
      %p113 = por %p111, %p112
      %p114 = scmp.ne.s32.totalorder %s103, %s104
      %p115 = scmp.eq.s32.totalorder %s27, 0
      %p116 = por %p114, %p115
      %p117 = scmp.ne.s32.totalorder %s103, %s104
      %p118 = scmp.eq.s32.totalorder %s28, 1
      %p119 = por %p117, %p118
      %p121 = scmp.ne.s32.totalorder %s104, %s120
      %p122 = scmp.eq.s32.totalorder %s28, 0
      %p123 = por %p121, %p122
      %s124 = ssub.s32 %s22, %s29
      %p125 = scmp.eq.s32.totalorder %s124, 0
      %s127 = sadd.s32 %s126, 1
      %s128 = scalar_select %p125, %s126, %s127
      %p131 = pneg %p125
      %p132 = scmp.eq.s32.totalorder %s22, 1
      %p133 = por %p131, %p132
      %p134 = scmp.ne.s32.totalorder %s126, %s129
      %p135 = scmp.eq.s32.totalorder %s22, 0
      %p136 = por %p134, %p135
      %p137 = scmp.ne.s32.totalorder %s126, %s129
      %p138 = scmp.eq.s32.totalorder %s27, 1
      %p139 = por %p137, %p138
      %p140 = scmp.ne.s32.totalorder %s129, %s130
      %p141 = scmp.eq.s32.totalorder %s27, 0
      %p142 = por %p140, %p141
      %p143 = scmp.ne.s32.totalorder %s129, %s130
      %p144 = scmp.eq.s32.totalorder %s28, 1
      %p145 = por %p143, %p144
      %p147 = scmp.ne.s32.totalorder %s130, %s146
      %p148 = scmp.eq.s32.totalorder %s28, 0
      %p149 = por %p147, %p148
      %s150 = ssub.s32 %s22, %s29
      %p151 = scmp.eq.s32.totalorder %s150, 0
      %s153 = sadd.s32 %s152, 1
      %s154 = scalar_select %p151, %s152, %s153
      %p157 = pneg %p151
      %p158 = scmp.eq.s32.totalorder %s22, 1
      %p159 = por %p157, %p158
      %p160 = scmp.ne.s32.totalorder %s152, %s155
      %p161 = scmp.eq.s32.totalorder %s22, 0
      %p162 = por %p160, %p161
      %p163 = scmp.ne.s32.totalorder %s152, %s155
      %p164 = scmp.eq.s32.totalorder %s27, 1
      %p165 = por %p163, %p164
      %p166 = scmp.ne.s32.totalorder %s155, %s156
      %p167 = scmp.eq.s32.totalorder %s27, 0
      %p168 = por %p166, %p167
      %p169 = scmp.ne.s32.totalorder %s155, %s156
      %p170 = scmp.eq.s32.totalorder %s28, 1
      %p171 = por %p169, %p170
      %p173 = scmp.ne.s32.totalorder %s156, %s172
      %p174 = scmp.eq.s32.totalorder %s28, 0
      %p175 = por %p173, %p174
      %s176 = ssub.s32 %s22, %s29
      %p177 = scmp.eq.s32.totalorder %s176, 0
      %s179 = sadd.s32 %s178, 1
      %s180 = scalar_select %p177, %s178, %s179
      %p183 = pneg %p177
      %p184 = scmp.eq.s32.totalorder %s22, 1
      %p185 = por %p183, %p184
      %p186 = scmp.ne.s32.totalorder %s178, %s181
      %p187 = scmp.eq.s32.totalorder %s22, 0
      %p188 = por %p186, %p187
      %p189 = scmp.ne.s32.totalorder %s178, %s181
      %p190 = scmp.eq.s32.totalorder %s27, 1
      %p191 = por %p189, %p190
      %p192 = scmp.ne.s32.totalorder %s181, %s182
      %p193 = scmp.eq.s32.totalorder %s27, 0
      %p194 = por %p192, %p193
      %p195 = scmp.ne.s32.totalorder %s181, %s182
      %p196 = scmp.eq.s32.totalorder %s28, 1
      %p197 = por %p195, %p196
      %p199 = scmp.ne.s32.totalorder %s182, %s198
      %p200 = scmp.eq.s32.totalorder %s28, 0
      %p201 = por %p199, %p200
      %s202 = ssub.s32 %s22, %s29
      %p203 = scmp.eq.s32.totalorder %s202, 0
      %s205 = sadd.s32 %s204, 1
      %s206 = scalar_select %p203, %s204, %s205
      %p209 = pneg %p203
      %p210 = scmp.eq.s32.totalorder %s22, 1
      %p211 = por %p209, %p210
      %p212 = scmp.ne.s32.totalorder %s204, %s207
      %p213 = scmp.eq.s32.totalorder %s22, 0
      %p214 = por %p212, %p213
      %p215 = scmp.ne.s32.totalorder %s204, %s207
      %p216 = scmp.eq.s32.totalorder %s27, 1
      %p217 = por %p215, %p216
      %p218 = scmp.ne.s32.totalorder %s207, %s208
      %p219 = scmp.eq.s32.totalorder %s27, 0
      %p220 = por %p218, %p219
      %p221 = scmp.ne.s32.totalorder %s207, %s208
      %p222 = scmp.eq.s32.totalorder %s28, 1
      %p223 = por %p221, %p222
      %p225 = scmp.ne.s32.totalorder %s208, %s224
      %p226 = scmp.eq.s32.totalorder %s28, 0
      %p227 = por %p225, %p226
      %s228 = ssub.s32 %s22, %s29
      %p229 = scmp.eq.s32.totalorder %s228, 0
      %s231 = sadd.s32 %s230, 1
      %s232 = scalar_select %p229, %s230, %s231
      %p235 = pneg %p229
      %p236 = scmp.eq.s32.totalorder %s22, 1
      %p237 = por %p235, %p236
      %p238 = scmp.ne.s32.totalorder %s230, %s233
      %p239 = scmp.eq.s32.totalorder %s22, 0
      %p240 = por %p238, %p239
      %p241 = scmp.ne.s32.totalorder %s230, %s233
      %p242 = scmp.eq.s32.totalorder %s27, 1
      %p243 = por %p241, %p242
      %p244 = scmp.ne.s32.totalorder %s233, %s234
      %p245 = scmp.eq.s32.totalorder %s27, 0
      %p246 = por %p244, %p245
      %p247 = scmp.ne.s32.totalorder %s233, %s234
      %p248 = scmp.eq.s32.totalorder %s28, 1
      %p249 = por %p247, %p248
      %p251 = scmp.ne.s32.totalorder %s234, %s250
      %p252 = scmp.eq.s32.totalorder %s28, 0
      %p253 = por %p251, %p252
      %s254 = ssub.s32 %s22, %s29
      %p255 = scmp.eq.s32.totalorder %s254, 0
      %s257 = sadd.s32 %s256, 1
      %s258 = scalar_select %p255, %s256, %s257
      %p261 = pneg %p255
      %p262 = scmp.eq.s32.totalorder %s22, 1
      %p263 = por %p261, %p262
      %p264 = scmp.ne.s32.totalorder %s256, %s259
      %p265 = scmp.eq.s32.totalorder %s22, 0
      %p266 = por %p264, %p265
      %p267 = scmp.ne.s32.totalorder %s256, %s259
      %p268 = scmp.eq.s32.totalorder %s27, 1
      %p269 = por %p267, %p268
      %p270 = scmp.ne.s32.totalorder %s259, %s260
      %p271 = scmp.eq.s32.totalorder %s27, 0
      %p272 = por %p270, %p271
      %p273 = scmp.ne.s32.totalorder %s259, %s260
      %p274 = scmp.eq.s32.totalorder %s28, 1
      %p275 = por %p273, %p274
      %p277 = scmp.ne.s32.totalorder %s260, %s276
      %p278 = scmp.eq.s32.totalorder %s28, 0
      %p279 = por %p277, %p278
      %s280 = ssub.s32 %s22, %s29
      %p281 = scmp.eq.s32.totalorder %s280, 0
      %s283 = sadd.s32 %s282, 1
      %s284 = scalar_select %p281, %s282, %s283
      %p287 = pneg %p281
      %p288 = scmp.eq.s32.totalorder %s22, 1
      %p289 = por %p287, %p288
      %p290 = scmp.ne.s32.totalorder %s282, %s285
      %p291 = scmp.eq.s32.totalorder %s22, 0
      %p292 = por %p290, %p291
      %p293 = scmp.ne.s32.totalorder %s282, %s285
      %p294 = scmp.eq.s32.totalorder %s27, 1
      %p295 = por %p293, %p294
      %p296 = scmp.ne.s32.totalorder %s285, %s286
      %p297 = scmp.eq.s32.totalorder %s27, 0
      %p298 = por %p296, %p297
      %p299 = scmp.ne.s32.totalorder %s285, %s286
      %p300 = scmp.eq.s32.totalorder %s28, 1
      %p301 = por %p299, %p300
      %p303 = scmp.ne.s32.totalorder %s286, %s302
      %p304 = scmp.eq.s32.totalorder %s28, 0
      %p305 = por %p303, %p304
      %s306 = ssub.s32 %s22, %s29
      %p307 = scmp.eq.s32.totalorder %s306, 0
      %s309 = sadd.s32 %s308, 1
      %s310 = scalar_select %p307, %s308, %s309
      %p313 = pneg %p307
      %p314 = scmp.eq.s32.totalorder %s22, 1
      %p315 = por %p313, %p314
      %p316 = scmp.ne.s32.totalorder %s308, %s311
      %p317 = scmp.eq.s32.totalorder %s22, 0
      %p318 = por %p316, %p317
      %p319 = scmp.ne.s32.totalorder %s308, %s311
      %p320 = scmp.eq.s32.totalorder %s27, 1
      %p321 = por %p319, %p320
      %p322 = scmp.ne.s32.totalorder %s311, %s312
      %p323 = scmp.eq.s32.totalorder %s27, 0
      %p324 = por %p322, %p323
      %p325 = scmp.ne.s32.totalorder %s311, %s312
      %p326 = scmp.eq.s32.totalorder %s28, 1
      %p327 = por %p325, %p326
      %p329 = scmp.ne.s32.totalorder %s312, %s328
      %p330 = scmp.eq.s32.totalorder %s28, 0
      %p331 = por %p329, %p330
      %s332 = ssub.s32 %s22, %s29
      %p333 = scmp.eq.s32.totalorder %s332, 0
      %s335 = sadd.s32 %s334, 1
      %s336 = scalar_select %p333, %s334, %s335
      %p339 = pneg %p333
      %p340 = scmp.eq.s32.totalorder %s22, 1
      %p341 = por %p339, %p340
      %p342 = scmp.ne.s32.totalorder %s334, %s337
      %p343 = scmp.eq.s32.totalorder %s22, 0
      %p344 = por %p342, %p343
      %p345 = scmp.ne.s32.totalorder %s334, %s337
      %p346 = scmp.eq.s32.totalorder %s27, 1
      %p347 = por %p345, %p346
      %p348 = scmp.ne.s32.totalorder %s337, %s338
      %p349 = scmp.eq.s32.totalorder %s27, 0
      %p350 = por %p348, %p349
      %p351 = scmp.ne.s32.totalorder %s337, %s338
      %p352 = scmp.eq.s32.totalorder %s28, 1
      %p353 = por %p351, %p352
      %p355 = scmp.ne.s32.totalorder %s338, %s354
      %p356 = scmp.eq.s32.totalorder %s28, 0
      %p357 = por %p355, %p356
      %s358 = ssub.s32 %s22, %s29
      %p359 = scmp.eq.s32.totalorder %s358, 0
      %s361 = sadd.s32 %s360, 1
      %s362 = scalar_select %p359, %s360, %s361
      %p365 = pneg %p359
      %p366 = scmp.eq.s32.totalorder %s22, 1
      %p367 = por %p365, %p366
      %p368 = scmp.ne.s32.totalorder %s360, %s363
      %p369 = scmp.eq.s32.totalorder %s22, 0
      %p370 = por %p368, %p369
      %p371 = scmp.ne.s32.totalorder %s360, %s363
      %p372 = scmp.eq.s32.totalorder %s27, 1
      %p373 = por %p371, %p372
      %p374 = scmp.ne.s32.totalorder %s363, %s364
      %p375 = scmp.eq.s32.totalorder %s27, 0
      %p376 = por %p374, %p375
      %p377 = scmp.ne.s32.totalorder %s363, %s364
      %p378 = scmp.eq.s32.totalorder %s28, 1
      %p379 = por %p377, %p378
      %p381 = scmp.ne.s32.totalorder %s364, %s380
      %p382 = scmp.eq.s32.totalorder %s28, 0
      %p383 = por %p381, %p382
      %s385 = sadd.s32 %s384, 1
      %p388 = scmp.eq.s32.totalorder %s22, 1
      %p389 = scmp.ne.s32.totalorder %s384, %s386
      %p390 = scmp.eq.s32.totalorder %s22, 0
      %p391 = por %p389, %p390
      %p392 = scmp.ne.s32.totalorder %s384, %s386
      %p393 = scmp.eq.s32.totalorder %s27, 1
      %p394 = por %p392, %p393
      %p395 = scmp.ne.s32.totalorder %s386, %s387
      %p396 = scmp.eq.s32.totalorder %s27, 0
      %p397 = por %p395, %p396
      %p398 = scmp.ne.s32.totalorder %s386, %s387
      %p399 = scmp.eq.s32.totalorder %s28, 1
      %p400 = por %p398, %p399
      %p402 = scmp.ne.s32.totalorder %s387, %s401
      %p403 = scmp.eq.s32.totalorder %s28, 0
      %p404 = por %p402, %p403
      %p405 = scmp.le.s32.totalorder 1, %s22
      %p406 = scmp.lt.s32.totalorder %s22, 3
      %p407 = pnand %p405, %p406
      %p408 = pneg %p407
      // Predicated region
      $region9: #{tpu_custom_call.1} parent=5 // pred_check
        _
      $region10: #{tpu_custom_call.1} parent=5 // pred_check_branch
        %410 = sbr.rel (%p407) target = $region12
      $region11: #{tpu_custom_call.1} parent=5 // pred_region
        %s411 = ssub.s32 %s22, 1
        // Predicated region
        $region13: #{tpu_custom_call.1} parent=11 // pred_check
          %p412 = pneg %p43
        $region14: #{tpu_custom_call.1} parent=11 // pred_check_branch
          %414 = sbr.rel (%p412) target = $region16
        $region15: #{tpu_custom_call.1} parent=11 // pred_region
          %s416 = ssub.s32 256, 256
          %417 = vsyncadd [#allocation5], %s416
          %s418 = sshll.u32 [#allocation4], 4
          %s419 = int_to_ptr.vmem [resolvable:$true] %s418
          %424 = dma.hbm_to_vmem [thread:$0]  %s0, 256, %s419, [#allocation5], 128, 128, 8
        $region16: #{tpu_custom_call.1} parent=11 // pred_fallthru
          _
        // Predicated region
        $region17: #{tpu_custom_call.1} parent=11 // pred_check
          %p425 = pneg %p64
        $region18: #{tpu_custom_call.1} parent=11 // pred_check_branch
          %427 = sbr.rel (%p425) target = $region20
        $region19: #{tpu_custom_call.1} parent=11 // pred_region
          _
        $region20: #{tpu_custom_call.1} parent=11 // pred_fallthru
          _
      $region12: #{tpu_custom_call.1} parent=5 // pred_fallthru
        _
      %p428 = scmp.lt.s32.totalorder %s22, 2
      // Predicated region
      $region21: #{tpu_custom_call.1} parent=5 // pred_check
        %p429 = pneg %p428
      $region22: #{tpu_custom_call.1} parent=5 // pred_check_branch
        %431 = sbr.rel (%p429) target = $region24
      $region23: #{tpu_custom_call.1} parent=5 // pred_region
        // Predicated region
        $region25: #{tpu_custom_call.1} parent=23 // pred_check
          %p432 = pneg %p84
        $region26: #{tpu_custom_call.1} parent=23 // pred_check_branch
          %434 = sbr.rel (%p432) target = $region28
        $region27: #{tpu_custom_call.1} parent=23 // pred_region
          %p435 = scmp.lt.s32.totalorder %s22, 1
          %s436 = scalar_select %p435, %s22, 1
          %s437 = smul.addr %s436, 4
          %s438 = smul.addr %s437, 8
          %s439 = scalar_lea.vmem %s2, %s438
        $region28: #{tpu_custom_call.1} parent=23 // pred_fallthru
          _
        // Predicated region
        $region29: #{tpu_custom_call.1} parent=23 // pred_check
          %p440 = pneg %p110
        $region30: #{tpu_custom_call.1} parent=23 // pred_check_branch
          %442 = sbr.rel (%p440) target = $region32
        $region31: #{tpu_custom_call.1} parent=23 // pred_region
          %p443 = scmp.lt.s32.totalorder %s22, 1
          %s444 = scalar_select %p443, %s22, 1
          %s445 = scalar_lea.vmem %s3, %s444
        $region32: #{tpu_custom_call.1} parent=23 // pred_fallthru
          _
        // Predicated region
        $region33: #{tpu_custom_call.1} parent=23 // pred_check
          %p446 = pneg %p136
        $region34: #{tpu_custom_call.1} parent=23 // pred_check_branch
          %448 = sbr.rel (%p446) target = $region36
        $region35: #{tpu_custom_call.1} parent=23 // pred_region
          %p449 = scmp.lt.s32.totalorder %s22, 1
          %s450 = scalar_select %p449, %s22, 1
          %s451 = smul.addr %s450, 4
          %s452 = smul.addr %s451, 8
          %s453 = scalar_lea.vmem %s4, %s452
        $region36: #{tpu_custom_call.1} parent=23 // pred_fallthru
          _
        // Predicated region
        $region37: #{tpu_custom_call.1} parent=23 // pred_check
          %p454 = pneg %p162
        $region38: #{tpu_custom_call.1} parent=23 // pred_check_branch
          %456 = sbr.rel (%p454) target = $region40
        $region39: #{tpu_custom_call.1} parent=23 // pred_region
          %p457 = scmp.lt.s32.totalorder %s22, 1
          %s458 = scalar_select %p457, %s22, 1
          %s459 = scalar_lea.vmem %s5, %s458
        $region40: #{tpu_custom_call.1} parent=23 // pred_fallthru
          _
        // Predicated region
        $region41: #{tpu_custom_call.1} parent=23 // pred_check
          %p460 = pneg %p188
        $region42: #{tpu_custom_call.1} parent=23 // pred_check_branch
          %462 = sbr.rel (%p460) target = $region44
        $region43: #{tpu_custom_call.1} parent=23 // pred_region
          %p463 = scmp.lt.s32.totalorder %s22, 1
          %s464 = scalar_select %p463, %s22, 1
          %s465 = scalar_lea.vmem %s6, %s464
        $region44: #{tpu_custom_call.1} parent=23 // pred_fallthru
          _
        // Predicated region
        $region45: #{tpu_custom_call.1} parent=23 // pred_check
          %p466 = pneg %p214
        $region46: #{tpu_custom_call.1} parent=23 // pred_check_branch
          %468 = sbr.rel (%p466) target = $region48
        $region47: #{tpu_custom_call.1} parent=23 // pred_region
          %p469 = scmp.lt.s32.totalorder %s22, 1
          %s470 = scalar_select %p469, %s22, 1
          %s471 = scalar_lea.vmem %s7, %s470
        $region48: #{tpu_custom_call.1} parent=23 // pred_fallthru
          _
        // Predicated region
        $region49: #{tpu_custom_call.1} parent=23 // pred_check
          %p472 = pneg %p240
        $region50: #{tpu_custom_call.1} parent=23 // pred_check_branch
          %474 = sbr.rel (%p472) target = $region52
        $region51: #{tpu_custom_call.1} parent=23 // pred_region
          %p475 = scmp.lt.s32.totalorder %s22, 1
          %s476 = scalar_select %p475, %s22, 1
          %s477 = smul.addr %s476, 4
          %s478 = smul.addr %s477, 8
          %s479 = scalar_lea.vmem %s8, %s478
        $region52: #{tpu_custom_call.1} parent=23 // pred_fallthru
          _
        // Predicated region
        $region53: #{tpu_custom_call.1} parent=23 // pred_check
          %p480 = pneg %p266
        $region54: #{tpu_custom_call.1} parent=23 // pred_check_branch
          %482 = sbr.rel (%p480) target = $region56
        $region55: #{tpu_custom_call.1} parent=23 // pred_region
          %p483 = scmp.lt.s32.totalorder %s22, 1
          %s484 = scalar_select %p483, %s22, 1
          %s485 = scalar_lea.vmem %s9, %s484
        $region56: #{tpu_custom_call.1} parent=23 // pred_fallthru
          _
        // Predicated region
        $region57: #{tpu_custom_call.1} parent=23 // pred_check
          %p486 = pneg %p292
        $region58: #{tpu_custom_call.1} parent=23 // pred_check_branch
          %488 = sbr.rel (%p486) target = $region60
        $region59: #{tpu_custom_call.1} parent=23 // pred_region
          %p489 = scmp.lt.s32.totalorder %s22, 1
          %s490 = scalar_select %p489, %s22, 1
          %s491 = smul.addr %s490, 8
          %s492 = smul.addr %s491, 8
          %s493 = scalar_lea.vmem %s10, %s492
        $region60: #{tpu_custom_call.1} parent=23 // pred_fallthru
          _
        // Predicated region
        $region61: #{tpu_custom_call.1} parent=23 // pred_check
          %p494 = pneg %p318
        $region62: #{tpu_custom_call.1} parent=23 // pred_check_branch
          %496 = sbr.rel (%p494) target = $region64
        $region63: #{tpu_custom_call.1} parent=23 // pred_region
          %p497 = scmp.lt.s32.totalorder %s22, 1
          %s498 = scalar_select %p497, %s22, 1
          %s499 = scalar_lea.vmem %s11, %s498
        $region64: #{tpu_custom_call.1} parent=23 // pred_fallthru
          _
        // Predicated region
        $region65: #{tpu_custom_call.1} parent=23 // pred_check
          %p500 = pneg %p344
        $region66: #{tpu_custom_call.1} parent=23 // pred_check_branch
          %502 = sbr.rel (%p500) target = $region68
        $region67: #{tpu_custom_call.1} parent=23 // pred_region
          %p503 = scmp.lt.s32.totalorder %s22, 1
          %s504 = scalar_select %p503, %s22, 1
          %s505 = scalar_lea.vmem %s12, %s504
        $region68: #{tpu_custom_call.1} parent=23 // pred_fallthru
          _
        // Predicated region
        $region69: #{tpu_custom_call.1} parent=23 // pred_check
          %p506 = pneg %p370
        $region70: #{tpu_custom_call.1} parent=23 // pred_check_branch
          %508 = sbr.rel (%p506) target = $region72
        $region71: #{tpu_custom_call.1} parent=23 // pred_region
          %p509 = scmp.lt.s32.totalorder %s22, 1
          %s510 = scalar_select %p509, %s22, 1
          %s511 = scalar_lea.vmem %s13, %s510
        $region72: #{tpu_custom_call.1} parent=23 // pred_fallthru
          _
      $region24: #{tpu_custom_call.1} parent=5 // pred_fallthru
        _
      %p512 = scmp.le.s32.totalorder 1, %s22
      %p513 = scmp.lt.s32.totalorder %s22, 3
      %p514 = pnand %p512, %p513
      %p515 = pneg %p514
      // Predicated region
      $region73: #{tpu_custom_call.1} parent=5 // pred_check
        _
      $region74: #{tpu_custom_call.1} parent=5 // pred_check_branch
        %517 = sbr.rel (%p514) target = $region76
      $region75: #{tpu_custom_call.1} parent=5 // pred_region
        %s518 = ssub.s32 %s22, 1
        // Predicated region
        $region77: #{tpu_custom_call.1} parent=75 // pred_check
          %p519 = pneg %p43
        $region78: #{tpu_custom_call.1} parent=75 // pred_check_branch
          %521 = sbr.rel (%p519) target = $region80
        $region79: #{tpu_custom_call.1} parent=75 // pred_region
          %522 = dma.done [#allocation5], 256
        $region80: #{tpu_custom_call.1} parent=75 // pred_fallthru
          _
        %p523 = pneg %p43
        %p524 = pneg %p40
        %p525 = pneg %p64
        %p526 = pneg %p61
        %p527 = scmp.lt.s32.totalorder %s27, 1
        %s528 = scalar_select %p527, %s27, 1
        %s529 = smul.addr %s528, 4
        %s530 = smul.addr %s529, 8
        %s531 = scalar_lea.vmem %s2, %s530
        %p532 = pneg %p90
        %p533 = pneg %p87
        %p534 = scmp.lt.s32.totalorder %s27, 1
        %s535 = scalar_select %p534, %s27, 1
        %s536 = scalar_lea.vmem %s3, %s535
        %p537 = pneg %p116
        %p538 = pneg %p113
        %p539 = scmp.lt.s32.totalorder %s27, 1
        %s540 = scalar_select %p539, %s27, 1
        %s541 = smul.addr %s540, 4
        %s542 = smul.addr %s541, 8
        %s543 = scalar_lea.vmem %s4, %s542
        %p544 = pneg %p142
        %p545 = pneg %p139
        %p546 = scmp.lt.s32.totalorder %s27, 1
        %s547 = scalar_select %p546, %s27, 1
        %s548 = scalar_lea.vmem %s5, %s547
        %p549 = pneg %p168
        %p550 = pneg %p165
        %p551 = scmp.lt.s32.totalorder %s27, 1
        %s552 = scalar_select %p551, %s27, 1
        %s553 = scalar_lea.vmem %s6, %s552
        %p554 = pneg %p194
        %p555 = pneg %p191
        %p556 = scmp.lt.s32.totalorder %s27, 1
        %s557 = scalar_select %p556, %s27, 1
        %s558 = scalar_lea.vmem %s7, %s557
        %p559 = pneg %p220
        %p560 = pneg %p217
        %p561 = scmp.lt.s32.totalorder %s27, 1
        %s562 = scalar_select %p561, %s27, 1
        %s563 = smul.addr %s562, 4
        %s564 = smul.addr %s563, 8
        %s565 = scalar_lea.vmem %s8, %s564
        %p566 = pneg %p246
        %p567 = pneg %p243
        %p568 = scmp.lt.s32.totalorder %s27, 1
        %s569 = scalar_select %p568, %s27, 1
        %s570 = scalar_lea.vmem %s9, %s569
        %p571 = pneg %p272
        %p572 = pneg %p269
        %p573 = scmp.lt.s32.totalorder %s27, 1
        %s574 = scalar_select %p573, %s27, 1
        %s575 = smul.addr %s574, 8
        %s576 = smul.addr %s575, 8
        %s577 = scalar_lea.vmem %s10, %s576
        %p578 = pneg %p298
        %p579 = pneg %p295
        %p580 = scmp.lt.s32.totalorder %s27, 1
        %s581 = scalar_select %p580, %s27, 1
        %s582 = scalar_lea.vmem %s11, %s581
        %p583 = pneg %p324
        %p584 = pneg %p321
        %p585 = scmp.lt.s32.totalorder %s27, 1
        %s586 = scalar_select %p585, %s27, 1
        %s587 = scalar_lea.vmem %s12, %s586
        %p588 = pneg %p350
        %p589 = pneg %p347
        %p590 = scmp.lt.s32.totalorder %s27, 1
        %s591 = scalar_select %p590, %s27, 1
        %s592 = scalar_lea.vmem %s13, %s591
        %p593 = pneg %p376
        %p594 = pneg %p373
        %p595 = pneg %p397
        %p596 = pneg %p394
        %p597 = scmp.lt.s32.totalorder %s27, 1
        %s598 = scalar_select %p597, %s27, 1
        %s599 = smul.addr %s598, 4
        %s600 = smul.addr %s599, 8
        %s601 = scalar_lea.vmem %s2, %s600
        %p602 = scmp.lt.s32.totalorder %s27, 1
        %s603 = scalar_select %p602, %s27, 1
        %s604 = scalar_lea.vmem %s3, %s603
        %p605 = scmp.lt.s32.totalorder %s27, 1
        %s606 = scalar_select %p605, %s27, 1
        %s607 = smul.addr %s606, 4
        %s608 = smul.addr %s607, 8
        %s609 = scalar_lea.vmem %s4, %s608
        %p610 = scmp.lt.s32.totalorder %s27, 1
        %s611 = scalar_select %p610, %s27, 1
        %s612 = scalar_lea.vmem %s5, %s611
        %p613 = scmp.lt.s32.totalorder %s27, 1
        %s614 = scalar_select %p613, %s27, 1
        %s615 = scalar_lea.vmem %s6, %s614
        %p616 = scmp.lt.s32.totalorder %s27, 1
        %s617 = scalar_select %p616, %s27, 1
        %s618 = scalar_lea.vmem %s7, %s617
        %p619 = scmp.lt.s32.totalorder %s27, 1
        %s620 = scalar_select %p619, %s27, 1
        %s621 = smul.addr %s620, 4
        %s622 = smul.addr %s621, 8
        %s623 = scalar_lea.vmem %s8, %s622
        %p624 = scmp.lt.s32.totalorder %s27, 1
        %s625 = scalar_select %p624, %s27, 1
        %s626 = scalar_lea.vmem %s9, %s625
        %p627 = scmp.lt.s32.totalorder %s27, 1
        %s628 = scalar_select %p627, %s27, 1
        %s629 = smul.addr %s628, 8
        %s630 = smul.addr %s629, 8
        %s631 = scalar_lea.vmem %s10, %s630
        %p632 = scmp.lt.s32.totalorder %s27, 1
        %s633 = scalar_select %p632, %s27, 1
        %s634 = scalar_lea.vmem %s11, %s633
        %p635 = scmp.lt.s32.totalorder %s27, 1
        %s636 = scalar_select %p635, %s27, 1
        %s637 = scalar_lea.vmem %s12, %s636
        %p638 = scmp.lt.s32.totalorder %s27, 1
        %s639 = scalar_select %p638, %s27, 1
        %s640 = scalar_lea.vmem %s13, %s639
        %p641 = scmp.eq.s32.totalorder %s27, 0
        // Predicated region
        $region81: #{tpu_custom_call.1} parent=75 // pred_check
          %p642 = pneg %p641
        $region82: #{tpu_custom_call.1} parent=75 // pred_check_branch
          %644 = sbr.rel (%p642) target = $region84
        $region83: #{tpu_custom_call.1} parent=75 // pred_region
          %v645 = vld [vmem:[#allocation4] sm:$0xff]
          %v646 = vld [vmem:[#allocation4 + $0x8] sm:$0xff]
          %vm647 = vcmask 261120
          %648 = vst.msk [vmem:[#allocation2] sm:$0xff] %vm647, %v645
          %649 = vst.msk [vmem:[#allocation2 + $0x8] sm:$0xff] %vm647, %v646
        $region84: #{tpu_custom_call.1} parent=75 // pred_fallthru
          _
        %v650 = vld [vmem:[#allocation2] sm:$0xff]
        %v651 = vld [vmem:[#allocation2 + $0x8] sm:$0xff]
        %v652 = vld [vmem:[%s601] sm:$0xff]
        %v653 = vld [vmem:[%s601 + $0x8] sm:$0xff]
        %v654 = vld [vmem:[%s601 + $0x10] sm:$0xff]
        %v655 = vld [vmem:[%s601 + $0x18] sm:$0xff]
        %v656 = vld [vmem:[%s604] sm:$0x1]
        %v658 = vlaneseq
        %v659 = vshrl.u32 %v658, 7
        %v660 = vsub.s32 0, %v659
        %v661 = vrot.slane %v656, %v660
        %vm663 = vcmask 261120
        %v665 = vsel %vm663, %v650, 0
        %v668 = vsel %vm663, %v651, 0
        %670 = vmatprep.subr.mxu0 0.0
        %671 = vmatpush1.msra.mxu0 %v652
        %672 = vmatprep.subr.mxu0 0.0
        %673 = vmatpush1.msra.mxu0 %v653
        %674 = vmatprep.subr.mxu0 0.0
        %675 = vmatpush1.msra.mxu0 %v654
        %676 = vmatprep.subr.mxu0 0.0
        %677 = vmatpush1.msra.mxu0 %v655
        %678 = vmatprep.subr.mxu0 0.0
        %679 = vmatpush1.msra.mxu0 0.0
        %680 = vmatprep.subr.mxu0 0.0
        %681 = vmatpush1.msra.mxu0 0.0
        %682 = vmatprep.subr.mxu0 0.0
        %683 = vmatpush1.msra.mxu0 0.0
        %684 = vmatprep.subr.mxu0 0.0
        %685 = vmatpush1.msra.mxu0 0.0
        %686 = vmatprep.subr.mxu0 0.0
        %687 = vmatpush1.msra.mxu0 0.0
        %688 = vmatprep.subr.mxu0 0.0
        %689 = vmatpush1.msra.mxu0 0.0
        %690 = vmatprep.subr.mxu0 0.0
        %691 = vmatpush1.msra.mxu0 0.0
        %692 = vmatprep.subr.mxu0 0.0
        %693 = vmatpush1.msra.mxu0 0.0
        %694 = vmatprep.subr.mxu0 0.0
        %695 = vmatpush1.msra.mxu0 0.0
        %696 = vmatprep.subr.mxu0 0.0
        %697 = vmatpush1.msra.mxu0 0.0
        %698 = vmatprep.subr.mxu0 0.0
        %699 = vmatpush1.msra.mxu0 0.0
        %700 = vmatprep.subr.mxu0 0.0
        %701 = vmatpush1.msra.mxu0 0.0
        %702 = vmatprep.subr.mxu0 0.0
        %703 = vmatpush1.msra.mxu0 0.0
        %704 = vmatprep.subr.mxu0 0.0
        %705 = vmatpush1.msra.mxu0 0.0
        %706 = vmatprep.subr.mxu0 0.0
        %707 = vmatpush1.msra.mxu0 0.0
        %708 = vmatprep.subr.mxu0 0.0
        %709 = vmatpush1.msra.mxu0 0.0
        %710 = vmatprep.subr.mxu0 0.0
        %711 = vmatpush1.msra.mxu0 0.0
        %712 = vmatprep.subr.mxu0 0.0
        %713 = vmatpush1.msra.mxu0 0.0
        %714 = vmatprep.subr.mxu0 0.0
        %715 = vmatpush1.msra.mxu0 0.0
        %716 = vmatprep.subr.mxu0 0.0
        %717 = vmatpush1.msra.mxu0 0.0
        %718 = vmatprep.subr.mxu0 0.0
        %719 = vmatpush1.msra.mxu0 0.0
        %720 = vmatprep.subr.mxu0 0.0
        %721 = vmatpush1.msra.mxu0 0.0
        %722 = vmatprep.subr.mxu0 0.0
        %723 = vmatpush1.msra.mxu0 0.0
        %724 = vmatprep.subr.mxu0 0.0
        %725 = vmatpush1.msra.mxu0 0.0
        %726 = vmatprep.subr.mxu0 0.0
        %727 = vmatpush1.msra.mxu0 0.0
        %728 = vmatprep.subr.mxu0 0.0
        %729 = vmatpush1.msra.mxu0 0.0
        %730 = vmatprep.subr.mxu0 0.0
        %731 = vmatpush1.msra.mxu0 0.0
        %732 = vmatprep.subr.mxu0 0.0
        %733 = vmatpush1.msra.mxu0 0.0
        %734 = vmatprep.mubr.f32.mxu0 0.0
        %735 = vmatmul.mubr.f32.gmra.mrb[0].mxu0 %v665
        %v736 = vpop.f32.mrb[0].mxu0
        %v737 = vadd.f32 %v661, %v736
        %v738 = vpop.f32.mrb[0].mxu0
        %739 = vmatprep.mubr.f32.mxu0 0.0
        %740 = vmatmul.mubr.f32.gmra.mrb[0].mxu0 %v668
        %v741 = vpop.f32.mrb[0].mxu0
        %v742 = vadd.f32 %v661, %v741
        %v743 = vpop.f32.mrb[0].mxu0
        %744 = vdwg.mxu0
        %v745 = vlaneseq
        %v746 = vshrl.u32 %v745, 7
        %v747 = vlaneseq
        %v748 = vand.u32 %v747, 127
        %vm749 = vcmp.le.s32.totalorder %v748, %v746
        %v750 = vsel %vm749, 0.0, -1e+09
        %v751 = vld [vmem:[%s1] sm:$0x1]
        %v752 = vlaneseq
        %v753 = vshrl.u32 %v752, 7
        %v754 = vsub.s32 0, %v753
        %v755 = vrot.slane %v751, %v754
        %v756 = vadd.f32 %v750, %v755
        %758 = vrot.lane.b32.xlu0 %v737, 96
        %v759 = vpop.permute.xlu0 %758
        %vm760 = vcmask 64512
        %v761 = vsel %vm760, %v737, 0
        %v763 = vsel %vm760, %v759, 0
        %765 = vmatprep.subr.mxu0 0.0
        %766 = vmatpush1.xpose.msra.mxu0 %v763
        %767 = vmatprep.subr.mxu0 0.0
        %768 = vmatpush1.xpose.msra.mxu0 0.0
        %769 = vmatprep.subr.mxu0 0.0
        %770 = vmatpush1.xpose.msra.mxu0 0.0
        %771 = vmatprep.subr.mxu0 0.0
        %772 = vmatpush1.xpose.msra.mxu0 0.0
        %773 = vmatprep.subr.mxu0 0.0
        %774 = vmatpush1.xpose.msra.mxu0 0.0
        %775 = vmatprep.subr.mxu0 0.0
        %776 = vmatpush1.xpose.msra.mxu0 0.0
        %777 = vmatprep.subr.mxu0 0.0
        %778 = vmatpush1.xpose.msra.mxu0 0.0
        %779 = vmatprep.subr.mxu0 0.0
        %780 = vmatpush1.xpose.msra.mxu0 0.0
        %781 = vmatprep.subr.mxu0 0.0
        %782 = vmatpush1.xpose.msra.mxu0 0.0
        %783 = vmatprep.subr.mxu0 0.0
        %784 = vmatpush1.xpose.msra.mxu0 0.0
        %785 = vmatprep.subr.mxu0 0.0
        %786 = vmatpush1.xpose.msra.mxu0 0.0
        %787 = vmatprep.subr.mxu0 0.0
        %788 = vmatpush1.xpose.msra.mxu0 0.0
        %789 = vmatprep.subr.mxu0 0.0
        %790 = vmatpush1.xpose.msra.mxu0 0.0
        %791 = vmatprep.subr.mxu0 0.0
        %792 = vmatpush1.xpose.msra.mxu0 0.0
        %793 = vmatprep.subr.mxu0 0.0
        %794 = vmatpush1.xpose.msra.mxu0 0.0
        %795 = vmatprep.subr.mxu0 0.0
        %796 = vmatpush1.xpose.msra.mxu0 0.0
        %797 = vmatprep.subr.mxu0 0.0
        %798 = vmatpush1.xpose.msra.mxu0 0.0
        %799 = vmatprep.subr.mxu0 0.0
        %800 = vmatpush1.xpose.msra.mxu0 0.0
        %801 = vmatprep.subr.mxu0 0.0
        %802 = vmatpush1.xpose.msra.mxu0 0.0
        %803 = vmatprep.subr.mxu0 0.0
        %804 = vmatpush1.xpose.msra.mxu0 0.0
        %805 = vmatprep.subr.mxu0 0.0
        %806 = vmatpush1.xpose.msra.mxu0 0.0
        %807 = vmatprep.subr.mxu0 0.0
        %808 = vmatpush1.xpose.msra.mxu0 0.0
        %809 = vmatprep.subr.mxu0 0.0
        %810 = vmatpush1.xpose.msra.mxu0 0.0
        %811 = vmatprep.subr.mxu0 0.0
        %812 = vmatpush1.xpose.msra.mxu0 0.0
        %813 = vmatprep.subr.mxu0 0.0
        %814 = vmatpush1.xpose.msra.mxu0 0.0
        %815 = vmatprep.subr.mxu0 0.0
        %816 = vmatpush1.xpose.msra.mxu0 0.0
        %817 = vmatprep.subr.mxu0 0.0
        %818 = vmatpush1.xpose.msra.mxu0 0.0
        %819 = vmatprep.subr.mxu0 0.0
        %820 = vmatpush1.xpose.msra.mxu0 0.0
        %821 = vmatprep.subr.mxu0 0.0
        %822 = vmatpush1.xpose.msra.mxu0 0.0
        %823 = vmatprep.subr.mxu0 0.0
        %824 = vmatpush1.xpose.msra.mxu0 0.0
        %825 = vmatprep.subr.mxu0 0.0
        %826 = vmatpush1.xpose.msra.mxu0 0.0
        %827 = vmatprep.subr.mxu0 0.0
        %828 = vmatpush1.xpose.msra.mxu0 0.0
        %829 = vmatprep.mubr.f32.mxu0 0.0
        %830 = vmatmul.mubr.f32.gmra.mrb[0].mxu0 %v761
        %v831 = vpop.f32.mrb[0].mxu0
        %v832 = vadd.f32 0.0, %v831
        %v833 = vpop.f32.mrb[0].mxu0
        %834 = vdwg.mxu0
        %v835 = vmul.f32 %v832, 0.35355338
        %v836 = vadd.f32 %v835, %v756
        %v837 = vsel %vm760, %v836, -inf
        %838 = vmax.xlane.f32.xlu0 %v837
        %v839 = vpop.xlane.xlu0 %838
        %v840 = vsub.f32 %v836, %v839
        %v841 = vmul.f32 %v840, 1.442695
        %v842 = vpow.pop %v841
        %v843 = vsel %vm760, %v842, 0.0
        %844 = vadd.xlane.f32.xlu0 %v843
        %v845 = vpop.xlane.xlu0 %844
        %846 = vrot.lane.b32.xlu0 %v737, 64
        %v847 = vpop.permute.xlu0 %846
        %v850 = vsel %vm760, %v842, 0
        %852 = vmatprep.subr.mxu0 0.0
        %853 = vmatpush1.msra.mxu0 %v847
        %854 = vmatprep.subr.mxu0 0.0
        %855 = vmatpush1.msra.mxu0 0.0
        %856 = vmatprep.subr.mxu0 0.0
        %857 = vmatpush1.msra.mxu0 0.0
        %858 = vmatprep.subr.mxu0 0.0
        %859 = vmatpush1.msra.mxu0 0.0
        %860 = vmatprep.subr.mxu0 0.0
        %861 = vmatpush1.msra.mxu0 0.0
        %862 = vmatprep.subr.mxu0 0.0
        %863 = vmatpush1.msra.mxu0 0.0
        %864 = vmatprep.subr.mxu0 0.0
        %865 = vmatpush1.msra.mxu0 0.0
        %866 = vmatprep.subr.mxu0 0.0
        %867 = vmatpush1.msra.mxu0 0.0
        %868 = vmatprep.subr.mxu0 0.0
        %869 = vmatpush1.msra.mxu0 0.0
        %870 = vmatprep.subr.mxu0 0.0
        %871 = vmatpush1.msra.mxu0 0.0
        %872 = vmatprep.subr.mxu0 0.0
        %873 = vmatpush1.msra.mxu0 0.0
        %874 = vmatprep.subr.mxu0 0.0
        %875 = vmatpush1.msra.mxu0 0.0
        %876 = vmatprep.subr.mxu0 0.0
        %877 = vmatpush1.msra.mxu0 0.0
        %878 = vmatprep.subr.mxu0 0.0
        %879 = vmatpush1.msra.mxu0 0.0
        %880 = vmatprep.subr.mxu0 0.0
        %881 = vmatpush1.msra.mxu0 0.0
        %882 = vmatprep.subr.mxu0 0.0
        %883 = vmatpush1.msra.mxu0 0.0
        %884 = vmatprep.subr.mxu0 0.0
        %885 = vmatpush1.msra.mxu0 0.0
        %886 = vmatprep.subr.mxu0 0.0
        %887 = vmatpush1.msra.mxu0 0.0
        %888 = vmatprep.subr.mxu0 0.0
        %889 = vmatpush1.msra.mxu0 0.0
        %890 = vmatprep.subr.mxu0 0.0
        %891 = vmatpush1.msra.mxu0 0.0
        %892 = vmatprep.subr.mxu0 0.0
        %893 = vmatpush1.msra.mxu0 0.0
        %894 = vmatprep.subr.mxu0 0.0
        %895 = vmatpush1.msra.mxu0 0.0
        %896 = vmatprep.subr.mxu0 0.0
        %897 = vmatpush1.msra.mxu0 0.0
        %898 = vmatprep.subr.mxu0 0.0
        %899 = vmatpush1.msra.mxu0 0.0
        %900 = vmatprep.subr.mxu0 0.0
        %901 = vmatpush1.msra.mxu0 0.0
        %902 = vmatprep.subr.mxu0 0.0
        %903 = vmatpush1.msra.mxu0 0.0
        %904 = vmatprep.subr.mxu0 0.0
        %905 = vmatpush1.msra.mxu0 0.0
        %906 = vmatprep.subr.mxu0 0.0
        %907 = vmatpush1.msra.mxu0 0.0
        %908 = vmatprep.subr.mxu0 0.0
        %909 = vmatpush1.msra.mxu0 0.0
        %910 = vmatprep.subr.mxu0 0.0
        %911 = vmatpush1.msra.mxu0 0.0
        %912 = vmatprep.subr.mxu0 0.0
        %913 = vmatpush1.msra.mxu0 0.0
        %914 = vmatprep.subr.mxu0 0.0
        %915 = vmatpush1.msra.mxu0 0.0
        %916 = vmatprep.mubr.f32.mxu0 0.0
        %917 = vmatmul.mubr.f32.gmra.mrb[0].mxu0 %v850
        %v918 = vpop.f32.mrb[0].mxu0
        %v919 = vadd.f32 0.0, %v918
        %v920 = vpop.f32.mrb[0].mxu0
        %921 = vdwg.mxu0
        %v922 = vrcp.pop %v845
        %v923 = vmul.f32 %v919, %v922
        %924 = vst.msk [vmem:[#allocation3] sm:$0xff] %vm760, %v923
        %925 = vrot.lane.b32.xlu0 %v737, 120
        %v926 = vpop.permute.xlu0 %925
        %927 = vrot.lane.b32.xlu0 %v737, 88
        %v928 = vpop.permute.xlu0 %927
        %v929 = vsel %vm760, %v926, 0
        %v931 = vsel %vm760, %v928, 0
        %933 = vmatprep.subr.mxu0 0.0
        %934 = vmatpush1.xpose.msra.mxu0 %v931
        %935 = vmatprep.subr.mxu0 0.0
        %936 = vmatpush1.xpose.msra.mxu0 0.0
        %937 = vmatprep.subr.mxu0 0.0
        %938 = vmatpush1.xpose.msra.mxu0 0.0
        %939 = vmatprep.subr.mxu0 0.0
        %940 = vmatpush1.xpose.msra.mxu0 0.0
        %941 = vmatprep.subr.mxu0 0.0
        %942 = vmatpush1.xpose.msra.mxu0 0.0
        %943 = vmatprep.subr.mxu0 0.0
        %944 = vmatpush1.xpose.msra.mxu0 0.0
        %945 = vmatprep.subr.mxu0 0.0
        %946 = vmatpush1.xpose.msra.mxu0 0.0
        %947 = vmatprep.subr.mxu0 0.0
        %948 = vmatpush1.xpose.msra.mxu0 0.0
        %949 = vmatprep.subr.mxu0 0.0
        %950 = vmatpush1.xpose.msra.mxu0 0.0
        %951 = vmatprep.subr.mxu0 0.0
        %952 = vmatpush1.xpose.msra.mxu0 0.0
        %953 = vmatprep.subr.mxu0 0.0
        %954 = vmatpush1.xpose.msra.mxu0 0.0
        %955 = vmatprep.subr.mxu0 0.0
        %956 = vmatpush1.xpose.msra.mxu0 0.0
        %957 = vmatprep.subr.mxu0 0.0
        %958 = vmatpush1.xpose.msra.mxu0 0.0
        %959 = vmatprep.subr.mxu0 0.0
        %960 = vmatpush1.xpose.msra.mxu0 0.0
        %961 = vmatprep.subr.mxu0 0.0
        %962 = vmatpush1.xpose.msra.mxu0 0.0
        %963 = vmatprep.subr.mxu0 0.0
        %964 = vmatpush1.xpose.msra.mxu0 0.0
        %965 = vmatprep.subr.mxu0 0.0
        %966 = vmatpush1.xpose.msra.mxu0 0.0
        %967 = vmatprep.subr.mxu0 0.0
        %968 = vmatpush1.xpose.msra.mxu0 0.0
        %969 = vmatprep.subr.mxu0 0.0
        %970 = vmatpush1.xpose.msra.mxu0 0.0
        %971 = vmatprep.subr.mxu0 0.0
        %972 = vmatpush1.xpose.msra.mxu0 0.0
        %973 = vmatprep.subr.mxu0 0.0
        %974 = vmatpush1.xpose.msra.mxu0 0.0
        %975 = vmatprep.subr.mxu0 0.0
        %976 = vmatpush1.xpose.msra.mxu0 0.0
        %977 = vmatprep.subr.mxu0 0.0
        %978 = vmatpush1.xpose.msra.mxu0 0.0
        %979 = vmatprep.subr.mxu0 0.0
        %980 = vmatpush1.xpose.msra.mxu0 0.0
        %981 = vmatprep.subr.mxu0 0.0
        %982 = vmatpush1.xpose.msra.mxu0 0.0
        %983 = vmatprep.subr.mxu0 0.0
        %984 = vmatpush1.xpose.msra.mxu0 0.0
        %985 = vmatprep.subr.mxu0 0.0
        %986 = vmatpush1.xpose.msra.mxu0 0.0
        %987 = vmatprep.subr.mxu0 0.0
        %988 = vmatpush1.xpose.msra.mxu0 0.0
        %989 = vmatprep.subr.mxu0 0.0
        %990 = vmatpush1.xpose.msra.mxu0 0.0
        %991 = vmatprep.subr.mxu0 0.0
        %992 = vmatpush1.xpose.msra.mxu0 0.0
        %993 = vmatprep.subr.mxu0 0.0
        %994 = vmatpush1.xpose.msra.mxu0 0.0
        %995 = vmatprep.subr.mxu0 0.0
        %996 = vmatpush1.xpose.msra.mxu0 0.0
        %997 = vmatprep.mubr.f32.mxu0 0.0
        %998 = vmatmul.mubr.f32.gmra.mrb[0].mxu0 %v929
        %v999 = vpop.f32.mrb[0].mxu0
        %v1000 = vadd.f32 0.0, %v999
        %v1001 = vpop.f32.mrb[0].mxu0
        %1002 = vdwg.mxu0
        %v1003 = vmul.f32 %v1000, 0.35355338
        %v1004 = vadd.f32 %v1003, %v756
        %v1005 = vsel %vm760, %v1004, -inf
        %1006 = vmax.xlane.f32.xlu0 %v1005
        %v1007 = vpop.xlane.xlu0 %1006
        %v1008 = vsub.f32 %v1004, %v1007
        %v1009 = vmul.f32 %v1008, 1.442695
        %v1010 = vpow.pop %v1009
        %v1011 = vsel %vm760, %v1010, 0.0
        %1012 = vadd.xlane.f32.xlu0 %v1011
        %v1013 = vpop.xlane.xlu0 %1012
        %1014 = vrot.lane.b32.xlu0 %v737, 56
        %v1015 = vpop.permute.xlu0 %1014
        %v1018 = vsel %vm760, %v1010, 0
        %1020 = vmatprep.subr.mxu0 0.0
        %1021 = vmatpush1.msra.mxu0 %v1015
        %1022 = vmatprep.subr.mxu0 0.0
        %1023 = vmatpush1.msra.mxu0 0.0
        %1024 = vmatprep.subr.mxu0 0.0
        %1025 = vmatpush1.msra.mxu0 0.0
        %1026 = vmatprep.subr.mxu0 0.0
        %1027 = vmatpush1.msra.mxu0 0.0
        %1028 = vmatprep.subr.mxu0 0.0
        %1029 = vmatpush1.msra.mxu0 0.0
        %1030 = vmatprep.subr.mxu0 0.0
        %1031 = vmatpush1.msra.mxu0 0.0
        %1032 = vmatprep.subr.mxu0 0.0
        %1033 = vmatpush1.msra.mxu0 0.0
        %1034 = vmatprep.subr.mxu0 0.0
        %1035 = vmatpush1.msra.mxu0 0.0
        %1036 = vmatprep.subr.mxu0 0.0
        %1037 = vmatpush1.msra.mxu0 0.0
        %1038 = vmatprep.subr.mxu0 0.0
        %1039 = vmatpush1.msra.mxu0 0.0
        %1040 = vmatprep.subr.mxu0 0.0
        %1041 = vmatpush1.msra.mxu0 0.0
        %1042 = vmatprep.subr.mxu0 0.0
        %1043 = vmatpush1.msra.mxu0 0.0
        %1044 = vmatprep.subr.mxu0 0.0
        %1045 = vmatpush1.msra.mxu0 0.0
        %1046 = vmatprep.subr.mxu0 0.0
        %1047 = vmatpush1.msra.mxu0 0.0
        %1048 = vmatprep.subr.mxu0 0.0
        %1049 = vmatpush1.msra.mxu0 0.0
        %1050 = vmatprep.subr.mxu0 0.0
        %1051 = vmatpush1.msra.mxu0 0.0
        %1052 = vmatprep.subr.mxu0 0.0
        %1053 = vmatpush1.msra.mxu0 0.0
        %1054 = vmatprep.subr.mxu0 0.0
        %1055 = vmatpush1.msra.mxu0 0.0
        %1056 = vmatprep.subr.mxu0 0.0
        %1057 = vmatpush1.msra.mxu0 0.0
        %1058 = vmatprep.subr.mxu0 0.0
        %1059 = vmatpush1.msra.mxu0 0.0
        %1060 = vmatprep.subr.mxu0 0.0
        %1061 = vmatpush1.msra.mxu0 0.0
        %1062 = vmatprep.subr.mxu0 0.0
        %1063 = vmatpush1.msra.mxu0 0.0
        %1064 = vmatprep.subr.mxu0 0.0
        %1065 = vmatpush1.msra.mxu0 0.0
        %1066 = vmatprep.subr.mxu0 0.0
        %1067 = vmatpush1.msra.mxu0 0.0
        %1068 = vmatprep.subr.mxu0 0.0
        %1069 = vmatpush1.msra.mxu0 0.0
        %1070 = vmatprep.subr.mxu0 0.0
        %1071 = vmatpush1.msra.mxu0 0.0
        %1072 = vmatprep.subr.mxu0 0.0
        %1073 = vmatpush1.msra.mxu0 0.0
        %1074 = vmatprep.subr.mxu0 0.0
        %1075 = vmatpush1.msra.mxu0 0.0
        %1076 = vmatprep.subr.mxu0 0.0
        %1077 = vmatpush1.msra.mxu0 0.0
        %1078 = vmatprep.subr.mxu0 0.0
        %1079 = vmatpush1.msra.mxu0 0.0
        %1080 = vmatprep.subr.mxu0 0.0
        %1081 = vmatpush1.msra.mxu0 0.0
        %1082 = vmatprep.subr.mxu0 0.0
        %1083 = vmatpush1.msra.mxu0 0.0
        %1084 = vmatprep.mubr.f32.mxu0 0.0
        %1085 = vmatmul.mubr.f32.gmra.mrb[0].mxu0 %v1018
        %v1086 = vpop.f32.mrb[0].mxu0
        %v1087 = vadd.f32 0.0, %v1086
        %v1088 = vpop.f32.mrb[0].mxu0
        %1089 = vdwg.mxu0
        %v1090 = vrcp.pop %v1013
        %v1091 = vmul.f32 %v1087, %v1090
        %1093 = vrot.lane.b32.xlu0 %v1091, 8
        %v1094 = vpop.permute.xlu0 %1093
        %vm1096 = vcmask 130112
        %1097 = vst.msk [vmem:[#allocation3] sm:$0xff] %vm1096, %v1094
        %1098 = vrot.lane.b32.xlu0 %v737, 112
        %v1099 = vpop.permute.xlu0 %1098
        %1100 = vrot.lane.b32.xlu0 %v737, 80
        %v1101 = vpop.permute.xlu0 %1100
        %v1102 = vsel %vm760, %v1099, 0
        %v1104 = vsel %vm760, %v1101, 0
        %1106 = vmatprep.subr.mxu0 0.0
        %1107 = vmatpush1.xpose.msra.mxu0 %v1104
        %1108 = vmatprep.subr.mxu0 0.0
        %1109 = vmatpush1.xpose.msra.mxu0 0.0
        %1110 = vmatprep.subr.mxu0 0.0
        %1111 = vmatpush1.xpose.msra.mxu0 0.0
        %1112 = vmatprep.subr.mxu0 0.0
        %1113 = vmatpush1.xpose.msra.mxu0 0.0
        %1114 = vmatprep.subr.mxu0 0.0
        %1115 = vmatpush1.xpose.msra.mxu0 0.0
        %1116 = vmatprep.subr.mxu0 0.0
        %1117 = vmatpush1.xpose.msra.mxu0 0.0
        %1118 = vmatprep.subr.mxu0 0.0
        %1119 = vmatpush1.xpose.msra.mxu0 0.0
        %1120 = vmatprep.subr.mxu0 0.0
        %1121 = vmatpush1.xpose.msra.mxu0 0.0
        %1122 = vmatprep.subr.mxu0 0.0
        %1123 = vmatpush1.xpose.msra.mxu0 0.0
        %1124 = vmatprep.subr.mxu0 0.0
        %1125 = vmatpush1.xpose.msra.mxu0 0.0
        %1126 = vmatprep.subr.mxu0 0.0
        %1127 = vmatpush1.xpose.msra.mxu0 0.0
        %1128 = vmatprep.subr.mxu0 0.0
        %1129 = vmatpush1.xpose.msra.mxu0 0.0
        %1130 = vmatprep.subr.mxu0 0.0
        %1131 = vmatpush1.xpose.msra.mxu0 0.0
        %1132 = vmatprep.subr.mxu0 0.0
        %1133 = vmatpush1.xpose.msra.mxu0 0.0
        %1134 = vmatprep.subr.mxu0 0.0
        %1135 = vmatpush1.xpose.msra.mxu0 0.0
        %1136 = vmatprep.subr.mxu0 0.0
        %1137 = vmatpush1.xpose.msra.mxu0 0.0
        %1138 = vmatprep.subr.mxu0 0.0
        %1139 = vmatpush1.xpose.msra.mxu0 0.0
        %1140 = vmatprep.subr.mxu0 0.0
        %1141 = vmatpush1.xpose.msra.mxu0 0.0
        %1142 = vmatprep.subr.mxu0 0.0
        %1143 = vmatpush1.xpose.msra.mxu0 0.0
        %1144 = vmatprep.subr.mxu0 0.0
        %1145 = vmatpush1.xpose.msra.mxu0 0.0
        %1146 = vmatprep.subr.mxu0 0.0
        %1147 = vmatpush1.xpose.msra.mxu0 0.0
        %1148 = vmatprep.subr.mxu0 0.0
        %1149 = vmatpush1.xpose.msra.mxu0 0.0
        %1150 = vmatprep.subr.mxu0 0.0
        %1151 = vmatpush1.xpose.msra.mxu0 0.0
        %1152 = vmatprep.subr.mxu0 0.0
        %1153 = vmatpush1.xpose.msra.mxu0 0.0
        %1154 = vmatprep.subr.mxu0 0.0
        %1155 = vmatpush1.xpose.msra.mxu0 0.0
        %1156 = vmatprep.subr.mxu0 0.0
        %1157 = vmatpush1.xpose.msra.mxu0 0.0
        %1158 = vmatprep.subr.mxu0 0.0
        %1159 = vmatpush1.xpose.msra.mxu0 0.0
        %1160 = vmatprep.subr.mxu0 0.0
        %1161 = vmatpush1.xpose.msra.mxu0 0.0
        %1162 = vmatprep.subr.mxu0 0.0
        %1163 = vmatpush1.xpose.msra.mxu0 0.0
        %1164 = vmatprep.subr.mxu0 0.0
        %1165 = vmatpush1.xpose.msra.mxu0 0.0
        %1166 = vmatprep.subr.mxu0 0.0
        %1167 = vmatpush1.xpose.msra.mxu0 0.0
        %1168 = vmatprep.subr.mxu0 0.0
        %1169 = vmatpush1.xpose.msra.mxu0 0.0
        %1170 = vmatprep.mubr.f32.mxu0 0.0
        %1171 = vmatmul.mubr.f32.gmra.mrb[0].mxu0 %v1102
        %v1172 = vpop.f32.mrb[0].mxu0
        %v1173 = vadd.f32 0.0, %v1172
        %v1174 = vpop.f32.mrb[0].mxu0
        %1175 = vdwg.mxu0
        %v1176 = vmul.f32 %v1173, 0.35355338
        %v1177 = vadd.f32 %v1176, %v756
        %v1178 = vsel %vm760, %v1177, -inf
        %1179 = vmax.xlane.f32.xlu0 %v1178
        %v1180 = vpop.xlane.xlu0 %1179
        %v1181 = vsub.f32 %v1177, %v1180
        %v1182 = vmul.f32 %v1181, 1.442695
        %v1183 = vpow.pop %v1182
        %v1184 = vsel %vm760, %v1183, 0.0
        %1185 = vadd.xlane.f32.xlu0 %v1184
        %v1186 = vpop.xlane.xlu0 %1185
        %1187 = vrot.lane.b32.xlu0 %v737, 48
        %v1188 = vpop.permute.xlu0 %1187
        %v1191 = vsel %vm760, %v1183, 0
        %1193 = vmatprep.subr.mxu0 0.0
        %1194 = vmatpush1.msra.mxu0 %v1188
        %1195 = vmatprep.subr.mxu0 0.0
        %1196 = vmatpush1.msra.mxu0 0.0
        %1197 = vmatprep.subr.mxu0 0.0
        %1198 = vmatpush1.msra.mxu0 0.0
        %1199 = vmatprep.subr.mxu0 0.0
        %1200 = vmatpush1.msra.mxu0 0.0
        %1201 = vmatprep.subr.mxu0 0.0
        %1202 = vmatpush1.msra.mxu0 0.0
        %1203 = vmatprep.subr.mxu0 0.0
        %1204 = vmatpush1.msra.mxu0 0.0
        %1205 = vmatprep.subr.mxu0 0.0
        %1206 = vmatpush1.msra.mxu0 0.0
        %1207 = vmatprep.subr.mxu0 0.0
        %1208 = vmatpush1.msra.mxu0 0.0
        %1209 = vmatprep.subr.mxu0 0.0
        %1210 = vmatpush1.msra.mxu0 0.0
        %1211 = vmatprep.subr.mxu0 0.0
        %1212 = vmatpush1.msra.mxu0 0.0
        %1213 = vmatprep.subr.mxu0 0.0
        %1214 = vmatpush1.msra.mxu0 0.0
        %1215 = vmatprep.subr.mxu0 0.0
        %1216 = vmatpush1.msra.mxu0 0.0
        %1217 = vmatprep.subr.mxu0 0.0
        %1218 = vmatpush1.msra.mxu0 0.0
        %1219 = vmatprep.subr.mxu0 0.0
        %1220 = vmatpush1.msra.mxu0 0.0
        %1221 = vmatprep.subr.mxu0 0.0
        %1222 = vmatpush1.msra.mxu0 0.0
        %1223 = vmatprep.subr.mxu0 0.0
        %1224 = vmatpush1.msra.mxu0 0.0
        %1225 = vmatprep.subr.mxu0 0.0
        %1226 = vmatpush1.msra.mxu0 0.0
        %1227 = vmatprep.subr.mxu0 0.0
        %1228 = vmatpush1.msra.mxu0 0.0
        %1229 = vmatprep.subr.mxu0 0.0
        %1230 = vmatpush1.msra.mxu0 0.0
        %1231 = vmatprep.subr.mxu0 0.0
        %1232 = vmatpush1.msra.mxu0 0.0
        %1233 = vmatprep.subr.mxu0 0.0
        %1234 = vmatpush1.msra.mxu0 0.0
        %1235 = vmatprep.subr.mxu0 0.0
        %1236 = vmatpush1.msra.mxu0 0.0
        %1237 = vmatprep.subr.mxu0 0.0
        %1238 = vmatpush1.msra.mxu0 0.0
        %1239 = vmatprep.subr.mxu0 0.0
        %1240 = vmatpush1.msra.mxu0 0.0
        %1241 = vmatprep.subr.mxu0 0.0
        %1242 = vmatpush1.msra.mxu0 0.0
        %1243 = vmatprep.subr.mxu0 0.0
        %1244 = vmatpush1.msra.mxu0 0.0
        %1245 = vmatprep.subr.mxu0 0.0
        %1246 = vmatpush1.msra.mxu0 0.0
        %1247 = vmatprep.subr.mxu0 0.0
        %1248 = vmatpush1.msra.mxu0 0.0
        %1249 = vmatprep.subr.mxu0 0.0
        %1250 = vmatpush1.msra.mxu0 0.0
        %1251 = vmatprep.subr.mxu0 0.0
        %1252 = vmatpush1.msra.mxu0 0.0
        %1253 = vmatprep.subr.mxu0 0.0
        %1254 = vmatpush1.msra.mxu0 0.0
        %1255 = vmatprep.subr.mxu0 0.0
        %1256 = vmatpush1.msra.mxu0 0.0
        %1257 = vmatprep.mubr.f32.mxu0 0.0
        %1258 = vmatmul.mubr.f32.gmra.mrb[0].mxu0 %v1191
        %v1259 = vpop.f32.mrb[0].mxu0
        %v1260 = vadd.f32 0.0, %v1259
        %v1261 = vpop.f32.mrb[0].mxu0
        %1262 = vdwg.mxu0
        %v1263 = vrcp.pop %v1186
        %v1264 = vmul.f32 %v1260, %v1263
        %1266 = vrot.lane.b32.xlu0 %v1264, 16
        %v1267 = vpop.permute.xlu0 %1266
        %vm1269 = vcmask 195712
        %1270 = vst.msk [vmem:[#allocation3] sm:$0xff] %vm1269, %v1267
        %1271 = vrot.lane.b32.xlu0 %v737, 104
        %v1272 = vpop.permute.xlu0 %1271
        %1273 = vrot.lane.b32.xlu0 %v737, 72
        %v1274 = vpop.permute.xlu0 %1273
        %v1275 = vsel %vm760, %v1272, 0
        %v1277 = vsel %vm760, %v1274, 0
        %1279 = vmatprep.subr.mxu0 0.0
        %1280 = vmatpush1.xpose.msra.mxu0 %v1277
        %1281 = vmatprep.subr.mxu0 0.0
        %1282 = vmatpush1.xpose.msra.mxu0 0.0
        %1283 = vmatprep.subr.mxu0 0.0
        %1284 = vmatpush1.xpose.msra.mxu0 0.0
        %1285 = vmatprep.subr.mxu0 0.0
        %1286 = vmatpush1.xpose.msra.mxu0 0.0
        %1287 = vmatprep.subr.mxu0 0.0
        %1288 = vmatpush1.xpose.msra.mxu0 0.0
        %1289 = vmatprep.subr.mxu0 0.0
        %1290 = vmatpush1.xpose.msra.mxu0 0.0
        %1291 = vmatprep.subr.mxu0 0.0
        %1292 = vmatpush1.xpose.msra.mxu0 0.0
        %1293 = vmatprep.subr.mxu0 0.0
        %1294 = vmatpush1.xpose.msra.mxu0 0.0
        %1295 = vmatprep.subr.mxu0 0.0
        %1296 = vmatpush1.xpose.msra.mxu0 0.0
        %1297 = vmatprep.subr.mxu0 0.0
        %1298 = vmatpush1.xpose.msra.mxu0 0.0
        %1299 = vmatprep.subr.mxu0 0.0
        %1300 = vmatpush1.xpose.msra.mxu0 0.0
        %1301 = vmatprep.subr.mxu0 0.0
        %1302 = vmatpush1.xpose.msra.mxu0 0.0
        %1303 = vmatprep.subr.mxu0 0.0
        %1304 = vmatpush1.xpose.msra.mxu0 0.0
        %1305 = vmatprep.subr.mxu0 0.0
        %1306 = vmatpush1.xpose.msra.mxu0 0.0
        %1307 = vmatprep.subr.mxu0 0.0
        %1308 = vmatpush1.xpose.msra.mxu0 0.0
        %1309 = vmatprep.subr.mxu0 0.0
        %1310 = vmatpush1.xpose.msra.mxu0 0.0
        %1311 = vmatprep.subr.mxu0 0.0
        %1312 = vmatpush1.xpose.msra.mxu0 0.0
        %1313 = vmatprep.subr.mxu0 0.0
        %1314 = vmatpush1.xpose.msra.mxu0 0.0
        %1315 = vmatprep.subr.mxu0 0.0
        %1316 = vmatpush1.xpose.msra.mxu0 0.0
        %1317 = vmatprep.subr.mxu0 0.0
        %1318 = vmatpush1.xpose.msra.mxu0 0.0
        %1319 = vmatprep.subr.mxu0 0.0
        %1320 = vmatpush1.xpose.msra.mxu0 0.0
        %1321 = vmatprep.subr.mxu0 0.0
        %1322 = vmatpush1.xpose.msra.mxu0 0.0
        %1323 = vmatprep.subr.mxu0 0.0
        %1324 = vmatpush1.xpose.msra.mxu0 0.0
        %1325 = vmatprep.subr.mxu0 0.0
        %1326 = vmatpush1.xpose.msra.mxu0 0.0
        %1327 = vmatprep.subr.mxu0 0.0
        %1328 = vmatpush1.xpose.msra.mxu0 0.0
        %1329 = vmatprep.subr.mxu0 0.0
        %1330 = vmatpush1.xpose.msra.mxu0 0.0
        %1331 = vmatprep.subr.mxu0 0.0
        %1332 = vmatpush1.xpose.msra.mxu0 0.0
        %1333 = vmatprep.subr.mxu0 0.0
        %1334 = vmatpush1.xpose.msra.mxu0 0.0
        %1335 = vmatprep.subr.mxu0 0.0
        %1336 = vmatpush1.xpose.msra.mxu0 0.0
        %1337 = vmatprep.subr.mxu0 0.0
        %1338 = vmatpush1.xpose.msra.mxu0 0.0
        %1339 = vmatprep.subr.mxu0 0.0
        %1340 = vmatpush1.xpose.msra.mxu0 0.0
        %1341 = vmatprep.subr.mxu0 0.0
        %1342 = vmatpush1.xpose.msra.mxu0 0.0
        %1343 = vmatprep.mubr.f32.mxu0 0.0
        %1344 = vmatmul.mubr.f32.gmra.mrb[0].mxu0 %v1275
        %v1345 = vpop.f32.mrb[0].mxu0
        %v1346 = vadd.f32 0.0, %v1345
        %v1347 = vpop.f32.mrb[0].mxu0
        %1348 = vdwg.mxu0
        %v1349 = vmul.f32 %v1346, 0.35355338
        %v1350 = vadd.f32 %v1349, %v756
        %v1351 = vsel %vm760, %v1350, -inf
        %1352 = vmax.xlane.f32.xlu0 %v1351
        %v1353 = vpop.xlane.xlu0 %1352
        %v1354 = vsub.f32 %v1350, %v1353
        %v1355 = vmul.f32 %v1354, 1.442695
        %v1356 = vpow.pop %v1355
        %v1357 = vsel %vm760, %v1356, 0.0
        %1358 = vadd.xlane.f32.xlu0 %v1357
        %v1359 = vpop.xlane.xlu0 %1358
        %1360 = vrot.lane.b32.xlu0 %v737, 40
        %v1361 = vpop.permute.xlu0 %1360
        %v1364 = vsel %vm760, %v1356, 0
        %1366 = vmatprep.subr.mxu0 0.0
        %1367 = vmatpush1.msra.mxu0 %v1361
        %1368 = vmatprep.subr.mxu0 0.0
        %1369 = vmatpush1.msra.mxu0 0.0
        %1370 = vmatprep.subr.mxu0 0.0
        %1371 = vmatpush1.msra.mxu0 0.0
        %1372 = vmatprep.subr.mxu0 0.0
        %1373 = vmatpush1.msra.mxu0 0.0
        %1374 = vmatprep.subr.mxu0 0.0
        %1375 = vmatpush1.msra.mxu0 0.0
        %1376 = vmatprep.subr.mxu0 0.0
        %1377 = vmatpush1.msra.mxu0 0.0
        %1378 = vmatprep.subr.mxu0 0.0
        %1379 = vmatpush1.msra.mxu0 0.0
        %1380 = vmatprep.subr.mxu0 0.0
        %1381 = vmatpush1.msra.mxu0 0.0
        %1382 = vmatprep.subr.mxu0 0.0
        %1383 = vmatpush1.msra.mxu0 0.0
        %1384 = vmatprep.subr.mxu0 0.0
        %1385 = vmatpush1.msra.mxu0 0.0
        %1386 = vmatprep.subr.mxu0 0.0
        %1387 = vmatpush1.msra.mxu0 0.0
        %1388 = vmatprep.subr.mxu0 0.0
        %1389 = vmatpush1.msra.mxu0 0.0
        %1390 = vmatprep.subr.mxu0 0.0
        %1391 = vmatpush1.msra.mxu0 0.0
        %1392 = vmatprep.subr.mxu0 0.0
        %1393 = vmatpush1.msra.mxu0 0.0
        %1394 = vmatprep.subr.mxu0 0.0
        %1395 = vmatpush1.msra.mxu0 0.0
        %1396 = vmatprep.subr.mxu0 0.0
        %1397 = vmatpush1.msra.mxu0 0.0
        %1398 = vmatprep.subr.mxu0 0.0
        %1399 = vmatpush1.msra.mxu0 0.0
        %1400 = vmatprep.subr.mxu0 0.0
        %1401 = vmatpush1.msra.mxu0 0.0
        %1402 = vmatprep.subr.mxu0 0.0
        %1403 = vmatpush1.msra.mxu0 0.0
        %1404 = vmatprep.subr.mxu0 0.0
        %1405 = vmatpush1.msra.mxu0 0.0
        %1406 = vmatprep.subr.mxu0 0.0
        %1407 = vmatpush1.msra.mxu0 0.0
        %1408 = vmatprep.subr.mxu0 0.0
        %1409 = vmatpush1.msra.mxu0 0.0
        %1410 = vmatprep.subr.mxu0 0.0
        %1411 = vmatpush1.msra.mxu0 0.0
        %1412 = vmatprep.subr.mxu0 0.0
        %1413 = vmatpush1.msra.mxu0 0.0
        %1414 = vmatprep.subr.mxu0 0.0
        %1415 = vmatpush1.msra.mxu0 0.0
        %1416 = vmatprep.subr.mxu0 0.0
        %1417 = vmatpush1.msra.mxu0 0.0
        %1418 = vmatprep.subr.mxu0 0.0
        %1419 = vmatpush1.msra.mxu0 0.0
        %1420 = vmatprep.subr.mxu0 0.0
        %1421 = vmatpush1.msra.mxu0 0.0
        %1422 = vmatprep.subr.mxu0 0.0
        %1423 = vmatpush1.msra.mxu0 0.0
        %1424 = vmatprep.subr.mxu0 0.0
        %1425 = vmatpush1.msra.mxu0 0.0
        %1426 = vmatprep.subr.mxu0 0.0
        %1427 = vmatpush1.msra.mxu0 0.0
        %1428 = vmatprep.subr.mxu0 0.0
        %1429 = vmatpush1.msra.mxu0 0.0
        %1430 = vmatprep.mubr.f32.mxu0 0.0
        %1431 = vmatmul.mubr.f32.gmra.mrb[0].mxu0 %v1364
        %v1432 = vpop.f32.mrb[0].mxu0
        %v1433 = vadd.f32 0.0, %v1432
        %v1434 = vpop.f32.mrb[0].mxu0
        %1435 = vdwg.mxu0
        %v1436 = vrcp.pop %v1359
        %v1437 = vmul.f32 %v1433, %v1436
        %1439 = vrot.lane.b32.xlu0 %v1437, 24
        %v1440 = vpop.permute.xlu0 %1439
        %vm1442 = vcmask 261312
        %1443 = vst.msk [vmem:[#allocation3] sm:$0xff] %vm1442, %v1440
        %v1444 = vld [vmem:[%s1 + $0x1] sm:$0x1]
        %v1445 = vlaneseq
        %v1446 = vshrl.u32 %v1445, 7
        %v1447 = vsub.s32 0, %v1446
        %v1448 = vrot.slane %v1444, %v1447
        %v1449 = vadd.f32 %v750, %v1448
        %1451 = vrot.lane.b32.xlu0 %v742, 96
        %v1452 = vpop.permute.xlu0 %1451
        %v1453 = vsel %vm760, %v742, 0
        %v1455 = vsel %vm760, %v1452, 0
        %1457 = vmatprep.subr.mxu0 0.0
        %1458 = vmatpush1.xpose.msra.mxu0 %v1455
        %1459 = vmatprep.subr.mxu0 0.0
        %1460 = vmatpush1.xpose.msra.mxu0 0.0
        %1461 = vmatprep.subr.mxu0 0.0
        %1462 = vmatpush1.xpose.msra.mxu0 0.0
        %1463 = vmatprep.subr.mxu0 0.0
        %1464 = vmatpush1.xpose.msra.mxu0 0.0
        %1465 = vmatprep.subr.mxu0 0.0
        %1466 = vmatpush1.xpose.msra.mxu0 0.0
        %1467 = vmatprep.subr.mxu0 0.0
        %1468 = vmatpush1.xpose.msra.mxu0 0.0
        %1469 = vmatprep.subr.mxu0 0.0
        %1470 = vmatpush1.xpose.msra.mxu0 0.0
        %1471 = vmatprep.subr.mxu0 0.0
        %1472 = vmatpush1.xpose.msra.mxu0 0.0
        %1473 = vmatprep.subr.mxu0 0.0
        %1474 = vmatpush1.xpose.msra.mxu0 0.0
        %1475 = vmatprep.subr.mxu0 0.0
        %1476 = vmatpush1.xpose.msra.mxu0 0.0
        %1477 = vmatprep.subr.mxu0 0.0
        %1478 = vmatpush1.xpose.msra.mxu0 0.0
        %1479 = vmatprep.subr.mxu0 0.0
        %1480 = vmatpush1.xpose.msra.mxu0 0.0
        %1481 = vmatprep.subr.mxu0 0.0
        %1482 = vmatpush1.xpose.msra.mxu0 0.0
        %1483 = vmatprep.subr.mxu0 0.0
        %1484 = vmatpush1.xpose.msra.mxu0 0.0
        %1485 = vmatprep.subr.mxu0 0.0
        %1486 = vmatpush1.xpose.msra.mxu0 0.0
        %1487 = vmatprep.subr.mxu0 0.0
        %1488 = vmatpush1.xpose.msra.mxu0 0.0
        %1489 = vmatprep.subr.mxu0 0.0
        %1490 = vmatpush1.xpose.msra.mxu0 0.0
        %1491 = vmatprep.subr.mxu0 0.0
        %1492 = vmatpush1.xpose.msra.mxu0 0.0
        %1493 = vmatprep.subr.mxu0 0.0
        %1494 = vmatpush1.xpose.msra.mxu0 0.0
        %1495 = vmatprep.subr.mxu0 0.0
        %1496 = vmatpush1.xpose.msra.mxu0 0.0
        %1497 = vmatprep.subr.mxu0 0.0
        %1498 = vmatpush1.xpose.msra.mxu0 0.0
        %1499 = vmatprep.subr.mxu0 0.0
        %1500 = vmatpush1.xpose.msra.mxu0 0.0
        %1501 = vmatprep.subr.mxu0 0.0
        %1502 = vmatpush1.xpose.msra.mxu0 0.0
        %1503 = vmatprep.subr.mxu0 0.0
        %1504 = vmatpush1.xpose.msra.mxu0 0.0
        %1505 = vmatprep.subr.mxu0 0.0
        %1506 = vmatpush1.xpose.msra.mxu0 0.0
        %1507 = vmatprep.subr.mxu0 0.0
        %1508 = vmatpush1.xpose.msra.mxu0 0.0
        %1509 = vmatprep.subr.mxu0 0.0
        %1510 = vmatpush1.xpose.msra.mxu0 0.0
        %1511 = vmatprep.subr.mxu0 0.0
        %1512 = vmatpush1.xpose.msra.mxu0 0.0
        %1513 = vmatprep.subr.mxu0 0.0
        %1514 = vmatpush1.xpose.msra.mxu0 0.0
        %1515 = vmatprep.subr.mxu0 0.0
        %1516 = vmatpush1.xpose.msra.mxu0 0.0
        %1517 = vmatprep.subr.mxu0 0.0
        %1518 = vmatpush1.xpose.msra.mxu0 0.0
        %1519 = vmatprep.subr.mxu0 0.0
        %1520 = vmatpush1.xpose.msra.mxu0 0.0
        %1521 = vmatprep.mubr.f32.mxu0 0.0
        %1522 = vmatmul.mubr.f32.gmra.mrb[0].mxu0 %v1453
        %v1523 = vpop.f32.mrb[0].mxu0
        %v1524 = vadd.f32 0.0, %v1523
        %v1525 = vpop.f32.mrb[0].mxu0
        %1526 = vdwg.mxu0
        %v1527 = vmul.f32 %v1524, 0.35355338
        %v1528 = vadd.f32 %v1527, %v1449
        %v1529 = vsel %vm760, %v1528, -inf
        %1530 = vmax.xlane.f32.xlu0 %v1529
        %v1531 = vpop.xlane.xlu0 %1530
        %v1532 = vsub.f32 %v1528, %v1531
        %v1533 = vmul.f32 %v1532, 1.442695
        %v1534 = vpow.pop %v1533
        %v1535 = vsel %vm760, %v1534, 0.0
        %1536 = vadd.xlane.f32.xlu0 %v1535
        %v1537 = vpop.xlane.xlu0 %1536
        %1538 = vrot.lane.b32.xlu0 %v742, 64
        %v1539 = vpop.permute.xlu0 %1538
        %v1542 = vsel %vm760, %v1534, 0
        %1544 = vmatprep.subr.mxu0 0.0
        %1545 = vmatpush1.msra.mxu0 %v1539
        %1546 = vmatprep.subr.mxu0 0.0
        %1547 = vmatpush1.msra.mxu0 0.0
        %1548 = vmatprep.subr.mxu0 0.0
        %1549 = vmatpush1.msra.mxu0 0.0
        %1550 = vmatprep.subr.mxu0 0.0
        %1551 = vmatpush1.msra.mxu0 0.0
        %1552 = vmatprep.subr.mxu0 0.0
        %1553 = vmatpush1.msra.mxu0 0.0
        %1554 = vmatprep.subr.mxu0 0.0
        %1555 = vmatpush1.msra.mxu0 0.0
        %1556 = vmatprep.subr.mxu0 0.0
        %1557 = vmatpush1.msra.mxu0 0.0
        %1558 = vmatprep.subr.mxu0 0.0
        %1559 = vmatpush1.msra.mxu0 0.0
        %1560 = vmatprep.subr.mxu0 0.0
        %1561 = vmatpush1.msra.mxu0 0.0
        %1562 = vmatprep.subr.mxu0 0.0
        %1563 = vmatpush1.msra.mxu0 0.0
        %1564 = vmatprep.subr.mxu0 0.0
        %1565 = vmatpush1.msra.mxu0 0.0
        %1566 = vmatprep.subr.mxu0 0.0
        %1567 = vmatpush1.msra.mxu0 0.0
        %1568 = vmatprep.subr.mxu0 0.0
        %1569 = vmatpush1.msra.mxu0 0.0
        %1570 = vmatprep.subr.mxu0 0.0
        %1571 = vmatpush1.msra.mxu0 0.0
        %1572 = vmatprep.subr.mxu0 0.0
        %1573 = vmatpush1.msra.mxu0 0.0
        %1574 = vmatprep.subr.mxu0 0.0
        %1575 = vmatpush1.msra.mxu0 0.0
        %1576 = vmatprep.subr.mxu0 0.0
        %1577 = vmatpush1.msra.mxu0 0.0
        %1578 = vmatprep.subr.mxu0 0.0
        %1579 = vmatpush1.msra.mxu0 0.0
        %1580 = vmatprep.subr.mxu0 0.0
        %1581 = vmatpush1.msra.mxu0 0.0
        %1582 = vmatprep.subr.mxu0 0.0
        %1583 = vmatpush1.msra.mxu0 0.0
        %1584 = vmatprep.subr.mxu0 0.0
        %1585 = vmatpush1.msra.mxu0 0.0
        %1586 = vmatprep.subr.mxu0 0.0
        %1587 = vmatpush1.msra.mxu0 0.0
        %1588 = vmatprep.subr.mxu0 0.0
        %1589 = vmatpush1.msra.mxu0 0.0
        %1590 = vmatprep.subr.mxu0 0.0
        %1591 = vmatpush1.msra.mxu0 0.0
        %1592 = vmatprep.subr.mxu0 0.0
        %1593 = vmatpush1.msra.mxu0 0.0
        %1594 = vmatprep.subr.mxu0 0.0
        %1595 = vmatpush1.msra.mxu0 0.0
        %1596 = vmatprep.subr.mxu0 0.0
        %1597 = vmatpush1.msra.mxu0 0.0
        %1598 = vmatprep.subr.mxu0 0.0
        %1599 = vmatpush1.msra.mxu0 0.0
        %1600 = vmatprep.subr.mxu0 0.0
        %1601 = vmatpush1.msra.mxu0 0.0
        %1602 = vmatprep.subr.mxu0 0.0
        %1603 = vmatpush1.msra.mxu0 0.0
        %1604 = vmatprep.subr.mxu0 0.0
        %1605 = vmatpush1.msra.mxu0 0.0
        %1606 = vmatprep.subr.mxu0 0.0
        %1607 = vmatpush1.msra.mxu0 0.0
        %1608 = vmatprep.mubr.f32.mxu0 0.0
        %1609 = vmatmul.mubr.f32.gmra.mrb[0].mxu0 %v1542
        %v1610 = vpop.f32.mrb[0].mxu0
        %v1611 = vadd.f32 0.0, %v1610
        %v1612 = vpop.f32.mrb[0].mxu0
        %1613 = vdwg.mxu0
        %v1614 = vrcp.pop %v1537
        %v1615 = vmul.f32 %v1611, %v1614
        %1616 = vst.msk [vmem:[#allocation3 + $0x8] sm:$0xff] %vm760, %v1615
        %1617 = vrot.lane.b32.xlu0 %v742, 120
        %v1618 = vpop.permute.xlu0 %1617
        %1619 = vrot.lane.b32.xlu0 %v742, 88
        %v1620 = vpop.permute.xlu0 %1619
        %v1621 = vsel %vm760, %v1618, 0
        %v1623 = vsel %vm760, %v1620, 0
        %1625 = vmatprep.subr.mxu0 0.0
        %1626 = vmatpush1.xpose.msra.mxu0 %v1623
        %1627 = vmatprep.subr.mxu0 0.0
        %1628 = vmatpush1.xpose.msra.mxu0 0.0
        %1629 = vmatprep.subr.mxu0 0.0
        %1630 = vmatpush1.xpose.msra.mxu0 0.0
        %1631 = vmatprep.subr.mxu0 0.0
        %1632 = vmatpush1.xpose.msra.mxu0 0.0
        %1633 = vmatprep.subr.mxu0 0.0
        %1634 = vmatpush1.xpose.msra.mxu0 0.0
        %1635 = vmatprep.subr.mxu0 0.0
        %1636 = vmatpush1.xpose.msra.mxu0 0.0
        %1637 = vmatprep.subr.mxu0 0.0
        %1638 = vmatpush1.xpose.msra.mxu0 0.0
        %1639 = vmatprep.subr.mxu0 0.0
        %1640 = vmatpush1.xpose.msra.mxu0 0.0
        %1641 = vmatprep.subr.mxu0 0.0
        %1642 = vmatpush1.xpose.msra.mxu0 0.0
        %1643 = vmatprep.subr.mxu0 0.0
        %1644 = vmatpush1.xpose.msra.mxu0 0.0
        %1645 = vmatprep.subr.mxu0 0.0
        %1646 = vmatpush1.xpose.msra.mxu0 0.0
        %1647 = vmatprep.subr.mxu0 0.0
        %1648 = vmatpush1.xpose.msra.mxu0 0.0
        %1649 = vmatprep.subr.mxu0 0.0
        %1650 = vmatpush1.xpose.msra.mxu0 0.0
        %1651 = vmatprep.subr.mxu0 0.0
        %1652 = vmatpush1.xpose.msra.mxu0 0.0
        %1653 = vmatprep.subr.mxu0 0.0
        %1654 = vmatpush1.xpose.msra.mxu0 0.0
        %1655 = vmatprep.subr.mxu0 0.0
        %1656 = vmatpush1.xpose.msra.mxu0 0.0
        %1657 = vmatprep.subr.mxu0 0.0
        %1658 = vmatpush1.xpose.msra.mxu0 0.0
        %1659 = vmatprep.subr.mxu0 0.0
        %1660 = vmatpush1.xpose.msra.mxu0 0.0
        %1661 = vmatprep.subr.mxu0 0.0
        %1662 = vmatpush1.xpose.msra.mxu0 0.0
        %1663 = vmatprep.subr.mxu0 0.0
        %1664 = vmatpush1.xpose.msra.mxu0 0.0
        %1665 = vmatprep.subr.mxu0 0.0
        %1666 = vmatpush1.xpose.msra.mxu0 0.0
        %1667 = vmatprep.subr.mxu0 0.0
        %1668 = vmatpush1.xpose.msra.mxu0 0.0
        %1669 = vmatprep.subr.mxu0 0.0
        %1670 = vmatpush1.xpose.msra.mxu0 0.0
        %1671 = vmatprep.subr.mxu0 0.0
        %1672 = vmatpush1.xpose.msra.mxu0 0.0
        %1673 = vmatprep.subr.mxu0 0.0
        %1674 = vmatpush1.xpose.msra.mxu0 0.0
        %1675 = vmatprep.subr.mxu0 0.0
        %1676 = vmatpush1.xpose.msra.mxu0 0.0
        %1677 = vmatprep.subr.mxu0 0.0
        %1678 = vmatpush1.xpose.msra.mxu0 0.0
        %1679 = vmatprep.subr.mxu0 0.0
        %1680 = vmatpush1.xpose.msra.mxu0 0.0
        %1681 = vmatprep.subr.mxu0 0.0
        %1682 = vmatpush1.xpose.msra.mxu0 0.0
        %1683 = vmatprep.subr.mxu0 0.0
        %1684 = vmatpush1.xpose.msra.mxu0 0.0
        %1685 = vmatprep.subr.mxu0 0.0
        %1686 = vmatpush1.xpose.msra.mxu0 0.0
        %1687 = vmatprep.subr.mxu0 0.0
        %1688 = vmatpush1.xpose.msra.mxu0 0.0
        %1689 = vmatprep.mubr.f32.mxu0 0.0
        %1690 = vmatmul.mubr.f32.gmra.mrb[0].mxu0 %v1621
        %v1691 = vpop.f32.mrb[0].mxu0
        %v1692 = vadd.f32 0.0, %v1691
        %v1693 = vpop.f32.mrb[0].mxu0
        %1694 = vdwg.mxu0
        %v1695 = vmul.f32 %v1692, 0.35355338
        %v1696 = vadd.f32 %v1695, %v1449
        %v1697 = vsel %vm760, %v1696, -inf
        %1698 = vmax.xlane.f32.xlu0 %v1697
        %v1699 = vpop.xlane.xlu0 %1698
        %v1700 = vsub.f32 %v1696, %v1699
        %v1701 = vmul.f32 %v1700, 1.442695
        %v1702 = vpow.pop %v1701
        %v1703 = vsel %vm760, %v1702, 0.0
        %1704 = vadd.xlane.f32.xlu0 %v1703
        %v1705 = vpop.xlane.xlu0 %1704
        %1706 = vrot.lane.b32.xlu0 %v742, 56
        %v1707 = vpop.permute.xlu0 %1706
        %v1710 = vsel %vm760, %v1702, 0
        %1712 = vmatprep.subr.mxu0 0.0
        %1713 = vmatpush1.msra.mxu0 %v1707
        %1714 = vmatprep.subr.mxu0 0.0
        %1715 = vmatpush1.msra.mxu0 0.0
        %1716 = vmatprep.subr.mxu0 0.0
        %1717 = vmatpush1.msra.mxu0 0.0
        %1718 = vmatprep.subr.mxu0 0.0
        %1719 = vmatpush1.msra.mxu0 0.0
        %1720 = vmatprep.subr.mxu0 0.0
        %1721 = vmatpush1.msra.mxu0 0.0
        %1722 = vmatprep.subr.mxu0 0.0
        %1723 = vmatpush1.msra.mxu0 0.0
        %1724 = vmatprep.subr.mxu0 0.0
        %1725 = vmatpush1.msra.mxu0 0.0
        %1726 = vmatprep.subr.mxu0 0.0
        %1727 = vmatpush1.msra.mxu0 0.0
        %1728 = vmatprep.subr.mxu0 0.0
        %1729 = vmatpush1.msra.mxu0 0.0
        %1730 = vmatprep.subr.mxu0 0.0
        %1731 = vmatpush1.msra.mxu0 0.0
        %1732 = vmatprep.subr.mxu0 0.0
        %1733 = vmatpush1.msra.mxu0 0.0
        %1734 = vmatprep.subr.mxu0 0.0
        %1735 = vmatpush1.msra.mxu0 0.0
        %1736 = vmatprep.subr.mxu0 0.0
        %1737 = vmatpush1.msra.mxu0 0.0
        %1738 = vmatprep.subr.mxu0 0.0
        %1739 = vmatpush1.msra.mxu0 0.0
        %1740 = vmatprep.subr.mxu0 0.0
        %1741 = vmatpush1.msra.mxu0 0.0
        %1742 = vmatprep.subr.mxu0 0.0
        %1743 = vmatpush1.msra.mxu0 0.0
        %1744 = vmatprep.subr.mxu0 0.0
        %1745 = vmatpush1.msra.mxu0 0.0
        %1746 = vmatprep.subr.mxu0 0.0
        %1747 = vmatpush1.msra.mxu0 0.0
        %1748 = vmatprep.subr.mxu0 0.0
        %1749 = vmatpush1.msra.mxu0 0.0
        %1750 = vmatprep.subr.mxu0 0.0
        %1751 = vmatpush1.msra.mxu0 0.0
        %1752 = vmatprep.subr.mxu0 0.0
        %1753 = vmatpush1.msra.mxu0 0.0
        %1754 = vmatprep.subr.mxu0 0.0
        %1755 = vmatpush1.msra.mxu0 0.0
        %1756 = vmatprep.subr.mxu0 0.0
        %1757 = vmatpush1.msra.mxu0 0.0
        %1758 = vmatprep.subr.mxu0 0.0
        %1759 = vmatpush1.msra.mxu0 0.0
        %1760 = vmatprep.subr.mxu0 0.0
        %1761 = vmatpush1.msra.mxu0 0.0
        %1762 = vmatprep.subr.mxu0 0.0
        %1763 = vmatpush1.msra.mxu0 0.0
        %1764 = vmatprep.subr.mxu0 0.0
        %1765 = vmatpush1.msra.mxu0 0.0
        %1766 = vmatprep.subr.mxu0 0.0
        %1767 = vmatpush1.msra.mxu0 0.0
        %1768 = vmatprep.subr.mxu0 0.0
        %1769 = vmatpush1.msra.mxu0 0.0
        %1770 = vmatprep.subr.mxu0 0.0
        %1771 = vmatpush1.msra.mxu0 0.0
        %1772 = vmatprep.subr.mxu0 0.0
        %1773 = vmatpush1.msra.mxu0 0.0
        %1774 = vmatprep.subr.mxu0 0.0
        %1775 = vmatpush1.msra.mxu0 0.0
        %1776 = vmatprep.mubr.f32.mxu0 0.0
        %1777 = vmatmul.mubr.f32.gmra.mrb[0].mxu0 %v1710
        %v1778 = vpop.f32.mrb[0].mxu0
        %v1779 = vadd.f32 0.0, %v1778
        %v1780 = vpop.f32.mrb[0].mxu0
        %1781 = vdwg.mxu0
        %v1782 = vrcp.pop %v1705
        %v1783 = vmul.f32 %v1779, %v1782
        %1785 = vrot.lane.b32.xlu0 %v1783, 8
        %v1786 = vpop.permute.xlu0 %1785
        %1788 = vst.msk [vmem:[#allocation3 + $0x8] sm:$0xff] %vm1096, %v1786
        %1789 = vrot.lane.b32.xlu0 %v742, 112
        %v1790 = vpop.permute.xlu0 %1789
        %1791 = vrot.lane.b32.xlu0 %v742, 80
        %v1792 = vpop.permute.xlu0 %1791
        %v1793 = vsel %vm760, %v1790, 0
        %v1795 = vsel %vm760, %v1792, 0
        %1797 = vmatprep.subr.mxu0 0.0
        %1798 = vmatpush1.xpose.msra.mxu0 %v1795
        %1799 = vmatprep.subr.mxu0 0.0
        %1800 = vmatpush1.xpose.msra.mxu0 0.0
        %1801 = vmatprep.subr.mxu0 0.0
        %1802 = vmatpush1.xpose.msra.mxu0 0.0
        %1803 = vmatprep.subr.mxu0 0.0
        %1804 = vmatpush1.xpose.msra.mxu0 0.0
        %1805 = vmatprep.subr.mxu0 0.0
        %1806 = vmatpush1.xpose.msra.mxu0 0.0
        %1807 = vmatprep.subr.mxu0 0.0
        %1808 = vmatpush1.xpose.msra.mxu0 0.0
        %1809 = vmatprep.subr.mxu0 0.0
        %1810 = vmatpush1.xpose.msra.mxu0 0.0
        %1811 = vmatprep.subr.mxu0 0.0
        %1812 = vmatpush1.xpose.msra.mxu0 0.0
        %1813 = vmatprep.subr.mxu0 0.0
        %1814 = vmatpush1.xpose.msra.mxu0 0.0
        %1815 = vmatprep.subr.mxu0 0.0
        %1816 = vmatpush1.xpose.msra.mxu0 0.0
        %1817 = vmatprep.subr.mxu0 0.0
        %1818 = vmatpush1.xpose.msra.mxu0 0.0
        %1819 = vmatprep.subr.mxu0 0.0
        %1820 = vmatpush1.xpose.msra.mxu0 0.0
        %1821 = vmatprep.subr.mxu0 0.0
        %1822 = vmatpush1.xpose.msra.mxu0 0.0
        %1823 = vmatprep.subr.mxu0 0.0
        %1824 = vmatpush1.xpose.msra.mxu0 0.0
        %1825 = vmatprep.subr.mxu0 0.0
        %1826 = vmatpush1.xpose.msra.mxu0 0.0
        %1827 = vmatprep.subr.mxu0 0.0
        %1828 = vmatpush1.xpose.msra.mxu0 0.0
        %1829 = vmatprep.subr.mxu0 0.0
        %1830 = vmatpush1.xpose.msra.mxu0 0.0
        %1831 = vmatprep.subr.mxu0 0.0
        %1832 = vmatpush1.xpose.msra.mxu0 0.0
        %1833 = vmatprep.subr.mxu0 0.0
        %1834 = vmatpush1.xpose.msra.mxu0 0.0
        %1835 = vmatprep.subr.mxu0 0.0
        %1836 = vmatpush1.xpose.msra.mxu0 0.0
        %1837 = vmatprep.subr.mxu0 0.0
        %1838 = vmatpush1.xpose.msra.mxu0 0.0
        %1839 = vmatprep.subr.mxu0 0.0
        %1840 = vmatpush1.xpose.msra.mxu0 0.0
        %1841 = vmatprep.subr.mxu0 0.0
        %1842 = vmatpush1.xpose.msra.mxu0 0.0
        %1843 = vmatprep.subr.mxu0 0.0
        %1844 = vmatpush1.xpose.msra.mxu0 0.0
        %1845 = vmatprep.subr.mxu0 0.0
        %1846 = vmatpush1.xpose.msra.mxu0 0.0
        %1847 = vmatprep.subr.mxu0 0.0
        %1848 = vmatpush1.xpose.msra.mxu0 0.0
        %1849 = vmatprep.subr.mxu0 0.0
        %1850 = vmatpush1.xpose.msra.mxu0 0.0
        %1851 = vmatprep.subr.mxu0 0.0
        %1852 = vmatpush1.xpose.msra.mxu0 0.0
        %1853 = vmatprep.subr.mxu0 0.0
        %1854 = vmatpush1.xpose.msra.mxu0 0.0
        %1855 = vmatprep.subr.mxu0 0.0
        %1856 = vmatpush1.xpose.msra.mxu0 0.0
        %1857 = vmatprep.subr.mxu0 0.0
        %1858 = vmatpush1.xpose.msra.mxu0 0.0
        %1859 = vmatprep.subr.mxu0 0.0
        %1860 = vmatpush1.xpose.msra.mxu0 0.0
        %1861 = vmatprep.mubr.f32.mxu0 0.0
        %1862 = vmatmul.mubr.f32.gmra.mrb[0].mxu0 %v1793
        %v1863 = vpop.f32.mrb[0].mxu0
        %v1864 = vadd.f32 0.0, %v1863
        %v1865 = vpop.f32.mrb[0].mxu0
        %1866 = vdwg.mxu0
        %v1867 = vmul.f32 %v1864, 0.35355338
        %v1868 = vadd.f32 %v1867, %v1449
        %v1869 = vsel %vm760, %v1868, -inf
        %1870 = vmax.xlane.f32.xlu0 %v1869
        %v1871 = vpop.xlane.xlu0 %1870
        %v1872 = vsub.f32 %v1868, %v1871
        %v1873 = vmul.f32 %v1872, 1.442695
        %v1874 = vpow.pop %v1873
        %v1875 = vsel %vm760, %v1874, 0.0
        %1876 = vadd.xlane.f32.xlu0 %v1875
        %v1877 = vpop.xlane.xlu0 %1876
        %1878 = vrot.lane.b32.xlu0 %v742, 48
        %v1879 = vpop.permute.xlu0 %1878
        %v1882 = vsel %vm760, %v1874, 0
        %1884 = vmatprep.subr.mxu0 0.0
        %1885 = vmatpush1.msra.mxu0 %v1879
        %1886 = vmatprep.subr.mxu0 0.0
        %1887 = vmatpush1.msra.mxu0 0.0
        %1888 = vmatprep.subr.mxu0 0.0
        %1889 = vmatpush1.msra.mxu0 0.0
        %1890 = vmatprep.subr.mxu0 0.0
        %1891 = vmatpush1.msra.mxu0 0.0
        %1892 = vmatprep.subr.mxu0 0.0
        %1893 = vmatpush1.msra.mxu0 0.0
        %1894 = vmatprep.subr.mxu0 0.0
        %1895 = vmatpush1.msra.mxu0 0.0
        %1896 = vmatprep.subr.mxu0 0.0
        %1897 = vmatpush1.msra.mxu0 0.0
        %1898 = vmatprep.subr.mxu0 0.0
        %1899 = vmatpush1.msra.mxu0 0.0
        %1900 = vmatprep.subr.mxu0 0.0
        %1901 = vmatpush1.msra.mxu0 0.0
        %1902 = vmatprep.subr.mxu0 0.0
        %1903 = vmatpush1.msra.mxu0 0.0
        %1904 = vmatprep.subr.mxu0 0.0
        %1905 = vmatpush1.msra.mxu0 0.0
        %1906 = vmatprep.subr.mxu0 0.0
        %1907 = vmatpush1.msra.mxu0 0.0
        %1908 = vmatprep.subr.mxu0 0.0
        %1909 = vmatpush1.msra.mxu0 0.0
        %1910 = vmatprep.subr.mxu0 0.0
        %1911 = vmatpush1.msra.mxu0 0.0
        %1912 = vmatprep.subr.mxu0 0.0
        %1913 = vmatpush1.msra.mxu0 0.0
        %1914 = vmatprep.subr.mxu0 0.0
        %1915 = vmatpush1.msra.mxu0 0.0
        %1916 = vmatprep.subr.mxu0 0.0
        %1917 = vmatpush1.msra.mxu0 0.0
        %1918 = vmatprep.subr.mxu0 0.0
        %1919 = vmatpush1.msra.mxu0 0.0
        %1920 = vmatprep.subr.mxu0 0.0
        %1921 = vmatpush1.msra.mxu0 0.0
        %1922 = vmatprep.subr.mxu0 0.0
        %1923 = vmatpush1.msra.mxu0 0.0
        %1924 = vmatprep.subr.mxu0 0.0
        %1925 = vmatpush1.msra.mxu0 0.0
        %1926 = vmatprep.subr.mxu0 0.0
        %1927 = vmatpush1.msra.mxu0 0.0
        %1928 = vmatprep.subr.mxu0 0.0
        %1929 = vmatpush1.msra.mxu0 0.0
        %1930 = vmatprep.subr.mxu0 0.0
        %1931 = vmatpush1.msra.mxu0 0.0
        %1932 = vmatprep.subr.mxu0 0.0
        %1933 = vmatpush1.msra.mxu0 0.0
        %1934 = vmatprep.subr.mxu0 0.0
        %1935 = vmatpush1.msra.mxu0 0.0
        %1936 = vmatprep.subr.mxu0 0.0
        %1937 = vmatpush1.msra.mxu0 0.0
        %1938 = vmatprep.subr.mxu0 0.0
        %1939 = vmatpush1.msra.mxu0 0.0
        %1940 = vmatprep.subr.mxu0 0.0
        %1941 = vmatpush1.msra.mxu0 0.0
        %1942 = vmatprep.subr.mxu0 0.0
        %1943 = vmatpush1.msra.mxu0 0.0
        %1944 = vmatprep.subr.mxu0 0.0
        %1945 = vmatpush1.msra.mxu0 0.0
        %1946 = vmatprep.subr.mxu0 0.0
        %1947 = vmatpush1.msra.mxu0 0.0
        %1948 = vmatprep.mubr.f32.mxu0 0.0
        %1949 = vmatmul.mubr.f32.gmra.mrb[0].mxu0 %v1882
        %v1950 = vpop.f32.mrb[0].mxu0
        %v1951 = vadd.f32 0.0, %v1950
        %v1952 = vpop.f32.mrb[0].mxu0
        %1953 = vdwg.mxu0
        %v1954 = vrcp.pop %v1877
        %v1955 = vmul.f32 %v1951, %v1954
        %1957 = vrot.lane.b32.xlu0 %v1955, 16
        %v1958 = vpop.permute.xlu0 %1957
        %1960 = vst.msk [vmem:[#allocation3 + $0x8] sm:$0xff] %vm1269, %v1958
        %1961 = vrot.lane.b32.xlu0 %v742, 104
        %v1962 = vpop.permute.xlu0 %1961
        %1963 = vrot.lane.b32.xlu0 %v742, 72
        %v1964 = vpop.permute.xlu0 %1963
        %v1965 = vsel %vm760, %v1962, 0
        %v1967 = vsel %vm760, %v1964, 0
        %1969 = vmatprep.subr.mxu0 0.0
        %1970 = vmatpush1.xpose.msra.mxu0 %v1967
        %1971 = vmatprep.subr.mxu0 0.0
        %1972 = vmatpush1.xpose.msra.mxu0 0.0
        %1973 = vmatprep.subr.mxu0 0.0
        %1974 = vmatpush1.xpose.msra.mxu0 0.0
        %1975 = vmatprep.subr.mxu0 0.0
        %1976 = vmatpush1.xpose.msra.mxu0 0.0
        %1977 = vmatprep.subr.mxu0 0.0
        %1978 = vmatpush1.xpose.msra.mxu0 0.0
        %1979 = vmatprep.subr.mxu0 0.0
        %1980 = vmatpush1.xpose.msra.mxu0 0.0
        %1981 = vmatprep.subr.mxu0 0.0
        %1982 = vmatpush1.xpose.msra.mxu0 0.0
        %1983 = vmatprep.subr.mxu0 0.0
        %1984 = vmatpush1.xpose.msra.mxu0 0.0
        %1985 = vmatprep.subr.mxu0 0.0
        %1986 = vmatpush1.xpose.msra.mxu0 0.0
        %1987 = vmatprep.subr.mxu0 0.0
        %1988 = vmatpush1.xpose.msra.mxu0 0.0
        %1989 = vmatprep.subr.mxu0 0.0
        %1990 = vmatpush1.xpose.msra.mxu0 0.0
        %1991 = vmatprep.subr.mxu0 0.0
        %1992 = vmatpush1.xpose.msra.mxu0 0.0
        %1993 = vmatprep.subr.mxu0 0.0
        %1994 = vmatpush1.xpose.msra.mxu0 0.0
        %1995 = vmatprep.subr.mxu0 0.0
        %1996 = vmatpush1.xpose.msra.mxu0 0.0
        %1997 = vmatprep.subr.mxu0 0.0
        %1998 = vmatpush1.xpose.msra.mxu0 0.0
        %1999 = vmatprep.subr.mxu0 0.0
        %2000 = vmatpush1.xpose.msra.mxu0 0.0
        %2001 = vmatprep.subr.mxu0 0.0
        %2002 = vmatpush1.xpose.msra.mxu0 0.0
        %2003 = vmatprep.subr.mxu0 0.0
        %2004 = vmatpush1.xpose.msra.mxu0 0.0
        %2005 = vmatprep.subr.mxu0 0.0
        %2006 = vmatpush1.xpose.msra.mxu0 0.0
        %2007 = vmatprep.subr.mxu0 0.0
        %2008 = vmatpush1.xpose.msra.mxu0 0.0
        %2009 = vmatprep.subr.mxu0 0.0
        %2010 = vmatpush1.xpose.msra.mxu0 0.0
        %2011 = vmatprep.subr.mxu0 0.0
        %2012 = vmatpush1.xpose.msra.mxu0 0.0
        %2013 = vmatprep.subr.mxu0 0.0
        %2014 = vmatpush1.xpose.msra.mxu0 0.0
        %2015 = vmatprep.subr.mxu0 0.0
        %2016 = vmatpush1.xpose.msra.mxu0 0.0
        %2017 = vmatprep.subr.mxu0 0.0
        %2018 = vmatpush1.xpose.msra.mxu0 0.0
        %2019 = vmatprep.subr.mxu0 0.0
        %2020 = vmatpush1.xpose.msra.mxu0 0.0
        %2021 = vmatprep.subr.mxu0 0.0
        %2022 = vmatpush1.xpose.msra.mxu0 0.0
        %2023 = vmatprep.subr.mxu0 0.0
        %2024 = vmatpush1.xpose.msra.mxu0 0.0
        %2025 = vmatprep.subr.mxu0 0.0
        %2026 = vmatpush1.xpose.msra.mxu0 0.0
        %2027 = vmatprep.subr.mxu0 0.0
        %2028 = vmatpush1.xpose.msra.mxu0 0.0
        %2029 = vmatprep.subr.mxu0 0.0
        %2030 = vmatpush1.xpose.msra.mxu0 0.0
        %2031 = vmatprep.subr.mxu0 0.0
        %2032 = vmatpush1.xpose.msra.mxu0 0.0
        %2033 = vmatprep.mubr.f32.mxu0 0.0
        %2034 = vmatmul.mubr.f32.gmra.mrb[0].mxu0 %v1965
        %v2035 = vpop.f32.mrb[0].mxu0
        %v2036 = vadd.f32 0.0, %v2035
        %v2037 = vpop.f32.mrb[0].mxu0
        %2038 = vdwg.mxu0
        %v2039 = vmul.f32 %v2036, 0.35355338
        %v2040 = vadd.f32 %v2039, %v1449
        %v2041 = vsel %vm760, %v2040, -inf
        %2042 = vmax.xlane.f32.xlu0 %v2041
        %v2043 = vpop.xlane.xlu0 %2042
        %v2044 = vsub.f32 %v2040, %v2043
        %v2045 = vmul.f32 %v2044, 1.442695
        %v2046 = vpow.pop %v2045
        %v2047 = vsel %vm760, %v2046, 0.0
        %2048 = vadd.xlane.f32.xlu0 %v2047
        %v2049 = vpop.xlane.xlu0 %2048
        %2050 = vrot.lane.b32.xlu0 %v742, 40
        %v2051 = vpop.permute.xlu0 %2050
        %v2054 = vsel %vm760, %v2046, 0
        %2056 = vmatprep.subr.mxu0 0.0
        %2057 = vmatpush1.msra.mxu0 %v2051
        %2058 = vmatprep.subr.mxu0 0.0
        %2059 = vmatpush1.msra.mxu0 0.0
        %2060 = vmatprep.subr.mxu0 0.0
        %2061 = vmatpush1.msra.mxu0 0.0
        %2062 = vmatprep.subr.mxu0 0.0
        %2063 = vmatpush1.msra.mxu0 0.0
        %2064 = vmatprep.subr.mxu0 0.0
        %2065 = vmatpush1.msra.mxu0 0.0
        %2066 = vmatprep.subr.mxu0 0.0
        %2067 = vmatpush1.msra.mxu0 0.0
        %2068 = vmatprep.subr.mxu0 0.0
        %2069 = vmatpush1.msra.mxu0 0.0
        %2070 = vmatprep.subr.mxu0 0.0
        %2071 = vmatpush1.msra.mxu0 0.0
        %2072 = vmatprep.subr.mxu0 0.0
        %2073 = vmatpush1.msra.mxu0 0.0
        %2074 = vmatprep.subr.mxu0 0.0
        %2075 = vmatpush1.msra.mxu0 0.0
        %2076 = vmatprep.subr.mxu0 0.0
        %2077 = vmatpush1.msra.mxu0 0.0
        %2078 = vmatprep.subr.mxu0 0.0
        %2079 = vmatpush1.msra.mxu0 0.0
        %2080 = vmatprep.subr.mxu0 0.0
        %2081 = vmatpush1.msra.mxu0 0.0
        %2082 = vmatprep.subr.mxu0 0.0
        %2083 = vmatpush1.msra.mxu0 0.0
        %2084 = vmatprep.subr.mxu0 0.0
        %2085 = vmatpush1.msra.mxu0 0.0
        %2086 = vmatprep.subr.mxu0 0.0
        %2087 = vmatpush1.msra.mxu0 0.0
        %2088 = vmatprep.subr.mxu0 0.0
        %2089 = vmatpush1.msra.mxu0 0.0
        %2090 = vmatprep.subr.mxu0 0.0
        %2091 = vmatpush1.msra.mxu0 0.0
        %2092 = vmatprep.subr.mxu0 0.0
        %2093 = vmatpush1.msra.mxu0 0.0
        %2094 = vmatprep.subr.mxu0 0.0
        %2095 = vmatpush1.msra.mxu0 0.0
        %2096 = vmatprep.subr.mxu0 0.0
        %2097 = vmatpush1.msra.mxu0 0.0
        %2098 = vmatprep.subr.mxu0 0.0
        %2099 = vmatpush1.msra.mxu0 0.0
        %2100 = vmatprep.subr.mxu0 0.0
        %2101 = vmatpush1.msra.mxu0 0.0
        %2102 = vmatprep.subr.mxu0 0.0
        %2103 = vmatpush1.msra.mxu0 0.0
        %2104 = vmatprep.subr.mxu0 0.0
        %2105 = vmatpush1.msra.mxu0 0.0
        %2106 = vmatprep.subr.mxu0 0.0
        %2107 = vmatpush1.msra.mxu0 0.0
        %2108 = vmatprep.subr.mxu0 0.0
        %2109 = vmatpush1.msra.mxu0 0.0
        %2110 = vmatprep.subr.mxu0 0.0
        %2111 = vmatpush1.msra.mxu0 0.0
        %2112 = vmatprep.subr.mxu0 0.0
        %2113 = vmatpush1.msra.mxu0 0.0
        %2114 = vmatprep.subr.mxu0 0.0
        %2115 = vmatpush1.msra.mxu0 0.0
        %2116 = vmatprep.subr.mxu0 0.0
        %2117 = vmatpush1.msra.mxu0 0.0
        %2118 = vmatprep.subr.mxu0 0.0
        %2119 = vmatpush1.msra.mxu0 0.0
        %2120 = vmatprep.mubr.f32.mxu0 0.0
        %2121 = vmatmul.mubr.f32.gmra.mrb[0].mxu0 %v2054
        %v2122 = vpop.f32.mrb[0].mxu0
        %v2123 = vadd.f32 0.0, %v2122
        %v2124 = vpop.f32.mrb[0].mxu0
        %2125 = vdwg.mxu0
        %v2126 = vrcp.pop %v2049
        %v2127 = vmul.f32 %v2123, %v2126
        %2129 = vrot.lane.b32.xlu0 %v2127, 24
        %v2130 = vpop.permute.xlu0 %2129
        %2132 = vst.msk [vmem:[#allocation3 + $0x8] sm:$0xff] %vm1442, %v2130
        %v2133 = vld [vmem:[#allocation3] sm:$0xff]
        %v2134 = vld [vmem:[#allocation3 + $0x8] sm:$0xff]
        %v2135 = vld [vmem:[%s609] sm:$0xff]
        %v2136 = vld [vmem:[%s609 + $0x8] sm:$0xff]
        %v2137 = vld [vmem:[%s609 + $0x10] sm:$0xff]
        %v2138 = vld [vmem:[%s609 + $0x18] sm:$0xff]
        %v2139 = vld [vmem:[%s612] sm:$0x1]
        %v2141 = vlaneseq
        %v2142 = vshrl.u32 %v2141, 7
        %v2143 = vsub.s32 0, %v2142
        %v2144 = vrot.slane %v2139, %v2143
        %v2147 = vsel %vm663, %v2133, 0
        %v2150 = vsel %vm663, %v2134, 0
        %2152 = vmatprep.subr.mxu0 0.0
        %2153 = vmatpush1.msra.mxu0 %v2135
        %2154 = vmatprep.subr.mxu0 0.0
        %2155 = vmatpush1.msra.mxu0 %v2136
        %2156 = vmatprep.subr.mxu0 0.0
        %2157 = vmatpush1.msra.mxu0 %v2137
        %2158 = vmatprep.subr.mxu0 0.0
        %2159 = vmatpush1.msra.mxu0 %v2138
        %2160 = vmatprep.subr.mxu0 0.0
        %2161 = vmatpush1.msra.mxu0 0.0
        %2162 = vmatprep.subr.mxu0 0.0
        %2163 = vmatpush1.msra.mxu0 0.0
        %2164 = vmatprep.subr.mxu0 0.0
        %2165 = vmatpush1.msra.mxu0 0.0
        %2166 = vmatprep.subr.mxu0 0.0
        %2167 = vmatpush1.msra.mxu0 0.0
        %2168 = vmatprep.subr.mxu0 0.0
        %2169 = vmatpush1.msra.mxu0 0.0
        %2170 = vmatprep.subr.mxu0 0.0
        %2171 = vmatpush1.msra.mxu0 0.0
        %2172 = vmatprep.subr.mxu0 0.0
        %2173 = vmatpush1.msra.mxu0 0.0
        %2174 = vmatprep.subr.mxu0 0.0
        %2175 = vmatpush1.msra.mxu0 0.0
        %2176 = vmatprep.subr.mxu0 0.0
        %2177 = vmatpush1.msra.mxu0 0.0
        %2178 = vmatprep.subr.mxu0 0.0
        %2179 = vmatpush1.msra.mxu0 0.0
        %2180 = vmatprep.subr.mxu0 0.0
        %2181 = vmatpush1.msra.mxu0 0.0
        %2182 = vmatprep.subr.mxu0 0.0
        %2183 = vmatpush1.msra.mxu0 0.0
        %2184 = vmatprep.subr.mxu0 0.0
        %2185 = vmatpush1.msra.mxu0 0.0
        %2186 = vmatprep.subr.mxu0 0.0
        %2187 = vmatpush1.msra.mxu0 0.0
        %2188 = vmatprep.subr.mxu0 0.0
        %2189 = vmatpush1.msra.mxu0 0.0
        %2190 = vmatprep.subr.mxu0 0.0
        %2191 = vmatpush1.msra.mxu0 0.0
        %2192 = vmatprep.subr.mxu0 0.0
        %2193 = vmatpush1.msra.mxu0 0.0
        %2194 = vmatprep.subr.mxu0 0.0
        %2195 = vmatpush1.msra.mxu0 0.0
        %2196 = vmatprep.subr.mxu0 0.0
        %2197 = vmatpush1.msra.mxu0 0.0
        %2198 = vmatprep.subr.mxu0 0.0
        %2199 = vmatpush1.msra.mxu0 0.0
        %2200 = vmatprep.subr.mxu0 0.0
        %2201 = vmatpush1.msra.mxu0 0.0
        %2202 = vmatprep.subr.mxu0 0.0
        %2203 = vmatpush1.msra.mxu0 0.0
        %2204 = vmatprep.subr.mxu0 0.0
        %2205 = vmatpush1.msra.mxu0 0.0
        %2206 = vmatprep.subr.mxu0 0.0
        %2207 = vmatpush1.msra.mxu0 0.0
        %2208 = vmatprep.subr.mxu0 0.0
        %2209 = vmatpush1.msra.mxu0 0.0
        %2210 = vmatprep.subr.mxu0 0.0
        %2211 = vmatpush1.msra.mxu0 0.0
        %2212 = vmatprep.subr.mxu0 0.0
        %2213 = vmatpush1.msra.mxu0 0.0
        %2214 = vmatprep.subr.mxu0 0.0
        %2215 = vmatpush1.msra.mxu0 0.0
        %2216 = vmatprep.mubr.f32.mxu0 0.0
        %2217 = vmatmul.mubr.f32.gmra.mrb[0].mxu0 %v2147
        %v2218 = vpop.f32.mrb[0].mxu0
        %v2219 = vadd.f32 %v2144, %v2218
        %v2220 = vpop.f32.mrb[0].mxu0
        %2221 = vmatprep.mubr.f32.mxu0 0.0
        %2222 = vmatmul.mubr.f32.gmra.mrb[0].mxu0 %v2150
        %v2223 = vpop.f32.mrb[0].mxu0
        %v2224 = vadd.f32 %v2144, %v2223
        %v2225 = vpop.f32.mrb[0].mxu0
        %2226 = vdwg.mxu0
        %v2227 = vadd.f32 %v650, %v2219
        %v2228 = vadd.f32 %v651, %v2224
        %v2229 = vld [vmem:[%s615] sm:$0x1]
        %v2230 = vld [vmem:[%s618] sm:$0x1]
        %v2231 = vsel %vm663, %v2227, 0.0
        %2232 = vadd.xlane.f32.xlu0 %v2231
        %v2233 = vpop.xlane.xlu0 %2232
        %v2234 = vsel %vm663, %v2228, 0.0
        %2235 = vadd.xlane.f32.xlu0 %v2234
        %v2236 = vpop.xlane.xlu0 %2235
        %v2237 = vrcp.pop 32.0
        %v2238 = vmul.f32 %v2233, %v2237
        %v2239 = vmul.f32 %v2236, %v2237
        %v2240 = vsub.f32 %v2227, %v2238
        %v2241 = vsub.f32 %v2228, %v2239
        %v2242 = vmul.f32 %v2240, %v2240
        %v2243 = vmul.f32 %v2241, %v2241
        %v2244 = vsel %vm663, %v2242, 0.0
        %2245 = vadd.xlane.f32.xlu0 %v2244
        %v2246 = vpop.xlane.xlu0 %2245
        %v2247 = vsel %vm663, %v2243, 0.0
        %2248 = vadd.xlane.f32.xlu0 %v2247
        %v2249 = vpop.xlane.xlu0 %2248
        %v2250 = vmul.f32 %v2246, %v2237
        %v2251 = vmul.f32 %v2249, %v2237
        %v2252 = vadd.f32 %v2250, 1e-05
        %v2253 = vadd.f32 %v2251, 1e-05
        %v2254 = vrsqrt.pop %v2252
        %v2255 = vrsqrt.pop %v2253
        %v2256 = vmul.f32 %v2240, %v2254
        %v2257 = vmul.f32 %v2241, %v2255
        %v2259 = vlaneseq
        %v2260 = vshrl.u32 %v2259, 7
        %v2261 = vsub.s32 0, %v2260
        %v2262 = vrot.slane %v2229, %v2261
        %v2264 = vmul.f32 %v2256, %v2262
        %v2265 = vmul.f32 %v2257, %v2262
        %v2267 = vlaneseq
        %v2268 = vshrl.u32 %v2267, 7
        %v2269 = vsub.s32 0, %v2268
        %v2270 = vrot.slane %v2230, %v2269
        %v2272 = vadd.f32 %v2264, %v2270
        %v2273 = vadd.f32 %v2265, %v2270
        %v2274 = vld [vmem:[%s623] sm:$0xff]
        %v2275 = vld [vmem:[%s623 + $0x8] sm:$0xff]
        %v2276 = vld [vmem:[%s623 + $0x10] sm:$0xff]
        %v2277 = vld [vmem:[%s623 + $0x18] sm:$0xff]
        %v2278 = vld [vmem:[%s626] sm:$0x1]
        %v2280 = vlaneseq
        %v2281 = vshrl.u32 %v2280, 7
        %v2282 = vsub.s32 0, %v2281
        %v2283 = vrot.slane %v2278, %v2282
        %v2286 = vsel %vm663, %v2272, 0
        %v2289 = vsel %vm663, %v2273, 0
        %2291 = vmatprep.subr.mxu0 0.0
        %2292 = vmatpush1.msra.mxu0 %v2274
        %2293 = vmatprep.subr.mxu0 0.0
        %2294 = vmatpush1.msra.mxu0 %v2275
        %2295 = vmatprep.subr.mxu0 0.0
        %2296 = vmatpush1.msra.mxu0 %v2276
        %2297 = vmatprep.subr.mxu0 0.0
        %2298 = vmatpush1.msra.mxu0 %v2277
        %2299 = vmatprep.subr.mxu0 0.0
        %2300 = vmatpush1.msra.mxu0 0.0
        %2301 = vmatprep.subr.mxu0 0.0
        %2302 = vmatpush1.msra.mxu0 0.0
        %2303 = vmatprep.subr.mxu0 0.0
        %2304 = vmatpush1.msra.mxu0 0.0
        %2305 = vmatprep.subr.mxu0 0.0
        %2306 = vmatpush1.msra.mxu0 0.0
        %2307 = vmatprep.subr.mxu0 0.0
        %2308 = vmatpush1.msra.mxu0 0.0
        %2309 = vmatprep.subr.mxu0 0.0
        %2310 = vmatpush1.msra.mxu0 0.0
        %2311 = vmatprep.subr.mxu0 0.0
        %2312 = vmatpush1.msra.mxu0 0.0
        %2313 = vmatprep.subr.mxu0 0.0
        %2314 = vmatpush1.msra.mxu0 0.0
        %2315 = vmatprep.subr.mxu0 0.0
        %2316 = vmatpush1.msra.mxu0 0.0
        %2317 = vmatprep.subr.mxu0 0.0
        %2318 = vmatpush1.msra.mxu0 0.0
        %2319 = vmatprep.subr.mxu0 0.0
        %2320 = vmatpush1.msra.mxu0 0.0
        %2321 = vmatprep.subr.mxu0 0.0
        %2322 = vmatpush1.msra.mxu0 0.0
        %2323 = vmatprep.subr.mxu0 0.0
        %2324 = vmatpush1.msra.mxu0 0.0
        %2325 = vmatprep.subr.mxu0 0.0
        %2326 = vmatpush1.msra.mxu0 0.0
        %2327 = vmatprep.subr.mxu0 0.0
        %2328 = vmatpush1.msra.mxu0 0.0
        %2329 = vmatprep.subr.mxu0 0.0
        %2330 = vmatpush1.msra.mxu0 0.0
        %2331 = vmatprep.subr.mxu0 0.0
        %2332 = vmatpush1.msra.mxu0 0.0
        %2333 = vmatprep.subr.mxu0 0.0
        %2334 = vmatpush1.msra.mxu0 0.0
        %2335 = vmatprep.subr.mxu0 0.0
        %2336 = vmatpush1.msra.mxu0 0.0
        %2337 = vmatprep.subr.mxu0 0.0
        %2338 = vmatpush1.msra.mxu0 0.0
        %2339 = vmatprep.subr.mxu0 0.0
        %2340 = vmatpush1.msra.mxu0 0.0
        %2341 = vmatprep.subr.mxu0 0.0
        %2342 = vmatpush1.msra.mxu0 0.0
        %2343 = vmatprep.subr.mxu0 0.0
        %2344 = vmatpush1.msra.mxu0 0.0
        %2345 = vmatprep.subr.mxu0 0.0
        %2346 = vmatpush1.msra.mxu0 0.0
        %2347 = vmatprep.subr.mxu0 0.0
        %2348 = vmatpush1.msra.mxu0 0.0
        %2349 = vmatprep.subr.mxu0 0.0
        %2350 = vmatpush1.msra.mxu0 0.0
        %2351 = vmatprep.subr.mxu0 0.0
        %2352 = vmatpush1.msra.mxu0 0.0
        %2353 = vmatprep.subr.mxu0 0.0
        %2354 = vmatpush1.msra.mxu0 0.0
        %2355 = vmatprep.mubr.f32.mxu0 0.0
        %2356 = vmatmul.mubr.f32.gmra.mrb[0].mxu0 %v2286
        %v2357 = vpop.f32.mrb[0].mxu0
        %v2358 = vadd.f32 %v2283, %v2357
        %v2359 = vpop.f32.mrb[0].mxu0
        %2360 = vmatprep.mubr.f32.mxu0 0.0
        %2361 = vmatmul.mubr.f32.gmra.mrb[0].mxu0 %v2289
        %v2362 = vpop.f32.mrb[0].mxu0
        %v2363 = vadd.f32 %v2283, %v2362
        %v2364 = vpop.f32.mrb[0].mxu0
        %2365 = vdwg.mxu0
        %v2366 = vmax.f32 %v2358, 0.0
        %v2367 = vmax.f32 %v2363, 0.0
        %v2368 = vld [vmem:[%s631] sm:$0xff]
        %v2369 = vld [vmem:[%s631 + $0x8] sm:$0xff]
        %v2370 = vld [vmem:[%s631 + $0x10] sm:$0xff]
        %v2371 = vld [vmem:[%s631 + $0x18] sm:$0xff]
        %v2372 = vld [vmem:[%s631 + $0x20] sm:$0xff]
        %v2373 = vld [vmem:[%s631 + $0x28] sm:$0xff]
        %v2374 = vld [vmem:[%s631 + $0x30] sm:$0xff]
        %v2375 = vld [vmem:[%s631 + $0x38] sm:$0xff]
        %v2376 = vld [vmem:[%s634] sm:$0x1]
        %v2378 = vlaneseq
        %v2379 = vshrl.u32 %v2378, 7
        %v2380 = vsub.s32 0, %v2379
        %v2381 = vrot.slane %v2376, %v2380
        %vm2383 = vcmask 523264
        %v2385 = vsel %vm2383, %v2366, 0
        %v2388 = vsel %vm2383, %v2367, 0
        %2390 = vmatprep.subr.mxu0 0.0
        %2391 = vmatpush1.msra.mxu0 %v2368
        %2392 = vmatprep.subr.mxu0 0.0
        %2393 = vmatpush1.msra.mxu0 %v2369
        %2394 = vmatprep.subr.mxu0 0.0
        %2395 = vmatpush1.msra.mxu0 %v2370
        %2396 = vmatprep.subr.mxu0 0.0
        %2397 = vmatpush1.msra.mxu0 %v2371
        %2398 = vmatprep.subr.mxu0 0.0
        %2399 = vmatpush1.msra.mxu0 %v2372
        %2400 = vmatprep.subr.mxu0 0.0
        %2401 = vmatpush1.msra.mxu0 %v2373
        %2402 = vmatprep.subr.mxu0 0.0
        %2403 = vmatpush1.msra.mxu0 %v2374
        %2404 = vmatprep.subr.mxu0 0.0
        %2405 = vmatpush1.msra.mxu0 %v2375
        %2406 = vmatprep.subr.mxu0 0.0
        %2407 = vmatpush1.msra.mxu0 0.0
        %2408 = vmatprep.subr.mxu0 0.0
        %2409 = vmatpush1.msra.mxu0 0.0
        %2410 = vmatprep.subr.mxu0 0.0
        %2411 = vmatpush1.msra.mxu0 0.0
        %2412 = vmatprep.subr.mxu0 0.0
        %2413 = vmatpush1.msra.mxu0 0.0
        %2414 = vmatprep.subr.mxu0 0.0
        %2415 = vmatpush1.msra.mxu0 0.0
        %2416 = vmatprep.subr.mxu0 0.0
        %2417 = vmatpush1.msra.mxu0 0.0
        %2418 = vmatprep.subr.mxu0 0.0
        %2419 = vmatpush1.msra.mxu0 0.0
        %2420 = vmatprep.subr.mxu0 0.0
        %2421 = vmatpush1.msra.mxu0 0.0
        %2422 = vmatprep.subr.mxu0 0.0
        %2423 = vmatpush1.msra.mxu0 0.0
        %2424 = vmatprep.subr.mxu0 0.0
        %2425 = vmatpush1.msra.mxu0 0.0
        %2426 = vmatprep.subr.mxu0 0.0
        %2427 = vmatpush1.msra.mxu0 0.0
        %2428 = vmatprep.subr.mxu0 0.0
        %2429 = vmatpush1.msra.mxu0 0.0
        %2430 = vmatprep.subr.mxu0 0.0
        %2431 = vmatpush1.msra.mxu0 0.0
        %2432 = vmatprep.subr.mxu0 0.0
        %2433 = vmatpush1.msra.mxu0 0.0
        %2434 = vmatprep.subr.mxu0 0.0
        %2435 = vmatpush1.msra.mxu0 0.0
        %2436 = vmatprep.subr.mxu0 0.0
        %2437 = vmatpush1.msra.mxu0 0.0
        %2438 = vmatprep.subr.mxu0 0.0
        %2439 = vmatpush1.msra.mxu0 0.0
        %2440 = vmatprep.subr.mxu0 0.0
        %2441 = vmatpush1.msra.mxu0 0.0
        %2442 = vmatprep.subr.mxu0 0.0
        %2443 = vmatpush1.msra.mxu0 0.0
        %2444 = vmatprep.subr.mxu0 0.0
        %2445 = vmatpush1.msra.mxu0 0.0
        %2446 = vmatprep.subr.mxu0 0.0
        %2447 = vmatpush1.msra.mxu0 0.0
        %2448 = vmatprep.subr.mxu0 0.0
        %2449 = vmatpush1.msra.mxu0 0.0
        %2450 = vmatprep.subr.mxu0 0.0
        %2451 = vmatpush1.msra.mxu0 0.0
        %2452 = vmatprep.subr.mxu0 0.0
        %2453 = vmatpush1.msra.mxu0 0.0
        %2454 = vmatprep.mubr.f32.mxu0 0.0
        %2455 = vmatmul.mubr.f32.gmra.mrb[0].mxu0 %v2385
        %v2456 = vpop.f32.mrb[0].mxu0
        %v2457 = vadd.f32 %v2381, %v2456
        %v2458 = vpop.f32.mrb[0].mxu0
        %2459 = vmatprep.mubr.f32.mxu0 0.0
        %2460 = vmatmul.mubr.f32.gmra.mrb[0].mxu0 %v2388
        %v2461 = vpop.f32.mrb[0].mxu0
        %v2462 = vadd.f32 %v2381, %v2461
        %v2463 = vpop.f32.mrb[0].mxu0
        %2464 = vdwg.mxu0
        %v2465 = vadd.f32 %v2272, %v2457
        %v2466 = vadd.f32 %v2273, %v2462
        %v2467 = vld [vmem:[%s637] sm:$0x1]
        %v2468 = vld [vmem:[%s640] sm:$0x1]
        %v2469 = vsel %vm663, %v2465, 0.0
        %2470 = vadd.xlane.f32.xlu0 %v2469
        %v2471 = vpop.xlane.xlu0 %2470
        %v2472 = vsel %vm663, %v2466, 0.0
        %2473 = vadd.xlane.f32.xlu0 %v2472
        %v2474 = vpop.xlane.xlu0 %2473
        %v2475 = vmul.f32 %v2471, %v2237
        %v2476 = vmul.f32 %v2474, %v2237
        %v2477 = vsub.f32 %v2465, %v2475
        %v2478 = vsub.f32 %v2466, %v2476
        %v2479 = vmul.f32 %v2477, %v2477
        %v2480 = vmul.f32 %v2478, %v2478
        %v2481 = vsel %vm663, %v2479, 0.0
        %2482 = vadd.xlane.f32.xlu0 %v2481
        %v2483 = vpop.xlane.xlu0 %2482
        %v2484 = vsel %vm663, %v2480, 0.0
        %2485 = vadd.xlane.f32.xlu0 %v2484
        %v2486 = vpop.xlane.xlu0 %2485
        %v2487 = vmul.f32 %v2483, %v2237
        %v2488 = vmul.f32 %v2486, %v2237
        %v2489 = vadd.f32 %v2487, 1e-05
        %v2490 = vadd.f32 %v2488, 1e-05
        %v2491 = vrsqrt.pop %v2489
        %v2492 = vrsqrt.pop %v2490
        %v2493 = vmul.f32 %v2477, %v2491
        %v2494 = vmul.f32 %v2478, %v2492
        %v2496 = vlaneseq
        %v2497 = vshrl.u32 %v2496, 7
        %v2498 = vsub.s32 0, %v2497
        %v2499 = vrot.slane %v2467, %v2498
        %v2501 = vmul.f32 %v2493, %v2499
        %v2502 = vmul.f32 %v2494, %v2499
        %v2504 = vlaneseq
        %v2505 = vshrl.u32 %v2504, 7
        %v2506 = vsub.s32 0, %v2505
        %v2507 = vrot.slane %v2468, %v2506
        %v2509 = vadd.f32 %v2501, %v2507
        %v2510 = vadd.f32 %v2502, %v2507
        %2511 = vst.msk [vmem:[#allocation2] sm:$0xff] %vm663, %v2509
        %2512 = vst.msk [vmem:[#allocation2 + $0x8] sm:$0xff] %vm663, %v2510
        %p2513 = scmp.eq.s32.totalorder %s27, 1
        // Predicated region
        $region85: #{tpu_custom_call.1} parent=75 // pred_check
          %p2514 = pneg %p2513
        $region86: #{tpu_custom_call.1} parent=75 // pred_check_branch
          %2516 = sbr.rel (%p2514) target = $region88
        $region87: #{tpu_custom_call.1} parent=75 // pred_region
          %v2517 = vsel %vm663, %v2509, 0.0
          %v2518 = vrot.slane %v2517, 4
          %v2519 = vadd.f32 %v2517, %v2518
          %v2520 = vrot.slane %v2519, 2
          %v2521 = vadd.f32 %v2519, %v2520
          %v2522 = vrot.slane %v2521, 1
          %v2523 = vadd.f32 %v2521, %v2522
          %v2524 = vrcp.pop 8.0
          %v2525 = vmul.f32 %v2523, %v2524
          %vm2526 = vcmask 253952
          %2527 = vst.msk [vmem:[#allocation7] sm:$0x1] %vm2526, %v2525
          %v2528 = vsel %vm663, %v2510, 0.0
          %v2529 = vrot.slane %v2528, 4
          %v2530 = vadd.f32 %v2528, %v2529
          %v2531 = vrot.slane %v2530, 2
          %v2532 = vadd.f32 %v2530, %v2531
          %v2533 = vrot.slane %v2532, 1
          %v2534 = vadd.f32 %v2532, %v2533
          %v2535 = vmul.f32 %v2534, %v2524
          %2536 = vst.msk [vmem:[#allocation7 + $0x1] sm:$0x1] %vm2526, %v2535
        $region88: #{tpu_custom_call.1} parent=75 // pred_fallthru
          _
        // Predicated region
        $region89: #{tpu_custom_call.1} parent=75 // pred_check
          %p2537 = pneg %p394
        $region90: #{tpu_custom_call.1} parent=75 // pred_check_branch
          %2539 = sbr.rel (%p2537) target = $region92
        $region91: #{tpu_custom_call.1} parent=75 // pred_region
          %s2541 = ssub.s32 32, 32
          %2542 = vsyncadd [#allocation6], %s2541
          %s2544 = sshll.u32 [#allocation7], 4
          %s2545 = int_to_ptr.vmem [resolvable:$true] %s2544
          %2547 = dma.vmem_to_hbm [thread:$0]  %s2545, 32, %s14, [#allocation6]
        $region92: #{tpu_custom_call.1} parent=75 // pred_fallthru
          _
        // Predicated region
        $region93: #{tpu_custom_call.1} parent=75 // pred_check
          %p2548 = pneg %p394
        $region94: #{tpu_custom_call.1} parent=75 // pred_check_branch
          %2550 = sbr.rel (%p2548) target = $region96
        $region95: #{tpu_custom_call.1} parent=75 // pred_region
          %2551 = dma.done [#allocation6], 32
        $region96: #{tpu_custom_call.1} parent=75 // pred_fallthru
          _
      $region76: #{tpu_custom_call.1} parent=5 // pred_fallthru
        _
      %p2552 = scmp.le.s32.totalorder 2, %s22
      // Predicated region
      $region97: #{tpu_custom_call.1} parent=5 // pred_check
        %p2553 = pneg %p2552
      $region98: #{tpu_custom_call.1} parent=5 // pred_check_branch
        %2555 = sbr.rel (%p2553) target = $region100
      $region99: #{tpu_custom_call.1} parent=5 // pred_region
        %s2556 = ssub.s32 %s22, 2
      $region100: #{tpu_custom_call.1} parent=5 // pred_fallthru
        _
    $region6: #{tpu_custom_call.1} parent=1 // loop_footer
      %s26 = sadd.s32 1, %s22
    $region7: #{tpu_custom_call.1} parent=1 // loop_footer_branch
      %21 = sbr.rel target = $region3
    $region8: #{tpu_custom_call.1} parent=1 // loop_exit
      _
    %2557 = vsyncpa [#allocation5], 1
    %s2558 = scalar_lea.sflag [#allocation5], 1
    %2559 = vsyncpa %s2558, 1
    %2560 = vsyncpa [#allocation6], 1
    %s2561 = scalar_lea.sflag [#allocation6], 1
    %2562 = vsyncpa %s2561, 1

</llo_original>
